<compile_context>
chip_gen: v7x
topology: tpu7x:2x2x1
jax: 0.10.0
libtpu: 0.0.40
codegen_flags: <defaults>
</compile_context>

<pallas_src>
import jax
import jax.numpy as jnp
from jax.experimental import pallas as pl
from jax.experimental.pallas import tpu as pltpu


def netd_kernel(x_ref, w1_ref, b1_ref,
                wih_e_ref, bih_e_ref, whh_e_ref, bhn_e_ref,
                wih_d_ref, bih_d_ref, whh_d_ref, bhn_d_ref,
                w2_ref, b2_ref,
                enc_ref, dec_ref,
                xg_e_ref, xg_d_ref, dech_ref):
    f32 = jnp.float32
    bf16 = jnp.bfloat16
    T, B, D = x_ref.shape
    H = enc_ref.shape[-1]          # RNN_hid_dim
    E = dech_ref.shape[-1]         # emb_dim
    unroll = min(T, 8)             # full unroll for small T, partial for large T

    # ---- fc1 + ReLU (all timesteps at once, bf16 operands / f32 accumulate) ----
    x = x_ref[...].reshape(T * B, D)
    emb = jnp.maximum(
        jnp.dot(x.astype(bf16), w1_ref[...], preferred_element_type=f32) + b1_ref[...],
        0.0)

    # ---- encoder: fused input-gate projection, one (T*B,E)@(E,3H) matmul ----
    xg_e_ref[...] = (jnp.dot(emb.astype(bf16), wih_e_ref[...],
                             preferred_element_type=f32)
                     + bih_e_ref[...]).astype(bf16).reshape(T, B, 3 * H)

    whh_e = whh_e_ref[...]         # (H, 3H) bf16 -> single MXU push per recurrent step
    bhn_e = bhn_e_ref[...]         # (1, H)  f32

    def enc_step(t, h):
        xg = xg_e_ref[t].astype(f32)                                # (B, 3H)
        hg = jnp.dot(h.astype(bf16), whh_e, preferred_element_type=f32)
        r = jax.nn.sigmoid(xg[:, 0:H] + hg[:, 0:H])
        z = jax.nn.sigmoid(xg[:, H:2 * H] + hg[:, H:2 * H])
        n = jnp.tanh(xg[:, 2 * H:3 * H] + r * (hg[:, 2 * H:3 * H] + bhn_e))
        h_new = (1.0 - z) * n + z * h                               # f32 gate math
        enc_ref[t] = h_new
        return h_new

    jax.lax.fori_loop(0, T, enc_step, jnp.zeros((B, H), f32), unroll=unroll)

    # ---- decoder: fused input-gate projection from encoder outputs ----
    enc = enc_ref[...].reshape(T * B, H)
    xg_d_ref[...] = (jnp.dot(enc.astype(bf16), wih_d_ref[...],
                             preferred_element_type=f32)
                     + bih_d_ref[...]).astype(bf16).reshape(T, B, 3 * E)

    whh_d = whh_d_ref[...]         # (E, 3E) bf16
    bhn_d = bhn_d_ref[...]         # (1, E)  f32

    def dec_step(t, h):
        xg = xg_d_ref[t].astype(f32)
        hg = jnp.dot(h.astype(bf16), whh_d, preferred_element_type=f32)
        r = jax.nn.sigmoid(xg[:, 0:E] + hg[:, 0:E])
        z = jax.nn.sigmoid(xg[:, E:2 * E] + hg[:, E:2 * E])
        n = jnp.tanh(xg[:, 2 * E:3 * E] + r * (hg[:, 2 * E:3 * E] + bhn_d))
        h_new = (1.0 - z) * n + z * h
        dech_ref[t] = h_new.astype(bf16)        # fc2 hoisted out of the serial loop
        return h_new

    jax.lax.fori_loop(0, T, dec_step, jnp.zeros((B, E), f32), unroll=unroll)

    # ---- fc2 + ReLU: one bulk matmul + one bulk store (dech already bf16) ----
    dh = dech_ref[...].reshape(T * B, E)
    dec_ref[...] = jnp.maximum(
        jnp.dot(dh, w2_ref[...], preferred_element_type=f32) + b2_ref[...],
        0.0).reshape(dec_ref.shape)


def _auto_batch_shards(B):
    # Only shard across the 2 v7x TensorCores when each shard gets real (non-padding)
    # rows; with B <= 8 a second shard would compute only padding.
    if B <= 8:
        return 1
    try:
        kind = jax.devices()[0].device_kind.lower()
    except Exception:
        return 1
    return 2 if ("v7" in kind or "tpu7" in kind) else 1


def _vmem_capacity_bytes():
    try:
        return int(pltpu.get_tpu_info().vmem_capacity_bytes)
    except Exception:
        return 64 << 20     # assume the smallest generation (v7x) if the query fails


def netd_forward(X, params, batch_shards=None):
    """X: (B, T, *spatial) float32 -> (X_enc (B,T,H), X_dec (B,T,data_dim))."""
    B, T = X.shape[0], X.shape[1]
    x = X.reshape(B, T, -1).astype(jnp.float32)          # torch .flatten(2)
    D = x.shape[-1]
    H = params['whh_e'].shape[-1]
    E = params['whh_d'].shape[-1]

    if batch_shards is None:
        batch_shards = _auto_batch_shards(B)

    # Pad batch so each per-core block is a multiple of 8 sublanes.
    B_blk = 8 * (-(-B // (8 * batch_shards)))
    B_pad = B_blk * batch_shards

    # TODO(synk): the (B,T)<->(T,B) transposes below are extra HBM round trips in XLA;
    #             a batch-major in-kernel layout / pltpu.einshape would remove them.
    x_tm = jnp.transpose(x, (1, 0, 2))                    # (T, B, D) time-major
    if B_pad != B:
        x_tm = jnp.pad(x_tm, ((0, 0), (0, B_pad - B), (0, 0)))

    # ---- pack / fuse parameters in the wrapper (free layout plumbing) ----
    bf16 = jnp.bfloat16

    def cat_w(w):   # (3, in, out) -> (in, 3*out), gate order r|z|n
        return jnp.transpose(w, (1, 0, 2)).reshape(w.shape[1], 3 * w.shape[2])

    def cat_b(b):   # (3, 1, out) -> (1, 3*out)
        return jnp.transpose(b, (1, 0, 2)).reshape(1, 3 * b.shape[2])

    w1 = params['w1'].astype(bf16)
    b1 = params['b1']
    wih_e = cat_w(params['wih_e']).astype(bf16)                              # (E, 3H)
    bih_e = cat_b(params['bih_e']) + jnp.concatenate(                        # fold bhr, bhz
        [params['bhh_e'][0], params['bhh_e'][1],
         jnp.zeros_like(params['bhh_e'][2])], axis=-1)
    whh_e = cat_w(params['whh_e']).astype(bf16)                              # (H, 3H) bf16
    bhn_e = params['bhh_e'][2]                                               # (1, H) f32
    wih_d = cat_w(params['wih_d']).astype(bf16)                              # (H, 3E)
    bih_d = cat_b(params['bih_d']) + jnp.concatenate(
        [params['bhh_d'][0], params['bhh_d'][1],
         jnp.zeros_like(params['bhh_d'][2])], axis=-1)
    whh_d = cat_w(params['whh_d']).astype(bf16)                              # (E, 3E) bf16
    bhn_d = params['bhh_d'][2]                                               # (1, E) f32
    w2 = params['w2'].astype(bf16)
    b2 = params['b2']

    weights = (w1, b1, wih_e, bih_e, whh_e, bhn_e, wih_d, bih_d, whh_d, bhn_d, w2, b2)

    def full2d(a):
        # Whole-array weight block, constant across the grid.
        return pl.BlockSpec(a.shape, lambda i: (0, 0))

    # ---- VMEM budget: generation-aware, with headroom for Mosaic internal scratch ----
    f32b, bf16b = 4, 2
    blk = T * B_blk
    est = (
        2 * blk * D * f32b                                    # x block (double-buffered)
        + 2 * blk * (H + D) * f32b                            # enc/dec out blocks (dbl-buf)
        + 2 * sum(int(w.size) * w.dtype.itemsize for w in weights)  # weights (dbl-buf)
        + blk * (3 * H + 3 * E + E) * bf16b                   # bf16 scratches
        + blk * (D + E) * (f32b + bf16b)                      # x / emb values + bf16 copies
        + blk * (3 * H + 3 * E) * f32b                        # f32 proj results pre-cast
        + blk * H * (f32b + bf16b)                            # enc read + bf16 copy
        + blk * D * f32b                                      # fc2 f32 result
    )
    cap = _vmem_capacity_bytes()
    vmem_limit = int(min(max(est + (8 << 20), 32 << 20), int(cap * 0.8)))

    if batch_shards > 1:
        # v7x: split the batch across both TensorCores (plain "parallel" does not
        # reliably megacore-shard the grid).
        dim_sem = (pltpu.CORE_PARALLEL,)
    else:
        dim_sem = ("arbitrary",)

    enc_tm, dec_tm = pl.pallas_call(
        netd_kernel,
        out_shape=(jax.ShapeDtypeStruct((T, B_pad, H), jnp.float32),
                   jax.ShapeDtypeStruct((T, B_pad, D), jnp.float32)),
        grid=(batch_shards,),
        in_specs=[pl.BlockSpec((T, B_blk, D), lambda i: (0, i, 0))]
                 + [full2d(w) for w in weights],
        out_specs=(pl.BlockSpec((T, B_blk, H), lambda i: (0, i, 0)),
                   pl.BlockSpec((T, B_blk, D), lambda i: (0, i, 0))),
        scratch_shapes=[pltpu.VMEM((T, B_blk, 3 * H), jnp.bfloat16),
                        pltpu.VMEM((T, B_blk, 3 * E), jnp.bfloat16),
                        pltpu.VMEM((T, B_blk, E), jnp.bfloat16)],
        compiler_params=pltpu.CompilerParams(
            dimension_semantics=dim_sem,
            vmem_limit_bytes=vmem_limit),
    )(x_tm, *weights)

    enc = jnp.transpose(enc_tm, (1, 0, 2))[:B]
    dec = jnp.transpose(dec_tm, (1, 0, 2))[:B]
    return enc, dec


# ---------------- plain-JAX reference (for correctness check) ----------------
def _gru_ref(x, wih, whh, bih, bhh):
    B = x.shape[0]
    H = whh.shape[-1]

    def step(h, xt):
        r = jax.nn.sigmoid(xt @ wih[0] + bih[0] + h @ whh[0] + bhh[0])
        z = jax.nn.sigmoid(xt @ wih[1] + bih[1] + h @ whh[1] + bhh[1])
        n = jnp.tanh(xt @ wih[2] + bih[2] + r * (h @ whh[2] + bhh[2]))
        h_new = (1.0 - z) * n + z * h
        return h_new, h_new

    _, ys = jax.lax.scan(step, jnp.zeros((B, H), jnp.float32), jnp.swapaxes(x, 0, 1))
    return jnp.swapaxes(ys, 0, 1)


def netd_reference(X, p):
    B, T = X.shape[0], X.shape[1]
    x = X.reshape(B, T, -1).astype(jnp.float32)
    emb = jnp.maximum(x @ p['w1'] + p['b1'], 0.0)
    enc = _gru_ref(emb, p['wih_e'], p['whh_e'], p['bih_e'], p['bhh_e'])
    dec_h = _gru_ref(enc, p['wih_d'], p['whh_d'], p['bih_d'], p['bhh_d'])
    dec = jnp.maximum(dec_h @ p['w2'] + p['b2'], 0.0)
    return enc, dec


def init_params(key, data_dim, emb_dim, hid_dim):
    ks = jax.random.split(key, 12)
    s = 0.1
    n = jax.random.normal
    return dict(
        w1=n(ks[0], (data_dim, emb_dim), jnp.float32) * s,
        b1=n(ks[1], (1, emb_dim), jnp.float32) * s,
        wih_e=n(ks[2], (3, emb_dim, hid_dim), jnp.float32) * s,
        whh_e=n(ks[3], (3, hid_dim, hid_dim), jnp.float32) * s,
        bih_e=n(ks[4], (3, 1, hid_dim), jnp.float32) * s,
        bhh_e=n(ks[5], (3, 1, hid_dim), jnp.float32) * s,
        wih_d=n(ks[6], (3, hid_dim, emb_dim), jnp.float32) * s,
        whh_d=n(ks[7], (3, emb_dim, emb_dim), jnp.float32) * s,
        bih_d=n(ks[8], (3, 1, emb_dim), jnp.float32) * s,
        bhh_d=n(ks[9], (3, 1, emb_dim), jnp.float32) * s,
        w2=n(ks[10], (emb_dim, data_dim), jnp.float32) * s,
        b2=n(ks[11], (1, data_dim), jnp.float32) * s,
    )


if __name__ == "__main__":
    # args = {'data_dim': 16, 'emb_dim': 32, 'RNN_hid_dim': 32, 'num_layers': 1}
    B, T = 2, 8
    data_dim, emb_dim, hid_dim = 16, 32, 32

    key = jax.random.PRNGKey(0)
    kx, kp = jax.random.split(key)
    X = jax.random.normal(kx, (B, T, 4, 4), jnp.float32)   # flatten(2) -> (B, T, 16)
    params = init_params(kp, data_dim, emb_dim, hid_dim)

    enc, dec = netd_forward(X, params)
    jax.block_until_ready((enc, dec))

    enc_ref, dec_ref = netd_reference(X, params)
    assert enc.shape == (B, T, hid_dim) and dec.shape == (B, T, data_dim)
    # bf16 operands now also cover the recurrent matmul and the gate/dech scratch
    # storage (f32 accumulation everywhere) -> slightly looser tolerance.
    assert jnp.allclose(enc, enc_ref, atol=3e-2, rtol=3e-2)
    assert jnp.allclose(dec, dec_ref, atol=3e-2, rtol=3e-2)

    print("KERNEL_OK")
</pallas_src>

<mosaic_0001>
module attributes {stable_mosaic.version = 11 : i64} {
  func.func @netd_kernel(%arg0: i32, %arg1: memref<8x8x16xf32, #tpu.memory_space<vmem>>, %arg2: memref<16x32xbf16, #tpu.memory_space<vmem>>, %arg3: memref<1x32xf32, #tpu.memory_space<vmem>>, %arg4: memref<32x96xbf16, #tpu.memory_space<vmem>>, %arg5: memref<1x96xf32, #tpu.memory_space<vmem>>, %arg6: memref<32x96xbf16, #tpu.memory_space<vmem>>, %arg7: memref<1x32xf32, #tpu.memory_space<vmem>>, %arg8: memref<32x96xbf16, #tpu.memory_space<vmem>>, %arg9: memref<1x96xf32, #tpu.memory_space<vmem>>, %arg10: memref<32x96xbf16, #tpu.memory_space<vmem>>, %arg11: memref<1x32xf32, #tpu.memory_space<vmem>>, %arg12: memref<32x16xbf16, #tpu.memory_space<vmem>>, %arg13: memref<1x16xf32, #tpu.memory_space<vmem>>, %arg14: memref<8x8x32xf32, #tpu.memory_space<vmem>>, %arg15: memref<8x8x16xf32, #tpu.memory_space<vmem>>, %arg16: memref<8x8x96xbf16, #tpu.memory_space<vmem>>, %arg17: memref<8x8x96xbf16, #tpu.memory_space<vmem>>, %arg18: memref<8x8x32xbf16, #tpu.memory_space<vmem>>) attributes {dimension_semantics = [#tpu.dimension_semantics<arbitrary>], iteration_bounds = array<i64: 1>, scalar_prefetch = 0 : i64, scratch_operands = 3 : i64, tpu.core_type = #tpu.core_type<tc>, window_params = [{transform_indices = @transform_0, window_bounds = array<i64: 8, 8, 16>}, {pipeline_mode = #tpu.pipeline_mode<synchronous>, transform_indices = @transform_1, window_bounds = array<i64: 16, 32>}, {pipeline_mode = #tpu.pipeline_mode<synchronous>, transform_indices = @transform_2, window_bounds = array<i64: 1, 32>}, {pipeline_mode = #tpu.pipeline_mode<synchronous>, transform_indices = @transform_3, window_bounds = array<i64: 32, 96>}, {pipeline_mode = #tpu.pipeline_mode<synchronous>, transform_indices = @transform_4, window_bounds = array<i64: 1, 96>}, {pipeline_mode = #tpu.pipeline_mode<synchronous>, transform_indices = @transform_5, window_bounds = array<i64: 32, 96>}, {pipeline_mode = #tpu.pipeline_mode<synchronous>, transform_indices = @transform_6, window_bounds = array<i64: 1, 32>}, {pipeline_mode = #tpu.pipeline_mode<synchronous>, transform_indices = @transform_7, window_bounds = array<i64: 32, 96>}, {pipeline_mode = #tpu.pipeline_mode<synchronous>, transform_indices = @transform_8, window_bounds = array<i64: 1, 96>}, {pipeline_mode = #tpu.pipeline_mode<synchronous>, transform_indices = @transform_9, window_bounds = array<i64: 32, 96>}, {pipeline_mode = #tpu.pipeline_mode<synchronous>, transform_indices = @transform_10, window_bounds = array<i64: 1, 32>}, {pipeline_mode = #tpu.pipeline_mode<synchronous>, transform_indices = @transform_11, window_bounds = array<i64: 32, 16>}, {pipeline_mode = #tpu.pipeline_mode<synchronous>, transform_indices = @transform_12, window_bounds = array<i64: 1, 16>}, {transform_indices = @transform_13, window_bounds = array<i64: 8, 8, 32>}, {transform_indices = @transform_14, window_bounds = array<i64: 8, 8, 16>}]} {
    %c0 = arith.constant 0 : index
    %c0_0 = arith.constant 0 : index
    %c0_1 = arith.constant 0 : index
    %0 = vector.load %arg1[%c0, %c0_0, %c0_1] : memref<8x8x16xf32, #tpu.memory_space<vmem>>, vector<8x8x16xf32>
    %1 = vector.shape_cast %0 : vector<8x8x16xf32> to vector<64x16xf32>
    %2 = arith.truncf %1 : vector<64x16xf32> to vector<64x16xbf16>
    %c0_2 = arith.constant 0 : index
    %c0_3 = arith.constant 0 : index
    %3 = vector.load %arg2[%c0_2, %c0_3] : memref<16x32xbf16, #tpu.memory_space<vmem>>, vector<16x32xbf16>
    %cst = arith.constant dense<0.000000e+00> : vector<64x32xf32>
    %4 = tpu.matmul %2, %3, %cst {dimension_numbers = #tpu.dot_dimension_numbers<[1], [0], [0], [1], [0, 0, 1, 1], [], []>} : vector<64x16xbf16>, vector<16x32xbf16>, vector<64x32xf32> -> vector<64x32xf32>
    %c0_4 = arith.constant 0 : index
    %c0_5 = arith.constant 0 : index
    %5 = vector.load %arg3[%c0_4, %c0_5] : memref<1x32xf32, #tpu.memory_space<vmem>>, vector<1x32xf32>
    %6 = vector.broadcast %5 : vector<1x32xf32> to vector<64x32xf32>
    %7 = arith.addf %4, %6 : vector<64x32xf32>
    %cst_6 = arith.constant 0.000000e+00 : f32
    %8 = vector.broadcast %cst_6 : f32 to vector<64x32xf32>
    %9 = arith.maximumf %7, %8 : vector<64x32xf32>
    %10 = arith.truncf %9 : vector<64x32xf32> to vector<64x32xbf16>
    %c0_7 = arith.constant 0 : index
    %c0_8 = arith.constant 0 : index
    %11 = vector.load %arg4[%c0_7, %c0_8] : memref<32x96xbf16, #tpu.memory_space<vmem>>, vector<32x96xbf16>
    %cst_9 = arith.constant dense<0.000000e+00> : vector<64x96xf32>
    %12 = tpu.matmul %10, %11, %cst_9 {dimension_numbers = #tpu.dot_dimension_numbers<[1], [0], [0], [1], [0, 0, 1, 1], [], []>} : vector<64x32xbf16>, vector<32x96xbf16>, vector<64x96xf32> -> vector<64x96xf32>
    %c0_10 = arith.constant 0 : index
    %c0_11 = arith.constant 0 : index
    %13 = vector.load %arg5[%c0_10, %c0_11] : memref<1x96xf32, #tpu.memory_space<vmem>>, vector<1x96xf32>
    %14 = vector.broadcast %13 : vector<1x96xf32> to vector<64x96xf32>
    %15 = arith.addf %12, %14 : vector<64x96xf32>
    %16 = arith.truncf %15 : vector<64x96xf32> to vector<64x96xbf16>
    %17 = vector.shape_cast %16 : vector<64x96xbf16> to vector<8x8x96xbf16>
    %c0_12 = arith.constant 0 : index
    %c0_13 = arith.constant 0 : index
    %c0_14 = arith.constant 0 : index
    %18 = vector.load %arg16[%c0_12, %c0_13, %c0_14] : memref<8x8x96xbf16, #tpu.memory_space<vmem>>, vector<8x8x96xbf16>
    tpu.vector_store %arg16[%c0_12, %c0_13, %c0_14], %17 {strides = array<i32>} : memref<8x8x96xbf16, #tpu.memory_space<vmem>>, vector<8x8x96xbf16>,
    %c0_15 = arith.constant 0 : index
    %c0_16 = arith.constant 0 : index
    %19 = vector.load %arg6[%c0_15, %c0_16] : memref<32x96xbf16, #tpu.memory_space<vmem>>, vector<32x96xbf16>
    %c0_17 = arith.constant 0 : index
    %c0_18 = arith.constant 0 : index
    %20 = vector.load %arg7[%c0_17, %c0_18] : memref<1x32xf32, #tpu.memory_space<vmem>>, vector<1x32xf32>
    %cst_19 = arith.constant 0.000000e+00 : f32
    %21 = vector.broadcast %cst_19 : f32 to vector<8x32xf32>
    %c0_i32 = arith.constant 0 : i32
    %22 = arith.index_cast %c0_i32 : i32 to index
    %c0_20 = arith.constant 0 : index
    %c0_21 = arith.constant 0 : index
    %23 = vector.load %arg16[%22, %c0_20, %c0_21] : memref<8x8x96xbf16, #tpu.memory_space<vmem>>, vector<1x8x96xbf16>
    %24 = vector.shape_cast %23 : vector<1x8x96xbf16> to vector<8x96xbf16>
    %25 = arith.extf %24 : vector<8x96xbf16> to vector<8x96xf32>
    %26 = arith.truncf %21 : vector<8x32xf32> to vector<8x32xbf16>
    %cst_22 = arith.constant dense<0.000000e+00> : vector<8x96xf32>
    %27 = tpu.matmul %26, %19, %cst_22 {dimension_numbers = #tpu.dot_dimension_numbers<[1], [0], [0], [1], [0, 0, 1, 1], [], []>} : vector<8x32xbf16>, vector<32x96xbf16>, vector<8x96xf32> -> vector<8x96xf32>
    %28 = vector.extract_strided_slice %25 {offsets = [0, 0], sizes = [8, 32], strides = [1, 1]} : vector<8x96xf32> to vector<8x32xf32>
    %29 = vector.extract_strided_slice %27 {offsets = [0, 0], sizes = [8, 32], strides = [1, 1]} : vector<8x96xf32> to vector<8x32xf32>
    %30 = arith.addf %28, %29 : vector<8x32xf32>
    %31 = arith.negf %30 : vector<8x32xf32>
    %32 = math.exp %31 : vector<8x32xf32>
    %cst_23 = arith.constant 1.000000e+00 : f32
    %33 = vector.broadcast %cst_23 : f32 to vector<8x32xf32>
    %34 = arith.addf %33, %32 : vector<8x32xf32>
    %35 = arith.divf %33, %34 : vector<8x32xf32>
    %36 = vector.extract_strided_slice %25 {offsets = [0, 32], sizes = [8, 32], strides = [1, 1]} : vector<8x96xf32> to vector<8x32xf32>
    %37 = vector.extract_strided_slice %27 {offsets = [0, 32], sizes = [8, 32], strides = [1, 1]} : vector<8x96xf32> to vector<8x32xf32>
    %38 = arith.addf %36, %37 : vector<8x32xf32>
    %39 = arith.negf %38 : vector<8x32xf32>
    %40 = math.exp %39 : vector<8x32xf32>
    %cst_24 = arith.constant 1.000000e+00 : f32
    %41 = vector.broadcast %cst_24 : f32 to vector<8x32xf32>
    %42 = arith.addf %41, %40 : vector<8x32xf32>
    %43 = arith.divf %41, %42 : vector<8x32xf32>
    %44 = vector.extract_strided_slice %25 {offsets = [0, 64], sizes = [8, 32], strides = [1, 1]} : vector<8x96xf32> to vector<8x32xf32>
    %45 = vector.extract_strided_slice %27 {offsets = [0, 64], sizes = [8, 32], strides = [1, 1]} : vector<8x96xf32> to vector<8x32xf32>
    %46 = vector.broadcast %20 : vector<1x32xf32> to vector<8x32xf32>
    %47 = arith.addf %45, %46 : vector<8x32xf32>
    %48 = arith.mulf %35, %47 : vector<8x32xf32>
    %49 = arith.addf %44, %48 : vector<8x32xf32>
    %50 = math.tanh %49 : vector<8x32xf32>
    %cst_25 = arith.constant 1.000000e+00 : f32
    %51 = vector.broadcast %cst_25 : f32 to vector<8x32xf32>
    %52 = arith.subf %51, %43 : vector<8x32xf32>
    %53 = arith.mulf %52, %50 : vector<8x32xf32>
    %54 = arith.mulf %43, %21 : vector<8x32xf32>
    %55 = arith.addf %53, %54 : vector<8x32xf32>
    %56 = arith.index_cast %c0_i32 : i32 to index
    %c0_26 = arith.constant 0 : index
    %c0_27 = arith.constant 0 : index
    %57 = vector.load %arg14[%56, %c0_26, %c0_27] : memref<8x8x32xf32, #tpu.memory_space<vmem>>, vector<1x8x32xf32>
    %58 = vector.shape_cast %57 : vector<1x8x32xf32> to vector<8x32xf32>
    %59 = vector.shape_cast %55 : vector<8x32xf32> to vector<1x8x32xf32>
    tpu.vector_store %arg14[%56, %c0_26, %c0_27], %59 {strides = array<i32>} : memref<8x8x32xf32, #tpu.memory_space<vmem>>, vector<1x8x32xf32>,
    %c1_i32 = arith.constant 1 : i32
    %60 = arith.index_cast %c1_i32 : i32 to index
    %c0_28 = arith.constant 0 : index
    %c0_29 = arith.constant 0 : index
    %61 = vector.load %arg16[%60, %c0_28, %c0_29] : memref<8x8x96xbf16, #tpu.memory_space<vmem>>, vector<1x8x96xbf16>
    %62 = vector.shape_cast %61 : vector<1x8x96xbf16> to vector<8x96xbf16>
    %63 = arith.extf %62 : vector<8x96xbf16> to vector<8x96xf32>
    %64 = arith.truncf %55 : vector<8x32xf32> to vector<8x32xbf16>
    %cst_30 = arith.constant dense<0.000000e+00> : vector<8x96xf32>
    %65 = tpu.matmul %64, %19, %cst_30 {dimension_numbers = #tpu.dot_dimension_numbers<[1], [0], [0], [1], [0, 0, 1, 1], [], []>} : vector<8x32xbf16>, vector<32x96xbf16>, vector<8x96xf32> -> vector<8x96xf32>
    %66 = vector.extract_strided_slice %63 {offsets = [0, 0], sizes = [8, 32], strides = [1, 1]} : vector<8x96xf32> to vector<8x32xf32>
    %67 = vector.extract_strided_slice %65 {offsets = [0, 0], sizes = [8, 32], strides = [1, 1]} : vector<8x96xf32> to vector<8x32xf32>
    %68 = arith.addf %66, %67 : vector<8x32xf32>
    %69 = arith.negf %68 : vector<8x32xf32>
    %70 = math.exp %69 : vector<8x32xf32>
    %cst_31 = arith.constant 1.000000e+00 : f32
    %71 = vector.broadcast %cst_31 : f32 to vector<8x32xf32>
    %72 = arith.addf %71, %70 : vector<8x32xf32>
    %73 = arith.divf %71, %72 : vector<8x32xf32>
    %74 = vector.extract_strided_slice %63 {offsets = [0, 32], sizes = [8, 32], strides = [1, 1]} : vector<8x96xf32> to vector<8x32xf32>
    %75 = vector.extract_strided_slice %65 {offsets = [0, 32], sizes = [8, 32], strides = [1, 1]} : vector<8x96xf32> to vector<8x32xf32>
    %76 = arith.addf %74, %75 : vector<8x32xf32>
    %77 = arith.negf %76 : vector<8x32xf32>
    %78 = math.exp %77 : vector<8x32xf32>
    %cst_32 = arith.constant 1.000000e+00 : f32
    %79 = vector.broadcast %cst_32 : f32 to vector<8x32xf32>
    %80 = arith.addf %79, %78 : vector<8x32xf32>
    %81 = arith.divf %79, %80 : vector<8x32xf32>
    %82 = vector.extract_strided_slice %63 {offsets = [0, 64], sizes = [8, 32], strides = [1, 1]} : vector<8x96xf32> to vector<8x32xf32>
    %83 = vector.extract_strided_slice %65 {offsets = [0, 64], sizes = [8, 32], strides = [1, 1]} : vector<8x96xf32> to vector<8x32xf32>
    %84 = vector.broadcast %20 : vector<1x32xf32> to vector<8x32xf32>
    %85 = arith.addf %83, %84 : vector<8x32xf32>
    %86 = arith.mulf %73, %85 : vector<8x32xf32>
    %87 = arith.addf %82, %86 : vector<8x32xf32>
    %88 = math.tanh %87 : vector<8x32xf32>
    %cst_33 = arith.constant 1.000000e+00 : f32
    %89 = vector.broadcast %cst_33 : f32 to vector<8x32xf32>
    %90 = arith.subf %89, %81 : vector<8x32xf32>
    %91 = arith.mulf %90, %88 : vector<8x32xf32>
    %92 = arith.mulf %81, %55 : vector<8x32xf32>
    %93 = arith.addf %91, %92 : vector<8x32xf32>
    %94 = arith.index_cast %c1_i32 : i32 to index
    %c0_34 = arith.constant 0 : index
    %c0_35 = arith.constant 0 : index
    %95 = vector.load %arg14[%94, %c0_34, %c0_35] : memref<8x8x32xf32, #tpu.memory_space<vmem>>, vector<1x8x32xf32>
    %96 = vector.shape_cast %95 : vector<1x8x32xf32> to vector<8x32xf32>
    %97 = vector.shape_cast %93 : vector<8x32xf32> to vector<1x8x32xf32>
    tpu.vector_store %arg14[%94, %c0_34, %c0_35], %97 {strides = array<i32>} : memref<8x8x32xf32, #tpu.memory_space<vmem>>, vector<1x8x32xf32>,
    %c2_i32 = arith.constant 2 : i32
    %98 = arith.index_cast %c2_i32 : i32 to index
    %c0_36 = arith.constant 0 : index
    %c0_37 = arith.constant 0 : index
    %99 = vector.load %arg16[%98, %c0_36, %c0_37] : memref<8x8x96xbf16, #tpu.memory_space<vmem>>, vector<1x8x96xbf16>
    %100 = vector.shape_cast %99 : vector<1x8x96xbf16> to vector<8x96xbf16>
    %101 = arith.extf %100 : vector<8x96xbf16> to vector<8x96xf32>
    %102 = arith.truncf %93 : vector<8x32xf32> to vector<8x32xbf16>
    %cst_38 = arith.constant dense<0.000000e+00> : vector<8x96xf32>
    %103 = tpu.matmul %102, %19, %cst_38 {dimension_numbers = #tpu.dot_dimension_numbers<[1], [0], [0], [1], [0, 0, 1, 1], [], []>} : vector<8x32xbf16>, vector<32x96xbf16>, vector<8x96xf32> -> vector<8x96xf32>
    %104 = vector.extract_strided_slice %101 {offsets = [0, 0], sizes = [8, 32], strides = [1, 1]} : vector<8x96xf32> to vector<8x32xf32>
    %105 = vector.extract_strided_slice %103 {offsets = [0, 0], sizes = [8, 32], strides = [1, 1]} : vector<8x96xf32> to vector<8x32xf32>
    %106 = arith.addf %104, %105 : vector<8x32xf32>
    %107 = arith.negf %106 : vector<8x32xf32>
    %108 = math.exp %107 : vector<8x32xf32>
    %cst_39 = arith.constant 1.000000e+00 : f32
    %109 = vector.broadcast %cst_39 : f32 to vector<8x32xf32>
    %110 = arith.addf %109, %108 : vector<8x32xf32>
    %111 = arith.divf %109, %110 : vector<8x32xf32>
    %112 = vector.extract_strided_slice %101 {offsets = [0, 32], sizes = [8, 32], strides = [1, 1]} : vector<8x96xf32> to vector<8x32xf32>
    %113 = vector.extract_strided_slice %103 {offsets = [0, 32], sizes = [8, 32], strides = [1, 1]} : vector<8x96xf32> to vector<8x32xf32>
    %114 = arith.addf %112, %113 : vector<8x32xf32>
    %115 = arith.negf %114 : vector<8x32xf32>
    %116 = math.exp %115 : vector<8x32xf32>
    %cst_40 = arith.constant 1.000000e+00 : f32
    %117 = vector.broadcast %cst_40 : f32 to vector<8x32xf32>
    %118 = arith.addf %117, %116 : vector<8x32xf32>
    %119 = arith.divf %117, %118 : vector<8x32xf32>
    %120 = vector.extract_strided_slice %101 {offsets = [0, 64], sizes = [8, 32], strides = [1, 1]} : vector<8x96xf32> to vector<8x32xf32>
    %121 = vector.extract_strided_slice %103 {offsets = [0, 64], sizes = [8, 32], strides = [1, 1]} : vector<8x96xf32> to vector<8x32xf32>
    %122 = vector.broadcast %20 : vector<1x32xf32> to vector<8x32xf32>
    %123 = arith.addf %121, %122 : vector<8x32xf32>
    %124 = arith.mulf %111, %123 : vector<8x32xf32>
    %125 = arith.addf %120, %124 : vector<8x32xf32>
    %126 = math.tanh %125 : vector<8x32xf32>
    %cst_41 = arith.constant 1.000000e+00 : f32
    %127 = vector.broadcast %cst_41 : f32 to vector<8x32xf32>
    %128 = arith.subf %127, %119 : vector<8x32xf32>
    %129 = arith.mulf %128, %126 : vector<8x32xf32>
    %130 = arith.mulf %119, %93 : vector<8x32xf32>
    %131 = arith.addf %129, %130 : vector<8x32xf32>
    %132 = arith.index_cast %c2_i32 : i32 to index
    %c0_42 = arith.constant 0 : index
    %c0_43 = arith.constant 0 : index
    %133 = vector.load %arg14[%132, %c0_42, %c0_43] : memref<8x8x32xf32, #tpu.memory_space<vmem>>, vector<1x8x32xf32>
    %134 = vector.shape_cast %133 : vector<1x8x32xf32> to vector<8x32xf32>
    %135 = vector.shape_cast %131 : vector<8x32xf32> to vector<1x8x32xf32>
    tpu.vector_store %arg14[%132, %c0_42, %c0_43], %135 {strides = array<i32>} : memref<8x8x32xf32, #tpu.memory_space<vmem>>, vector<1x8x32xf32>,
    %c3_i32 = arith.constant 3 : i32
    %136 = arith.index_cast %c3_i32 : i32 to index
    %c0_44 = arith.constant 0 : index
    %c0_45 = arith.constant 0 : index
    %137 = vector.load %arg16[%136, %c0_44, %c0_45] : memref<8x8x96xbf16, #tpu.memory_space<vmem>>, vector<1x8x96xbf16>
    %138 = vector.shape_cast %137 : vector<1x8x96xbf16> to vector<8x96xbf16>
    %139 = arith.extf %138 : vector<8x96xbf16> to vector<8x96xf32>
    %140 = arith.truncf %131 : vector<8x32xf32> to vector<8x32xbf16>
    %cst_46 = arith.constant dense<0.000000e+00> : vector<8x96xf32>
    %141 = tpu.matmul %140, %19, %cst_46 {dimension_numbers = #tpu.dot_dimension_numbers<[1], [0], [0], [1], [0, 0, 1, 1], [], []>} : vector<8x32xbf16>, vector<32x96xbf16>, vector<8x96xf32> -> vector<8x96xf32>
    %142 = vector.extract_strided_slice %139 {offsets = [0, 0], sizes = [8, 32], strides = [1, 1]} : vector<8x96xf32> to vector<8x32xf32>
    %143 = vector.extract_strided_slice %141 {offsets = [0, 0], sizes = [8, 32], strides = [1, 1]} : vector<8x96xf32> to vector<8x32xf32>
    %144 = arith.addf %142, %143 : vector<8x32xf32>
    %145 = arith.negf %144 : vector<8x32xf32>
    %146 = math.exp %145 : vector<8x32xf32>
    %cst_47 = arith.constant 1.000000e+00 : f32
    %147 = vector.broadcast %cst_47 : f32 to vector<8x32xf32>
    %148 = arith.addf %147, %146 : vector<8x32xf32>
    %149 = arith.divf %147, %148 : vector<8x32xf32>
    %150 = vector.extract_strided_slice %139 {offsets = [0, 32], sizes = [8, 32], strides = [1, 1]} : vector<8x96xf32> to vector<8x32xf32>
    %151 = vector.extract_strided_slice %141 {offsets = [0, 32], sizes = [8, 32], strides = [1, 1]} : vector<8x96xf32> to vector<8x32xf32>
    %152 = arith.addf %150, %151 : vector<8x32xf32>
    %153 = arith.negf %152 : vector<8x32xf32>
    %154 = math.exp %153 : vector<8x32xf32>
    %cst_48 = arith.constant 1.000000e+00 : f32
    %155 = vector.broadcast %cst_48 : f32 to vector<8x32xf32>
    %156 = arith.addf %155, %154 : vector<8x32xf32>
    %157 = arith.divf %155, %156 : vector<8x32xf32>
    %158 = vector.extract_strided_slice %139 {offsets = [0, 64], sizes = [8, 32], strides = [1, 1]} : vector<8x96xf32> to vector<8x32xf32>
    %159 = vector.extract_strided_slice %141 {offsets = [0, 64], sizes = [8, 32], strides = [1, 1]} : vector<8x96xf32> to vector<8x32xf32>
    %160 = vector.broadcast %20 : vector<1x32xf32> to vector<8x32xf32>
    %161 = arith.addf %159, %160 : vector<8x32xf32>
    %162 = arith.mulf %149, %161 : vector<8x32xf32>
    %163 = arith.addf %158, %162 : vector<8x32xf32>
    %164 = math.tanh %163 : vector<8x32xf32>
    %cst_49 = arith.constant 1.000000e+00 : f32
    %165 = vector.broadcast %cst_49 : f32 to vector<8x32xf32>
    %166 = arith.subf %165, %157 : vector<8x32xf32>
    %167 = arith.mulf %166, %164 : vector<8x32xf32>
    %168 = arith.mulf %157, %131 : vector<8x32xf32>
    %169 = arith.addf %167, %168 : vector<8x32xf32>
    %170 = arith.index_cast %c3_i32 : i32 to index
    %c0_50 = arith.constant 0 : index
    %c0_51 = arith.constant 0 : index
    %171 = vector.load %arg14[%170, %c0_50, %c0_51] : memref<8x8x32xf32, #tpu.memory_space<vmem>>, vector<1x8x32xf32>
    %172 = vector.shape_cast %171 : vector<1x8x32xf32> to vector<8x32xf32>
    %173 = vector.shape_cast %169 : vector<8x32xf32> to vector<1x8x32xf32>
    tpu.vector_store %arg14[%170, %c0_50, %c0_51], %173 {strides = array<i32>} : memref<8x8x32xf32, #tpu.memory_space<vmem>>, vector<1x8x32xf32>,
    %c4_i32 = arith.constant 4 : i32
    %174 = arith.index_cast %c4_i32 : i32 to index
    %c0_52 = arith.constant 0 : index
    %c0_53 = arith.constant 0 : index
    %175 = vector.load %arg16[%174, %c0_52, %c0_53] : memref<8x8x96xbf16, #tpu.memory_space<vmem>>, vector<1x8x96xbf16>
    %176 = vector.shape_cast %175 : vector<1x8x96xbf16> to vector<8x96xbf16>
    %177 = arith.extf %176 : vector<8x96xbf16> to vector<8x96xf32>
    %178 = arith.truncf %169 : vector<8x32xf32> to vector<8x32xbf16>
    %cst_54 = arith.constant dense<0.000000e+00> : vector<8x96xf32>
    %179 = tpu.matmul %178, %19, %cst_54 {dimension_numbers = #tpu.dot_dimension_numbers<[1], [0], [0], [1], [0, 0, 1, 1], [], []>} : vector<8x32xbf16>, vector<32x96xbf16>, vector<8x96xf32> -> vector<8x96xf32>
    %180 = vector.extract_strided_slice %177 {offsets = [0, 0], sizes = [8, 32], strides = [1, 1]} : vector<8x96xf32> to vector<8x32xf32>
    %181 = vector.extract_strided_slice %179 {offsets = [0, 0], sizes = [8, 32], strides = [1, 1]} : vector<8x96xf32> to vector<8x32xf32>
    %182 = arith.addf %180, %181 : vector<8x32xf32>
    %183 = arith.negf %182 : vector<8x32xf32>
    %184 = math.exp %183 : vector<8x32xf32>
    %cst_55 = arith.constant 1.000000e+00 : f32
    %185 = vector.broadcast %cst_55 : f32 to vector<8x32xf32>
    %186 = arith.addf %185, %184 : vector<8x32xf32>
    %187 = arith.divf %185, %186 : vector<8x32xf32>
    %188 = vector.extract_strided_slice %177 {offsets = [0, 32], sizes = [8, 32], strides = [1, 1]} : vector<8x96xf32> to vector<8x32xf32>
    %189 = vector.extract_strided_slice %179 {offsets = [0, 32], sizes = [8, 32], strides = [1, 1]} : vector<8x96xf32> to vector<8x32xf32>
    %190 = arith.addf %188, %189 : vector<8x32xf32>
    %191 = arith.negf %190 : vector<8x32xf32>
    %192 = math.exp %191 : vector<8x32xf32>
    %cst_56 = arith.constant 1.000000e+00 : f32
    %193 = vector.broadcast %cst_56 : f32 to vector<8x32xf32>
    %194 = arith.addf %193, %192 : vector<8x32xf32>
    %195 = arith.divf %193, %194 : vector<8x32xf32>
    %196 = vector.extract_strided_slice %177 {offsets = [0, 64], sizes = [8, 32], strides = [1, 1]} : vector<8x96xf32> to vector<8x32xf32>
    %197 = vector.extract_strided_slice %179 {offsets = [0, 64], sizes = [8, 32], strides = [1, 1]} : vector<8x96xf32> to vector<8x32xf32>
    %198 = vector.broadcast %20 : vector<1x32xf32> to vector<8x32xf32>
    %199 = arith.addf %197, %198 : vector<8x32xf32>
    %200 = arith.mulf %187, %199 : vector<8x32xf32>
    %201 = arith.addf %196, %200 : vector<8x32xf32>
    %202 = math.tanh %201 : vector<8x32xf32>
    %cst_57 = arith.constant 1.000000e+00 : f32
    %203 = vector.broadcast %cst_57 : f32 to vector<8x32xf32>
    %204 = arith.subf %203, %195 : vector<8x32xf32>
    %205 = arith.mulf %204, %202 : vector<8x32xf32>
    %206 = arith.mulf %195, %169 : vector<8x32xf32>
    %207 = arith.addf %205, %206 : vector<8x32xf32>
    %208 = arith.index_cast %c4_i32 : i32 to index
    %c0_58 = arith.constant 0 : index
    %c0_59 = arith.constant 0 : index
    %209 = vector.load %arg14[%208, %c0_58, %c0_59] : memref<8x8x32xf32, #tpu.memory_space<vmem>>, vector<1x8x32xf32>
    %210 = vector.shape_cast %209 : vector<1x8x32xf32> to vector<8x32xf32>
    %211 = vector.shape_cast %207 : vector<8x32xf32> to vector<1x8x32xf32>
    tpu.vector_store %arg14[%208, %c0_58, %c0_59], %211 {strides = array<i32>} : memref<8x8x32xf32, #tpu.memory_space<vmem>>, vector<1x8x32xf32>,
    %c5_i32 = arith.constant 5 : i32
    %212 = arith.index_cast %c5_i32 : i32 to index
    %c0_60 = arith.constant 0 : index
    %c0_61 = arith.constant 0 : index
    %213 = vector.load %arg16[%212, %c0_60, %c0_61] : memref<8x8x96xbf16, #tpu.memory_space<vmem>>, vector<1x8x96xbf16>
    %214 = vector.shape_cast %213 : vector<1x8x96xbf16> to vector<8x96xbf16>
    %215 = arith.extf %214 : vector<8x96xbf16> to vector<8x96xf32>
    %216 = arith.truncf %207 : vector<8x32xf32> to vector<8x32xbf16>
    %cst_62 = arith.constant dense<0.000000e+00> : vector<8x96xf32>
    %217 = tpu.matmul %216, %19, %cst_62 {dimension_numbers = #tpu.dot_dimension_numbers<[1], [0], [0], [1], [0, 0, 1, 1], [], []>} : vector<8x32xbf16>, vector<32x96xbf16>, vector<8x96xf32> -> vector<8x96xf32>
    %218 = vector.extract_strided_slice %215 {offsets = [0, 0], sizes = [8, 32], strides = [1, 1]} : vector<8x96xf32> to vector<8x32xf32>
    %219 = vector.extract_strided_slice %217 {offsets = [0, 0], sizes = [8, 32], strides = [1, 1]} : vector<8x96xf32> to vector<8x32xf32>
    %220 = arith.addf %218, %219 : vector<8x32xf32>
    %221 = arith.negf %220 : vector<8x32xf32>
    %222 = math.exp %221 : vector<8x32xf32>
    %cst_63 = arith.constant 1.000000e+00 : f32
    %223 = vector.broadcast %cst_63 : f32 to vector<8x32xf32>
    %224 = arith.addf %223, %222 : vector<8x32xf32>
    %225 = arith.divf %223, %224 : vector<8x32xf32>
    %226 = vector.extract_strided_slice %215 {offsets = [0, 32], sizes = [8, 32], strides = [1, 1]} : vector<8x96xf32> to vector<8x32xf32>
    %227 = vector.extract_strided_slice %217 {offsets = [0, 32], sizes = [8, 32], strides = [1, 1]} : vector<8x96xf32> to vector<8x32xf32>
    %228 = arith.addf %226, %227 : vector<8x32xf32>
    %229 = arith.negf %228 : vector<8x32xf32>
    %230 = math.exp %229 : vector<8x32xf32>
    %cst_64 = arith.constant 1.000000e+00 : f32
    %231 = vector.broadcast %cst_64 : f32 to vector<8x32xf32>
    %232 = arith.addf %231, %230 : vector<8x32xf32>
    %233 = arith.divf %231, %232 : vector<8x32xf32>
    %234 = vector.extract_strided_slice %215 {offsets = [0, 64], sizes = [8, 32], strides = [1, 1]} : vector<8x96xf32> to vector<8x32xf32>
    %235 = vector.extract_strided_slice %217 {offsets = [0, 64], sizes = [8, 32], strides = [1, 1]} : vector<8x96xf32> to vector<8x32xf32>
    %236 = vector.broadcast %20 : vector<1x32xf32> to vector<8x32xf32>
    %237 = arith.addf %235, %236 : vector<8x32xf32>
    %238 = arith.mulf %225, %237 : vector<8x32xf32>
    %239 = arith.addf %234, %238 : vector<8x32xf32>
    %240 = math.tanh %239 : vector<8x32xf32>
    %cst_65 = arith.constant 1.000000e+00 : f32
    %241 = vector.broadcast %cst_65 : f32 to vector<8x32xf32>
    %242 = arith.subf %241, %233 : vector<8x32xf32>
    %243 = arith.mulf %242, %240 : vector<8x32xf32>
    %244 = arith.mulf %233, %207 : vector<8x32xf32>
    %245 = arith.addf %243, %244 : vector<8x32xf32>
    %246 = arith.index_cast %c5_i32 : i32 to index
    %c0_66 = arith.constant 0 : index
    %c0_67 = arith.constant 0 : index
    %247 = vector.load %arg14[%246, %c0_66, %c0_67] : memref<8x8x32xf32, #tpu.memory_space<vmem>>, vector<1x8x32xf32>
    %248 = vector.shape_cast %247 : vector<1x8x32xf32> to vector<8x32xf32>
    %249 = vector.shape_cast %245 : vector<8x32xf32> to vector<1x8x32xf32>
    tpu.vector_store %arg14[%246, %c0_66, %c0_67], %249 {strides = array<i32>} : memref<8x8x32xf32, #tpu.memory_space<vmem>>, vector<1x8x32xf32>,
    %c6_i32 = arith.constant 6 : i32
    %250 = arith.index_cast %c6_i32 : i32 to index
    %c0_68 = arith.constant 0 : index
    %c0_69 = arith.constant 0 : index
    %251 = vector.load %arg16[%250, %c0_68, %c0_69] : memref<8x8x96xbf16, #tpu.memory_space<vmem>>, vector<1x8x96xbf16>
    %252 = vector.shape_cast %251 : vector<1x8x96xbf16> to vector<8x96xbf16>
    %253 = arith.extf %252 : vector<8x96xbf16> to vector<8x96xf32>
    %254 = arith.truncf %245 : vector<8x32xf32> to vector<8x32xbf16>
    %cst_70 = arith.constant dense<0.000000e+00> : vector<8x96xf32>
    %255 = tpu.matmul %254, %19, %cst_70 {dimension_numbers = #tpu.dot_dimension_numbers<[1], [0], [0], [1], [0, 0, 1, 1], [], []>} : vector<8x32xbf16>, vector<32x96xbf16>, vector<8x96xf32> -> vector<8x96xf32>
    %256 = vector.extract_strided_slice %253 {offsets = [0, 0], sizes = [8, 32], strides = [1, 1]} : vector<8x96xf32> to vector<8x32xf32>
    %257 = vector.extract_strided_slice %255 {offsets = [0, 0], sizes = [8, 32], strides = [1, 1]} : vector<8x96xf32> to vector<8x32xf32>
    %258 = arith.addf %256, %257 : vector<8x32xf32>
    %259 = arith.negf %258 : vector<8x32xf32>
    %260 = math.exp %259 : vector<8x32xf32>
    %cst_71 = arith.constant 1.000000e+00 : f32
    %261 = vector.broadcast %cst_71 : f32 to vector<8x32xf32>
    %262 = arith.addf %261, %260 : vector<8x32xf32>
    %263 = arith.divf %261, %262 : vector<8x32xf32>
    %264 = vector.extract_strided_slice %253 {offsets = [0, 32], sizes = [8, 32], strides = [1, 1]} : vector<8x96xf32> to vector<8x32xf32>
    %265 = vector.extract_strided_slice %255 {offsets = [0, 32], sizes = [8, 32], strides = [1, 1]} : vector<8x96xf32> to vector<8x32xf32>
    %266 = arith.addf %264, %265 : vector<8x32xf32>
    %267 = arith.negf %266 : vector<8x32xf32>
    %268 = math.exp %267 : vector<8x32xf32>
    %cst_72 = arith.constant 1.000000e+00 : f32
    %269 = vector.broadcast %cst_72 : f32 to vector<8x32xf32>
    %270 = arith.addf %269, %268 : vector<8x32xf32>
    %271 = arith.divf %269, %270 : vector<8x32xf32>
    %272 = vector.extract_strided_slice %253 {offsets = [0, 64], sizes = [8, 32], strides = [1, 1]} : vector<8x96xf32> to vector<8x32xf32>
    %273 = vector.extract_strided_slice %255 {offsets = [0, 64], sizes = [8, 32], strides = [1, 1]} : vector<8x96xf32> to vector<8x32xf32>
    %274 = vector.broadcast %20 : vector<1x32xf32> to vector<8x32xf32>
    %275 = arith.addf %273, %274 : vector<8x32xf32>
    %276 = arith.mulf %263, %275 : vector<8x32xf32>
    %277 = arith.addf %272, %276 : vector<8x32xf32>
    %278 = math.tanh %277 : vector<8x32xf32>
    %cst_73 = arith.constant 1.000000e+00 : f32
    %279 = vector.broadcast %cst_73 : f32 to vector<8x32xf32>
    %280 = arith.subf %279, %271 : vector<8x32xf32>
    %281 = arith.mulf %280, %278 : vector<8x32xf32>
    %282 = arith.mulf %271, %245 : vector<8x32xf32>
    %283 = arith.addf %281, %282 : vector<8x32xf32>
    %284 = arith.index_cast %c6_i32 : i32 to index
    %c0_74 = arith.constant 0 : index
    %c0_75 = arith.constant 0 : index
    %285 = vector.load %arg14[%284, %c0_74, %c0_75] : memref<8x8x32xf32, #tpu.memory_space<vmem>>, vector<1x8x32xf32>
    %286 = vector.shape_cast %285 : vector<1x8x32xf32> to vector<8x32xf32>
    %287 = vector.shape_cast %283 : vector<8x32xf32> to vector<1x8x32xf32>
    tpu.vector_store %arg14[%284, %c0_74, %c0_75], %287 {strides = array<i32>} : memref<8x8x32xf32, #tpu.memory_space<vmem>>, vector<1x8x32xf32>,
    %c7_i32 = arith.constant 7 : i32
    %288 = arith.index_cast %c7_i32 : i32 to index
    %c0_76 = arith.constant 0 : index
    %c0_77 = arith.constant 0 : index
    %289 = vector.load %arg16[%288, %c0_76, %c0_77] : memref<8x8x96xbf16, #tpu.memory_space<vmem>>, vector<1x8x96xbf16>
    %290 = vector.shape_cast %289 : vector<1x8x96xbf16> to vector<8x96xbf16>
    %291 = arith.extf %290 : vector<8x96xbf16> to vector<8x96xf32>
    %292 = arith.truncf %283 : vector<8x32xf32> to vector<8x32xbf16>
    %cst_78 = arith.constant dense<0.000000e+00> : vector<8x96xf32>
    %293 = tpu.matmul %292, %19, %cst_78 {dimension_numbers = #tpu.dot_dimension_numbers<[1], [0], [0], [1], [0, 0, 1, 1], [], []>} : vector<8x32xbf16>, vector<32x96xbf16>, vector<8x96xf32> -> vector<8x96xf32>
    %294 = vector.extract_strided_slice %291 {offsets = [0, 0], sizes = [8, 32], strides = [1, 1]} : vector<8x96xf32> to vector<8x32xf32>
    %295 = vector.extract_strided_slice %293 {offsets = [0, 0], sizes = [8, 32], strides = [1, 1]} : vector<8x96xf32> to vector<8x32xf32>
    %296 = arith.addf %294, %295 : vector<8x32xf32>
    %297 = arith.negf %296 : vector<8x32xf32>
    %298 = math.exp %297 : vector<8x32xf32>
    %cst_79 = arith.constant 1.000000e+00 : f32
    %299 = vector.broadcast %cst_79 : f32 to vector<8x32xf32>
    %300 = arith.addf %299, %298 : vector<8x32xf32>
    %301 = arith.divf %299, %300 : vector<8x32xf32>
    %302 = vector.extract_strided_slice %291 {offsets = [0, 32], sizes = [8, 32], strides = [1, 1]} : vector<8x96xf32> to vector<8x32xf32>
    %303 = vector.extract_strided_slice %293 {offsets = [0, 32], sizes = [8, 32], strides = [1, 1]} : vector<8x96xf32> to vector<8x32xf32>
    %304 = arith.addf %302, %303 : vector<8x32xf32>
    %305 = arith.negf %304 : vector<8x32xf32>
    %306 = math.exp %305 : vector<8x32xf32>
    %cst_80 = arith.constant 1.000000e+00 : f32
    %307 = vector.broadcast %cst_80 : f32 to vector<8x32xf32>
    %308 = arith.addf %307, %306 : vector<8x32xf32>
    %309 = arith.divf %307, %308 : vector<8x32xf32>
    %310 = vector.extract_strided_slice %291 {offsets = [0, 64], sizes = [8, 32], strides = [1, 1]} : vector<8x96xf32> to vector<8x32xf32>
    %311 = vector.extract_strided_slice %293 {offsets = [0, 64], sizes = [8, 32], strides = [1, 1]} : vector<8x96xf32> to vector<8x32xf32>
    %312 = vector.broadcast %20 : vector<1x32xf32> to vector<8x32xf32>
    %313 = arith.addf %311, %312 : vector<8x32xf32>
    %314 = arith.mulf %301, %313 : vector<8x32xf32>
    %315 = arith.addf %310, %314 : vector<8x32xf32>
    %316 = math.tanh %315 : vector<8x32xf32>
    %cst_81 = arith.constant 1.000000e+00 : f32
    %317 = vector.broadcast %cst_81 : f32 to vector<8x32xf32>
    %318 = arith.subf %317, %309 : vector<8x32xf32>
    %319 = arith.mulf %318, %316 : vector<8x32xf32>
    %320 = arith.mulf %309, %283 : vector<8x32xf32>
    %321 = arith.addf %319, %320 : vector<8x32xf32>
    %322 = arith.index_cast %c7_i32 : i32 to index
    %c0_82 = arith.constant 0 : index
    %c0_83 = arith.constant 0 : index
    %323 = vector.load %arg14[%322, %c0_82, %c0_83] : memref<8x8x32xf32, #tpu.memory_space<vmem>>, vector<1x8x32xf32>
    %324 = vector.shape_cast %323 : vector<1x8x32xf32> to vector<8x32xf32>
    %325 = vector.shape_cast %321 : vector<8x32xf32> to vector<1x8x32xf32>
    tpu.vector_store %arg14[%322, %c0_82, %c0_83], %325 {strides = array<i32>} : memref<8x8x32xf32, #tpu.memory_space<vmem>>, vector<1x8x32xf32>,
    %c8_i32 = arith.constant 8 : i32
    %c0_84 = arith.constant 0 : index
    %c0_85 = arith.constant 0 : index
    %c0_86 = arith.constant 0 : index
    %326 = vector.load %arg14[%c0_84, %c0_85, %c0_86] : memref<8x8x32xf32, #tpu.memory_space<vmem>>, vector<8x8x32xf32>
    %327 = vector.shape_cast %326 : vector<8x8x32xf32> to vector<64x32xf32>
    %328 = arith.truncf %327 : vector<64x32xf32> to vector<64x32xbf16>
    %c0_87 = arith.constant 0 : index
    %c0_88 = arith.constant 0 : index
    %329 = vector.load %arg8[%c0_87, %c0_88] : memref<32x96xbf16, #tpu.memory_space<vmem>>, vector<32x96xbf16>
    %cst_89 = arith.constant dense<0.000000e+00> : vector<64x96xf32>
    %330 = tpu.matmul %328, %329, %cst_89 {dimension_numbers = #tpu.dot_dimension_numbers<[1], [0], [0], [1], [0, 0, 1, 1], [], []>} : vector<64x32xbf16>, vector<32x96xbf16>, vector<64x96xf32> -> vector<64x96xf32>
    %c0_90 = arith.constant 0 : index
    %c0_91 = arith.constant 0 : index
    %331 = vector.load %arg9[%c0_90, %c0_91] : memref<1x96xf32, #tpu.memory_space<vmem>>, vector<1x96xf32>
    %332 = vector.broadcast %331 : vector<1x96xf32> to vector<64x96xf32>
    %333 = arith.addf %330, %332 : vector<64x96xf32>
    %334 = arith.truncf %333 : vector<64x96xf32> to vector<64x96xbf16>
    %335 = vector.shape_cast %334 : vector<64x96xbf16> to vector<8x8x96xbf16>
    %c0_92 = arith.constant 0 : index
    %c0_93 = arith.constant 0 : index
    %c0_94 = arith.constant 0 : index
    %336 = vector.load %arg17[%c0_92, %c0_93, %c0_94] : memref<8x8x96xbf16, #tpu.memory_space<vmem>>, vector<8x8x96xbf16>
    tpu.vector_store %arg17[%c0_92, %c0_93, %c0_94], %335 {strides = array<i32>} : memref<8x8x96xbf16, #tpu.memory_space<vmem>>, vector<8x8x96xbf16>,
    %c0_95 = arith.constant 0 : index
    %c0_96 = arith.constant 0 : index
    %337 = vector.load %arg10[%c0_95, %c0_96] : memref<32x96xbf16, #tpu.memory_space<vmem>>, vector<32x96xbf16>
    %c0_97 = arith.constant 0 : index
    %c0_98 = arith.constant 0 : index
    %338 = vector.load %arg11[%c0_97, %c0_98] : memref<1x32xf32, #tpu.memory_space<vmem>>, vector<1x32xf32>
    %cst_99 = arith.constant 0.000000e+00 : f32
    %339 = vector.broadcast %cst_99 : f32 to vector<8x32xf32>
    %c0_i32_100 = arith.constant 0 : i32
    %340 = arith.index_cast %c0_i32_100 : i32 to index
    %c0_101 = arith.constant 0 : index
    %c0_102 = arith.constant 0 : index
    %341 = vector.load %arg17[%340, %c0_101, %c0_102] : memref<8x8x96xbf16, #tpu.memory_space<vmem>>, vector<1x8x96xbf16>
    %342 = vector.shape_cast %341 : vector<1x8x96xbf16> to vector<8x96xbf16>
    %343 = arith.extf %342 : vector<8x96xbf16> to vector<8x96xf32>
    %344 = arith.truncf %339 : vector<8x32xf32> to vector<8x32xbf16>
    %cst_103 = arith.constant dense<0.000000e+00> : vector<8x96xf32>
    %345 = tpu.matmul %344, %337, %cst_103 {dimension_numbers = #tpu.dot_dimension_numbers<[1], [0], [0], [1], [0, 0, 1, 1], [], []>} : vector<8x32xbf16>, vector<32x96xbf16>, vector<8x96xf32> -> vector<8x96xf32>
    %346 = vector.extract_strided_slice %343 {offsets = [0, 0], sizes = [8, 32], strides = [1, 1]} : vector<8x96xf32> to vector<8x32xf32>
    %347 = vector.extract_strided_slice %345 {offsets = [0, 0], sizes = [8, 32], strides = [1, 1]} : vector<8x96xf32> to vector<8x32xf32>
    %348 = arith.addf %346, %347 : vector<8x32xf32>
    %349 = arith.negf %348 : vector<8x32xf32>
    %350 = math.exp %349 : vector<8x32xf32>
    %cst_104 = arith.constant 1.000000e+00 : f32
    %351 = vector.broadcast %cst_104 : f32 to vector<8x32xf32>
    %352 = arith.addf %351, %350 : vector<8x32xf32>
    %353 = arith.divf %351, %352 : vector<8x32xf32>
    %354 = vector.extract_strided_slice %343 {offsets = [0, 32], sizes = [8, 32], strides = [1, 1]} : vector<8x96xf32> to vector<8x32xf32>
    %355 = vector.extract_strided_slice %345 {offsets = [0, 32], sizes = [8, 32], strides = [1, 1]} : vector<8x96xf32> to vector<8x32xf32>
    %356 = arith.addf %354, %355 : vector<8x32xf32>
    %357 = arith.negf %356 : vector<8x32xf32>
    %358 = math.exp %357 : vector<8x32xf32>
    %cst_105 = arith.constant 1.000000e+00 : f32
    %359 = vector.broadcast %cst_105 : f32 to vector<8x32xf32>
    %360 = arith.addf %359, %358 : vector<8x32xf32>
    %361 = arith.divf %359, %360 : vector<8x32xf32>
    %362 = vector.extract_strided_slice %343 {offsets = [0, 64], sizes = [8, 32], strides = [1, 1]} : vector<8x96xf32> to vector<8x32xf32>
    %363 = vector.extract_strided_slice %345 {offsets = [0, 64], sizes = [8, 32], strides = [1, 1]} : vector<8x96xf32> to vector<8x32xf32>
    %364 = vector.broadcast %338 : vector<1x32xf32> to vector<8x32xf32>
    %365 = arith.addf %363, %364 : vector<8x32xf32>
    %366 = arith.mulf %353, %365 : vector<8x32xf32>
    %367 = arith.addf %362, %366 : vector<8x32xf32>
    %368 = math.tanh %367 : vector<8x32xf32>
    %cst_106 = arith.constant 1.000000e+00 : f32
    %369 = vector.broadcast %cst_106 : f32 to vector<8x32xf32>
    %370 = arith.subf %369, %361 : vector<8x32xf32>
    %371 = arith.mulf %370, %368 : vector<8x32xf32>
    %372 = arith.mulf %361, %339 : vector<8x32xf32>
    %373 = arith.addf %371, %372 : vector<8x32xf32>
    %374 = arith.truncf %373 : vector<8x32xf32> to vector<8x32xbf16>
    %375 = arith.index_cast %c0_i32_100 : i32 to index
    %c0_107 = arith.constant 0 : index
    %c0_108 = arith.constant 0 : index
    %376 = vector.load %arg18[%375, %c0_107, %c0_108] : memref<8x8x32xbf16, #tpu.memory_space<vmem>>, vector<1x8x32xbf16>
    %377 = vector.shape_cast %376 : vector<1x8x32xbf16> to vector<8x32xbf16>
    %378 = vector.shape_cast %374 : vector<8x32xbf16> to vector<1x8x32xbf16>
    tpu.vector_store %arg18[%375, %c0_107, %c0_108], %378 {strides = array<i32>} : memref<8x8x32xbf16, #tpu.memory_space<vmem>>, vector<1x8x32xbf16>,
    %c1_i32_109 = arith.constant 1 : i32
    %379 = arith.index_cast %c1_i32_109 : i32 to index
    %c0_110 = arith.constant 0 : index
    %c0_111 = arith.constant 0 : index
    %380 = vector.load %arg17[%379, %c0_110, %c0_111] : memref<8x8x96xbf16, #tpu.memory_space<vmem>>, vector<1x8x96xbf16>
    %381 = vector.shape_cast %380 : vector<1x8x96xbf16> to vector<8x96xbf16>
    %382 = arith.extf %381 : vector<8x96xbf16> to vector<8x96xf32>
    %383 = arith.truncf %373 : vector<8x32xf32> to vector<8x32xbf16>
    %cst_112 = arith.constant dense<0.000000e+00> : vector<8x96xf32>
    %384 = tpu.matmul %383, %337, %cst_112 {dimension_numbers = #tpu.dot_dimension_numbers<[1], [0], [0], [1], [0, 0, 1, 1], [], []>} : vector<8x32xbf16>, vector<32x96xbf16>, vector<8x96xf32> -> vector<8x96xf32>
    %385 = vector.extract_strided_slice %382 {offsets = [0, 0], sizes = [8, 32], strides = [1, 1]} : vector<8x96xf32> to vector<8x32xf32>
    %386 = vector.extract_strided_slice %384 {offsets = [0, 0], sizes = [8, 32], strides = [1, 1]} : vector<8x96xf32> to vector<8x32xf32>
    %387 = arith.addf %385, %386 : vector<8x32xf32>
    %388 = arith.negf %387 : vector<8x32xf32>
    %389 = math.exp %388 : vector<8x32xf32>
    %cst_113 = arith.constant 1.000000e+00 : f32
    %390 = vector.broadcast %cst_113 : f32 to vector<8x32xf32>
    %391 = arith.addf %390, %389 : vector<8x32xf32>
    %392 = arith.divf %390, %391 : vector<8x32xf32>
    %393 = vector.extract_strided_slice %382 {offsets = [0, 32], sizes = [8, 32], strides = [1, 1]} : vector<8x96xf32> to vector<8x32xf32>
    %394 = vector.extract_strided_slice %384 {offsets = [0, 32], sizes = [8, 32], strides = [1, 1]} : vector<8x96xf32> to vector<8x32xf32>
    %395 = arith.addf %393, %394 : vector<8x32xf32>
    %396 = arith.negf %395 : vector<8x32xf32>
    %397 = math.exp %396 : vector<8x32xf32>
    %cst_114 = arith.constant 1.000000e+00 : f32
    %398 = vector.broadcast %cst_114 : f32 to vector<8x32xf32>
    %399 = arith.addf %398, %397 : vector<8x32xf32>
    %400 = arith.divf %398, %399 : vector<8x32xf32>
    %401 = vector.extract_strided_slice %382 {offsets = [0, 64], sizes = [8, 32], strides = [1, 1]} : vector<8x96xf32> to vector<8x32xf32>
    %402 = vector.extract_strided_slice %384 {offsets = [0, 64], sizes = [8, 32], strides = [1, 1]} : vector<8x96xf32> to vector<8x32xf32>
    %403 = vector.broadcast %338 : vector<1x32xf32> to vector<8x32xf32>
    %404 = arith.addf %402, %403 : vector<8x32xf32>
    %405 = arith.mulf %392, %404 : vector<8x32xf32>
    %406 = arith.addf %401, %405 : vector<8x32xf32>
    %407 = math.tanh %406 : vector<8x32xf32>
    %cst_115 = arith.constant 1.000000e+00 : f32
    %408 = vector.broadcast %cst_115 : f32 to vector<8x32xf32>
    %409 = arith.subf %408, %400 : vector<8x32xf32>
    %410 = arith.mulf %409, %407 : vector<8x32xf32>
    %411 = arith.mulf %400, %373 : vector<8x32xf32>
    %412 = arith.addf %410, %411 : vector<8x32xf32>
    %413 = arith.truncf %412 : vector<8x32xf32> to vector<8x32xbf16>
    %414 = arith.index_cast %c1_i32_109 : i32 to index
    %c0_116 = arith.constant 0 : index
    %c0_117 = arith.constant 0 : index
    %415 = vector.load %arg18[%414, %c0_116, %c0_117] : memref<8x8x32xbf16, #tpu.memory_space<vmem>>, vector<1x8x32xbf16>
    %416 = vector.shape_cast %415 : vector<1x8x32xbf16> to vector<8x32xbf16>
    %417 = vector.shape_cast %413 : vector<8x32xbf16> to vector<1x8x32xbf16>
    tpu.vector_store %arg18[%414, %c0_116, %c0_117], %417 {strides = array<i32>} : memref<8x8x32xbf16, #tpu.memory_space<vmem>>, vector<1x8x32xbf16>,
    %c2_i32_118 = arith.constant 2 : i32
    %418 = arith.index_cast %c2_i32_118 : i32 to index
    %c0_119 = arith.constant 0 : index
    %c0_120 = arith.constant 0 : index
    %419 = vector.load %arg17[%418, %c0_119, %c0_120] : memref<8x8x96xbf16, #tpu.memory_space<vmem>>, vector<1x8x96xbf16>
    %420 = vector.shape_cast %419 : vector<1x8x96xbf16> to vector<8x96xbf16>
    %421 = arith.extf %420 : vector<8x96xbf16> to vector<8x96xf32>
    %422 = arith.truncf %412 : vector<8x32xf32> to vector<8x32xbf16>
    %cst_121 = arith.constant dense<0.000000e+00> : vector<8x96xf32>
    %423 = tpu.matmul %422, %337, %cst_121 {dimension_numbers = #tpu.dot_dimension_numbers<[1], [0], [0], [1], [0, 0, 1, 1], [], []>} : vector<8x32xbf16>, vector<32x96xbf16>, vector<8x96xf32> -> vector<8x96xf32>
    %424 = vector.extract_strided_slice %421 {offsets = [0, 0], sizes = [8, 32], strides = [1, 1]} : vector<8x96xf32> to vector<8x32xf32>
    %425 = vector.extract_strided_slice %423 {offsets = [0, 0], sizes = [8, 32], strides = [1, 1]} : vector<8x96xf32> to vector<8x32xf32>
    %426 = arith.addf %424, %425 : vector<8x32xf32>
    %427 = arith.negf %426 : vector<8x32xf32>
    %428 = math.exp %427 : vector<8x32xf32>
    %cst_122 = arith.constant 1.000000e+00 : f32
    %429 = vector.broadcast %cst_122 : f32 to vector<8x32xf32>
    %430 = arith.addf %429, %428 : vector<8x32xf32>
    %431 = arith.divf %429, %430 : vector<8x32xf32>
    %432 = vector.extract_strided_slice %421 {offsets = [0, 32], sizes = [8, 32], strides = [1, 1]} : vector<8x96xf32> to vector<8x32xf32>
    %433 = vector.extract_strided_slice %423 {offsets = [0, 32], sizes = [8, 32], strides = [1, 1]} : vector<8x96xf32> to vector<8x32xf32>
    %434 = arith.addf %432, %433 : vector<8x32xf32>
    %435 = arith.negf %434 : vector<8x32xf32>
    %436 = math.exp %435 : vector<8x32xf32>
    %cst_123 = arith.constant 1.000000e+00 : f32
    %437 = vector.broadcast %cst_123 : f32 to vector<8x32xf32>
    %438 = arith.addf %437, %436 : vector<8x32xf32>
    %439 = arith.divf %437, %438 : vector<8x32xf32>
    %440 = vector.extract_strided_slice %421 {offsets = [0, 64], sizes = [8, 32], strides = [1, 1]} : vector<8x96xf32> to vector<8x32xf32>
    %441 = vector.extract_strided_slice %423 {offsets = [0, 64], sizes = [8, 32], strides = [1, 1]} : vector<8x96xf32> to vector<8x32xf32>
    %442 = vector.broadcast %338 : vector<1x32xf32> to vector<8x32xf32>
    %443 = arith.addf %441, %442 : vector<8x32xf32>
    %444 = arith.mulf %431, %443 : vector<8x32xf32>
    %445 = arith.addf %440, %444 : vector<8x32xf32>
    %446 = math.tanh %445 : vector<8x32xf32>
    %cst_124 = arith.constant 1.000000e+00 : f32
    %447 = vector.broadcast %cst_124 : f32 to vector<8x32xf32>
    %448 = arith.subf %447, %439 : vector<8x32xf32>
    %449 = arith.mulf %448, %446 : vector<8x32xf32>
    %450 = arith.mulf %439, %412 : vector<8x32xf32>
    %451 = arith.addf %449, %450 : vector<8x32xf32>
    %452 = arith.truncf %451 : vector<8x32xf32> to vector<8x32xbf16>
    %453 = arith.index_cast %c2_i32_118 : i32 to index
    %c0_125 = arith.constant 0 : index
    %c0_126 = arith.constant 0 : index
    %454 = vector.load %arg18[%453, %c0_125, %c0_126] : memref<8x8x32xbf16, #tpu.memory_space<vmem>>, vector<1x8x32xbf16>
    %455 = vector.shape_cast %454 : vector<1x8x32xbf16> to vector<8x32xbf16>
    %456 = vector.shape_cast %452 : vector<8x32xbf16> to vector<1x8x32xbf16>
    tpu.vector_store %arg18[%453, %c0_125, %c0_126], %456 {strides = array<i32>} : memref<8x8x32xbf16, #tpu.memory_space<vmem>>, vector<1x8x32xbf16>,
    %c3_i32_127 = arith.constant 3 : i32
    %457 = arith.index_cast %c3_i32_127 : i32 to index
    %c0_128 = arith.constant 0 : index
    %c0_129 = arith.constant 0 : index
    %458 = vector.load %arg17[%457, %c0_128, %c0_129] : memref<8x8x96xbf16, #tpu.memory_space<vmem>>, vector<1x8x96xbf16>
    %459 = vector.shape_cast %458 : vector<1x8x96xbf16> to vector<8x96xbf16>
    %460 = arith.extf %459 : vector<8x96xbf16> to vector<8x96xf32>
    %461 = arith.truncf %451 : vector<8x32xf32> to vector<8x32xbf16>
    %cst_130 = arith.constant dense<0.000000e+00> : vector<8x96xf32>
    %462 = tpu.matmul %461, %337, %cst_130 {dimension_numbers = #tpu.dot_dimension_numbers<[1], [0], [0], [1], [0, 0, 1, 1], [], []>} : vector<8x32xbf16>, vector<32x96xbf16>, vector<8x96xf32> -> vector<8x96xf32>
    %463 = vector.extract_strided_slice %460 {offsets = [0, 0], sizes = [8, 32], strides = [1, 1]} : vector<8x96xf32> to vector<8x32xf32>
    %464 = vector.extract_strided_slice %462 {offsets = [0, 0], sizes = [8, 32], strides = [1, 1]} : vector<8x96xf32> to vector<8x32xf32>
    %465 = arith.addf %463, %464 : vector<8x32xf32>
    %466 = arith.negf %465 : vector<8x32xf32>
    %467 = math.exp %466 : vector<8x32xf32>
    %cst_131 = arith.constant 1.000000e+00 : f32
    %468 = vector.broadcast %cst_131 : f32 to vector<8x32xf32>
    %469 = arith.addf %468, %467 : vector<8x32xf32>
    %470 = arith.divf %468, %469 : vector<8x32xf32>
    %471 = vector.extract_strided_slice %460 {offsets = [0, 32], sizes = [8, 32], strides = [1, 1]} : vector<8x96xf32> to vector<8x32xf32>
    %472 = vector.extract_strided_slice %462 {offsets = [0, 32], sizes = [8, 32], strides = [1, 1]} : vector<8x96xf32> to vector<8x32xf32>
    %473 = arith.addf %471, %472 : vector<8x32xf32>
    %474 = arith.negf %473 : vector<8x32xf32>
    %475 = math.exp %474 : vector<8x32xf32>
    %cst_132 = arith.constant 1.000000e+00 : f32
    %476 = vector.broadcast %cst_132 : f32 to vector<8x32xf32>
    %477 = arith.addf %476, %475 : vector<8x32xf32>
    %478 = arith.divf %476, %477 : vector<8x32xf32>
    %479 = vector.extract_strided_slice %460 {offsets = [0, 64], sizes = [8, 32], strides = [1, 1]} : vector<8x96xf32> to vector<8x32xf32>
    %480 = vector.extract_strided_slice %462 {offsets = [0, 64], sizes = [8, 32], strides = [1, 1]} : vector<8x96xf32> to vector<8x32xf32>
    %481 = vector.broadcast %338 : vector<1x32xf32> to vector<8x32xf32>
    %482 = arith.addf %480, %481 : vector<8x32xf32>
    %483 = arith.mulf %470, %482 : vector<8x32xf32>
    %484 = arith.addf %479, %483 : vector<8x32xf32>
    %485 = math.tanh %484 : vector<8x32xf32>
    %cst_133 = arith.constant 1.000000e+00 : f32
    %486 = vector.broadcast %cst_133 : f32 to vector<8x32xf32>
    %487 = arith.subf %486, %478 : vector<8x32xf32>
    %488 = arith.mulf %487, %485 : vector<8x32xf32>
    %489 = arith.mulf %478, %451 : vector<8x32xf32>
    %490 = arith.addf %488, %489 : vector<8x32xf32>
    %491 = arith.truncf %490 : vector<8x32xf32> to vector<8x32xbf16>
    %492 = arith.index_cast %c3_i32_127 : i32 to index
    %c0_134 = arith.constant 0 : index
    %c0_135 = arith.constant 0 : index
    %493 = vector.load %arg18[%492, %c0_134, %c0_135] : memref<8x8x32xbf16, #tpu.memory_space<vmem>>, vector<1x8x32xbf16>
    %494 = vector.shape_cast %493 : vector<1x8x32xbf16> to vector<8x32xbf16>
    %495 = vector.shape_cast %491 : vector<8x32xbf16> to vector<1x8x32xbf16>
    tpu.vector_store %arg18[%492, %c0_134, %c0_135], %495 {strides = array<i32>} : memref<8x8x32xbf16, #tpu.memory_space<vmem>>, vector<1x8x32xbf16>,
    %c4_i32_136 = arith.constant 4 : i32
    %496 = arith.index_cast %c4_i32_136 : i32 to index
    %c0_137 = arith.constant 0 : index
    %c0_138 = arith.constant 0 : index
    %497 = vector.load %arg17[%496, %c0_137, %c0_138] : memref<8x8x96xbf16, #tpu.memory_space<vmem>>, vector<1x8x96xbf16>
    %498 = vector.shape_cast %497 : vector<1x8x96xbf16> to vector<8x96xbf16>
    %499 = arith.extf %498 : vector<8x96xbf16> to vector<8x96xf32>
    %500 = arith.truncf %490 : vector<8x32xf32> to vector<8x32xbf16>
    %cst_139 = arith.constant dense<0.000000e+00> : vector<8x96xf32>
    %501 = tpu.matmul %500, %337, %cst_139 {dimension_numbers = #tpu.dot_dimension_numbers<[1], [0], [0], [1], [0, 0, 1, 1], [], []>} : vector<8x32xbf16>, vector<32x96xbf16>, vector<8x96xf32> -> vector<8x96xf32>
    %502 = vector.extract_strided_slice %499 {offsets = [0, 0], sizes = [8, 32], strides = [1, 1]} : vector<8x96xf32> to vector<8x32xf32>
    %503 = vector.extract_strided_slice %501 {offsets = [0, 0], sizes = [8, 32], strides = [1, 1]} : vector<8x96xf32> to vector<8x32xf32>
    %504 = arith.addf %502, %503 : vector<8x32xf32>
    %505 = arith.negf %504 : vector<8x32xf32>
    %506 = math.exp %505 : vector<8x32xf32>
    %cst_140 = arith.constant 1.000000e+00 : f32
    %507 = vector.broadcast %cst_140 : f32 to vector<8x32xf32>
    %508 = arith.addf %507, %506 : vector<8x32xf32>
    %509 = arith.divf %507, %508 : vector<8x32xf32>
    %510 = vector.extract_strided_slice %499 {offsets = [0, 32], sizes = [8, 32], strides = [1, 1]} : vector<8x96xf32> to vector<8x32xf32>
    %511 = vector.extract_strided_slice %501 {offsets = [0, 32], sizes = [8, 32], strides = [1, 1]} : vector<8x96xf32> to vector<8x32xf32>
    %512 = arith.addf %510, %511 : vector<8x32xf32>
    %513 = arith.negf %512 : vector<8x32xf32>
    %514 = math.exp %513 : vector<8x32xf32>
    %cst_141 = arith.constant 1.000000e+00 : f32
    %515 = vector.broadcast %cst_141 : f32 to vector<8x32xf32>
    %516 = arith.addf %515, %514 : vector<8x32xf32>
    %517 = arith.divf %515, %516 : vector<8x32xf32>
    %518 = vector.extract_strided_slice %499 {offsets = [0, 64], sizes = [8, 32], strides = [1, 1]} : vector<8x96xf32> to vector<8x32xf32>
    %519 = vector.extract_strided_slice %501 {offsets = [0, 64], sizes = [8, 32], strides = [1, 1]} : vector<8x96xf32> to vector<8x32xf32>
    %520 = vector.broadcast %338 : vector<1x32xf32> to vector<8x32xf32>
    %521 = arith.addf %519, %520 : vector<8x32xf32>
    %522 = arith.mulf %509, %521 : vector<8x32xf32>
    %523 = arith.addf %518, %522 : vector<8x32xf32>
    %524 = math.tanh %523 : vector<8x32xf32>
    %cst_142 = arith.constant 1.000000e+00 : f32
    %525 = vector.broadcast %cst_142 : f32 to vector<8x32xf32>
    %526 = arith.subf %525, %517 : vector<8x32xf32>
    %527 = arith.mulf %526, %524 : vector<8x32xf32>
    %528 = arith.mulf %517, %490 : vector<8x32xf32>
    %529 = arith.addf %527, %528 : vector<8x32xf32>
    %530 = arith.truncf %529 : vector<8x32xf32> to vector<8x32xbf16>
    %531 = arith.index_cast %c4_i32_136 : i32 to index
    %c0_143 = arith.constant 0 : index
    %c0_144 = arith.constant 0 : index
    %532 = vector.load %arg18[%531, %c0_143, %c0_144] : memref<8x8x32xbf16, #tpu.memory_space<vmem>>, vector<1x8x32xbf16>
    %533 = vector.shape_cast %532 : vector<1x8x32xbf16> to vector<8x32xbf16>
    %534 = vector.shape_cast %530 : vector<8x32xbf16> to vector<1x8x32xbf16>
    tpu.vector_store %arg18[%531, %c0_143, %c0_144], %534 {strides = array<i32>} : memref<8x8x32xbf16, #tpu.memory_space<vmem>>, vector<1x8x32xbf16>,
    %c5_i32_145 = arith.constant 5 : i32
    %535 = arith.index_cast %c5_i32_145 : i32 to index
    %c0_146 = arith.constant 0 : index
    %c0_147 = arith.constant 0 : index
    %536 = vector.load %arg17[%535, %c0_146, %c0_147] : memref<8x8x96xbf16, #tpu.memory_space<vmem>>, vector<1x8x96xbf16>
    %537 = vector.shape_cast %536 : vector<1x8x96xbf16> to vector<8x96xbf16>
    %538 = arith.extf %537 : vector<8x96xbf16> to vector<8x96xf32>
    %539 = arith.truncf %529 : vector<8x32xf32> to vector<8x32xbf16>
    %cst_148 = arith.constant dense<0.000000e+00> : vector<8x96xf32>
    %540 = tpu.matmul %539, %337, %cst_148 {dimension_numbers = #tpu.dot_dimension_numbers<[1], [0], [0], [1], [0, 0, 1, 1], [], []>} : vector<8x32xbf16>, vector<32x96xbf16>, vector<8x96xf32> -> vector<8x96xf32>
    %541 = vector.extract_strided_slice %538 {offsets = [0, 0], sizes = [8, 32], strides = [1, 1]} : vector<8x96xf32> to vector<8x32xf32>
    %542 = vector.extract_strided_slice %540 {offsets = [0, 0], sizes = [8, 32], strides = [1, 1]} : vector<8x96xf32> to vector<8x32xf32>
    %543 = arith.addf %541, %542 : vector<8x32xf32>
    %544 = arith.negf %543 : vector<8x32xf32>
    %545 = math.exp %544 : vector<8x32xf32>
    %cst_149 = arith.constant 1.000000e+00 : f32
    %546 = vector.broadcast %cst_149 : f32 to vector<8x32xf32>
    %547 = arith.addf %546, %545 : vector<8x32xf32>
    %548 = arith.divf %546, %547 : vector<8x32xf32>
    %549 = vector.extract_strided_slice %538 {offsets = [0, 32], sizes = [8, 32], strides = [1, 1]} : vector<8x96xf32> to vector<8x32xf32>
    %550 = vector.extract_strided_slice %540 {offsets = [0, 32], sizes = [8, 32], strides = [1, 1]} : vector<8x96xf32> to vector<8x32xf32>
    %551 = arith.addf %549, %550 : vector<8x32xf32>
    %552 = arith.negf %551 : vector<8x32xf32>
    %553 = math.exp %552 : vector<8x32xf32>
    %cst_150 = arith.constant 1.000000e+00 : f32
    %554 = vector.broadcast %cst_150 : f32 to vector<8x32xf32>
    %555 = arith.addf %554, %553 : vector<8x32xf32>
    %556 = arith.divf %554, %555 : vector<8x32xf32>
    %557 = vector.extract_strided_slice %538 {offsets = [0, 64], sizes = [8, 32], strides = [1, 1]} : vector<8x96xf32> to vector<8x32xf32>
    %558 = vector.extract_strided_slice %540 {offsets = [0, 64], sizes = [8, 32], strides = [1, 1]} : vector<8x96xf32> to vector<8x32xf32>
    %559 = vector.broadcast %338 : vector<1x32xf32> to vector<8x32xf32>
    %560 = arith.addf %558, %559 : vector<8x32xf32>
    %561 = arith.mulf %548, %560 : vector<8x32xf32>
    %562 = arith.addf %557, %561 : vector<8x32xf32>
    %563 = math.tanh %562 : vector<8x32xf32>
    %cst_151 = arith.constant 1.000000e+00 : f32
    %564 = vector.broadcast %cst_151 : f32 to vector<8x32xf32>
    %565 = arith.subf %564, %556 : vector<8x32xf32>
    %566 = arith.mulf %565, %563 : vector<8x32xf32>
    %567 = arith.mulf %556, %529 : vector<8x32xf32>
    %568 = arith.addf %566, %567 : vector<8x32xf32>
    %569 = arith.truncf %568 : vector<8x32xf32> to vector<8x32xbf16>
    %570 = arith.index_cast %c5_i32_145 : i32 to index
    %c0_152 = arith.constant 0 : index
    %c0_153 = arith.constant 0 : index
    %571 = vector.load %arg18[%570, %c0_152, %c0_153] : memref<8x8x32xbf16, #tpu.memory_space<vmem>>, vector<1x8x32xbf16>
    %572 = vector.shape_cast %571 : vector<1x8x32xbf16> to vector<8x32xbf16>
    %573 = vector.shape_cast %569 : vector<8x32xbf16> to vector<1x8x32xbf16>
    tpu.vector_store %arg18[%570, %c0_152, %c0_153], %573 {strides = array<i32>} : memref<8x8x32xbf16, #tpu.memory_space<vmem>>, vector<1x8x32xbf16>,
    %c6_i32_154 = arith.constant 6 : i32
    %574 = arith.index_cast %c6_i32_154 : i32 to index
    %c0_155 = arith.constant 0 : index
    %c0_156 = arith.constant 0 : index
    %575 = vector.load %arg17[%574, %c0_155, %c0_156] : memref<8x8x96xbf16, #tpu.memory_space<vmem>>, vector<1x8x96xbf16>
    %576 = vector.shape_cast %575 : vector<1x8x96xbf16> to vector<8x96xbf16>
    %577 = arith.extf %576 : vector<8x96xbf16> to vector<8x96xf32>
    %578 = arith.truncf %568 : vector<8x32xf32> to vector<8x32xbf16>
    %cst_157 = arith.constant dense<0.000000e+00> : vector<8x96xf32>
    %579 = tpu.matmul %578, %337, %cst_157 {dimension_numbers = #tpu.dot_dimension_numbers<[1], [0], [0], [1], [0, 0, 1, 1], [], []>} : vector<8x32xbf16>, vector<32x96xbf16>, vector<8x96xf32> -> vector<8x96xf32>
    %580 = vector.extract_strided_slice %577 {offsets = [0, 0], sizes = [8, 32], strides = [1, 1]} : vector<8x96xf32> to vector<8x32xf32>
    %581 = vector.extract_strided_slice %579 {offsets = [0, 0], sizes = [8, 32], strides = [1, 1]} : vector<8x96xf32> to vector<8x32xf32>
    %582 = arith.addf %580, %581 : vector<8x32xf32>
    %583 = arith.negf %582 : vector<8x32xf32>
    %584 = math.exp %583 : vector<8x32xf32>
    %cst_158 = arith.constant 1.000000e+00 : f32
    %585 = vector.broadcast %cst_158 : f32 to vector<8x32xf32>
    %586 = arith.addf %585, %584 : vector<8x32xf32>
    %587 = arith.divf %585, %586 : vector<8x32xf32>
    %588 = vector.extract_strided_slice %577 {offsets = [0, 32], sizes = [8, 32], strides = [1, 1]} : vector<8x96xf32> to vector<8x32xf32>
    %589 = vector.extract_strided_slice %579 {offsets = [0, 32], sizes = [8, 32], strides = [1, 1]} : vector<8x96xf32> to vector<8x32xf32>
    %590 = arith.addf %588, %589 : vector<8x32xf32>
    %591 = arith.negf %590 : vector<8x32xf32>
    %592 = math.exp %591 : vector<8x32xf32>
    %cst_159 = arith.constant 1.000000e+00 : f32
    %593 = vector.broadcast %cst_159 : f32 to vector<8x32xf32>
    %594 = arith.addf %593, %592 : vector<8x32xf32>
    %595 = arith.divf %593, %594 : vector<8x32xf32>
    %596 = vector.extract_strided_slice %577 {offsets = [0, 64], sizes = [8, 32], strides = [1, 1]} : vector<8x96xf32> to vector<8x32xf32>
    %597 = vector.extract_strided_slice %579 {offsets = [0, 64], sizes = [8, 32], strides = [1, 1]} : vector<8x96xf32> to vector<8x32xf32>
    %598 = vector.broadcast %338 : vector<1x32xf32> to vector<8x32xf32>
    %599 = arith.addf %597, %598 : vector<8x32xf32>
    %600 = arith.mulf %587, %599 : vector<8x32xf32>
    %601 = arith.addf %596, %600 : vector<8x32xf32>
    %602 = math.tanh %601 : vector<8x32xf32>
    %cst_160 = arith.constant 1.000000e+00 : f32
    %603 = vector.broadcast %cst_160 : f32 to vector<8x32xf32>
    %604 = arith.subf %603, %595 : vector<8x32xf32>
    %605 = arith.mulf %604, %602 : vector<8x32xf32>
    %606 = arith.mulf %595, %568 : vector<8x32xf32>
    %607 = arith.addf %605, %606 : vector<8x32xf32>
    %608 = arith.truncf %607 : vector<8x32xf32> to vector<8x32xbf16>
    %609 = arith.index_cast %c6_i32_154 : i32 to index
    %c0_161 = arith.constant 0 : index
    %c0_162 = arith.constant 0 : index
    %610 = vector.load %arg18[%609, %c0_161, %c0_162] : memref<8x8x32xbf16, #tpu.memory_space<vmem>>, vector<1x8x32xbf16>
    %611 = vector.shape_cast %610 : vector<1x8x32xbf16> to vector<8x32xbf16>
    %612 = vector.shape_cast %608 : vector<8x32xbf16> to vector<1x8x32xbf16>
    tpu.vector_store %arg18[%609, %c0_161, %c0_162], %612 {strides = array<i32>} : memref<8x8x32xbf16, #tpu.memory_space<vmem>>, vector<1x8x32xbf16>,
    %c7_i32_163 = arith.constant 7 : i32
    %613 = arith.index_cast %c7_i32_163 : i32 to index
    %c0_164 = arith.constant 0 : index
    %c0_165 = arith.constant 0 : index
    %614 = vector.load %arg17[%613, %c0_164, %c0_165] : memref<8x8x96xbf16, #tpu.memory_space<vmem>>, vector<1x8x96xbf16>
    %615 = vector.shape_cast %614 : vector<1x8x96xbf16> to vector<8x96xbf16>
    %616 = arith.extf %615 : vector<8x96xbf16> to vector<8x96xf32>
    %617 = arith.truncf %607 : vector<8x32xf32> to vector<8x32xbf16>
    %cst_166 = arith.constant dense<0.000000e+00> : vector<8x96xf32>
    %618 = tpu.matmul %617, %337, %cst_166 {dimension_numbers = #tpu.dot_dimension_numbers<[1], [0], [0], [1], [0, 0, 1, 1], [], []>} : vector<8x32xbf16>, vector<32x96xbf16>, vector<8x96xf32> -> vector<8x96xf32>
    %619 = vector.extract_strided_slice %616 {offsets = [0, 0], sizes = [8, 32], strides = [1, 1]} : vector<8x96xf32> to vector<8x32xf32>
    %620 = vector.extract_strided_slice %618 {offsets = [0, 0], sizes = [8, 32], strides = [1, 1]} : vector<8x96xf32> to vector<8x32xf32>
    %621 = arith.addf %619, %620 : vector<8x32xf32>
    %622 = arith.negf %621 : vector<8x32xf32>
    %623 = math.exp %622 : vector<8x32xf32>
    %cst_167 = arith.constant 1.000000e+00 : f32
    %624 = vector.broadcast %cst_167 : f32 to vector<8x32xf32>
    %625 = arith.addf %624, %623 : vector<8x32xf32>
    %626 = arith.divf %624, %625 : vector<8x32xf32>
    %627 = vector.extract_strided_slice %616 {offsets = [0, 32], sizes = [8, 32], strides = [1, 1]} : vector<8x96xf32> to vector<8x32xf32>
    %628 = vector.extract_strided_slice %618 {offsets = [0, 32], sizes = [8, 32], strides = [1, 1]} : vector<8x96xf32> to vector<8x32xf32>
    %629 = arith.addf %627, %628 : vector<8x32xf32>
    %630 = arith.negf %629 : vector<8x32xf32>
    %631 = math.exp %630 : vector<8x32xf32>
    %cst_168 = arith.constant 1.000000e+00 : f32
    %632 = vector.broadcast %cst_168 : f32 to vector<8x32xf32>
    %633 = arith.addf %632, %631 : vector<8x32xf32>
    %634 = arith.divf %632, %633 : vector<8x32xf32>
    %635 = vector.extract_strided_slice %616 {offsets = [0, 64], sizes = [8, 32], strides = [1, 1]} : vector<8x96xf32> to vector<8x32xf32>
    %636 = vector.extract_strided_slice %618 {offsets = [0, 64], sizes = [8, 32], strides = [1, 1]} : vector<8x96xf32> to vector<8x32xf32>
    %637 = vector.broadcast %338 : vector<1x32xf32> to vector<8x32xf32>
    %638 = arith.addf %636, %637 : vector<8x32xf32>
    %639 = arith.mulf %626, %638 : vector<8x32xf32>
    %640 = arith.addf %635, %639 : vector<8x32xf32>
    %641 = math.tanh %640 : vector<8x32xf32>
    %cst_169 = arith.constant 1.000000e+00 : f32
    %642 = vector.broadcast %cst_169 : f32 to vector<8x32xf32>
    %643 = arith.subf %642, %634 : vector<8x32xf32>
    %644 = arith.mulf %643, %641 : vector<8x32xf32>
    %645 = arith.mulf %634, %607 : vector<8x32xf32>
    %646 = arith.addf %644, %645 : vector<8x32xf32>
    %647 = arith.truncf %646 : vector<8x32xf32> to vector<8x32xbf16>
    %648 = arith.index_cast %c7_i32_163 : i32 to index
    %c0_170 = arith.constant 0 : index
    %c0_171 = arith.constant 0 : index
    %649 = vector.load %arg18[%648, %c0_170, %c0_171] : memref<8x8x32xbf16, #tpu.memory_space<vmem>>, vector<1x8x32xbf16>
    %650 = vector.shape_cast %649 : vector<1x8x32xbf16> to vector<8x32xbf16>
    %651 = vector.shape_cast %647 : vector<8x32xbf16> to vector<1x8x32xbf16>
    tpu.vector_store %arg18[%648, %c0_170, %c0_171], %651 {strides = array<i32>} : memref<8x8x32xbf16, #tpu.memory_space<vmem>>, vector<1x8x32xbf16>,
    %c8_i32_172 = arith.constant 8 : i32
    %c0_173 = arith.constant 0 : index
    %c0_174 = arith.constant 0 : index
    %c0_175 = arith.constant 0 : index
    %652 = vector.load %arg18[%c0_173, %c0_174, %c0_175] : memref<8x8x32xbf16, #tpu.memory_space<vmem>>, vector<8x8x32xbf16>
    %653 = vector.shape_cast %652 : vector<8x8x32xbf16> to vector<64x32xbf16>
    %c0_176 = arith.constant 0 : index
    %c0_177 = arith.constant 0 : index
    %654 = vector.load %arg12[%c0_176, %c0_177] : memref<32x16xbf16, #tpu.memory_space<vmem>>, vector<32x16xbf16>
    %cst_178 = arith.constant dense<0.000000e+00> : vector<64x16xf32>
    %655 = tpu.matmul %653, %654, %cst_178 {dimension_numbers = #tpu.dot_dimension_numbers<[1], [0], [0], [1], [0, 0, 1, 1], [], []>} : vector<64x32xbf16>, vector<32x16xbf16>, vector<64x16xf32> -> vector<64x16xf32>
    %c0_179 = arith.constant 0 : index
    %c0_180 = arith.constant 0 : index
    %656 = vector.load %arg13[%c0_179, %c0_180] : memref<1x16xf32, #tpu.memory_space<vmem>>, vector<1x16xf32>
    %657 = vector.broadcast %656 : vector<1x16xf32> to vector<64x16xf32>
    %658 = arith.addf %655, %657 : vector<64x16xf32>
    %cst_181 = arith.constant 0.000000e+00 : f32
    %659 = vector.broadcast %cst_181 : f32 to vector<64x16xf32>
    %660 = arith.maximumf %658, %659 : vector<64x16xf32>
    %661 = vector.shape_cast %660 : vector<64x16xf32> to vector<8x8x16xf32>
    %c0_182 = arith.constant 0 : index
    %c0_183 = arith.constant 0 : index
    %c0_184 = arith.constant 0 : index
    %662 = vector.load %arg15[%c0_182, %c0_183, %c0_184] : memref<8x8x16xf32, #tpu.memory_space<vmem>>, vector<8x8x16xf32>
    tpu.vector_store %arg15[%c0_182, %c0_183, %c0_184], %661 {strides = array<i32>} : memref<8x8x16xf32, #tpu.memory_space<vmem>>, vector<8x8x16xf32>,
    return
  }
  func.func @transform_0(%arg0: i32) -> (i32, i32, i32) {
    %c0_i32 = arith.constant 0 : i32
    %c0_i32_0 = arith.constant 0 : i32
    %c0_i32_1 = arith.constant 0 : i32
    return %c0_i32, %arg0, %c0_i32_0 : i32, i32, i32
  }
  func.func @transform_1(%arg0: i32) -> (i32, i32) {
    %c0_i32 = arith.constant 0 : i32
    %c0_i32_0 = arith.constant 0 : i32
    %c0_i32_1 = arith.constant 0 : i32
    return %c0_i32, %c0_i32_0 : i32, i32
  }
  func.func @transform_2(%arg0: i32) -> (i32, i32) {
    %c0_i32 = arith.constant 0 : i32
    %c0_i32_0 = arith.constant 0 : i32
    %c0_i32_1 = arith.constant 0 : i32
    return %c0_i32, %c0_i32_0 : i32, i32
  }
  func.func @transform_3(%arg0: i32) -> (i32, i32) {
    %c0_i32 = arith.constant 0 : i32
    %c0_i32_0 = arith.constant 0 : i32
    %c0_i32_1 = arith.constant 0 : i32
    return %c0_i32, %c0_i32_0 : i32, i32
  }
  func.func @transform_4(%arg0: i32) -> (i32, i32) {
    %c0_i32 = arith.constant 0 : i32
    %c0_i32_0 = arith.constant 0 : i32
    %c0_i32_1 = arith.constant 0 : i32
    return %c0_i32, %c0_i32_0 : i32, i32
  }
  func.func @transform_5(%arg0: i32) -> (i32, i32) {
    %c0_i32 = arith.constant 0 : i32
    %c0_i32_0 = arith.constant 0 : i32
    %c0_i32_1 = arith.constant 0 : i32
    return %c0_i32, %c0_i32_0 : i32, i32
  }
  func.func @transform_6(%arg0: i32) -> (i32, i32) {
    %c0_i32 = arith.constant 0 : i32
    %c0_i32_0 = arith.constant 0 : i32
    %c0_i32_1 = arith.constant 0 : i32
    return %c0_i32, %c0_i32_0 : i32, i32
  }
  func.func @transform_7(%arg0: i32) -> (i32, i32) {
    %c0_i32 = arith.constant 0 : i32
    %c0_i32_0 = arith.constant 0 : i32
    %c0_i32_1 = arith.constant 0 : i32
    return %c0_i32, %c0_i32_0 : i32, i32
  }
  func.func @transform_8(%arg0: i32) -> (i32, i32) {
    %c0_i32 = arith.constant 0 : i32
    %c0_i32_0 = arith.constant 0 : i32
    %c0_i32_1 = arith.constant 0 : i32
    return %c0_i32, %c0_i32_0 : i32, i32
  }
  func.func @transform_9(%arg0: i32) -> (i32, i32) {
    %c0_i32 = arith.constant 0 : i32
    %c0_i32_0 = arith.constant 0 : i32
    %c0_i32_1 = arith.constant 0 : i32
    return %c0_i32, %c0_i32_0 : i32, i32
  }
  func.func @transform_10(%arg0: i32) -> (i32, i32) {
    %c0_i32 = arith.constant 0 : i32
    %c0_i32_0 = arith.constant 0 : i32
    %c0_i32_1 = arith.constant 0 : i32
    return %c0_i32, %c0_i32_0 : i32, i32
  }
  func.func @transform_11(%arg0: i32) -> (i32, i32) {
    %c0_i32 = arith.constant 0 : i32
    %c0_i32_0 = arith.constant 0 : i32
    %c0_i32_1 = arith.constant 0 : i32
    return %c0_i32, %c0_i32_0 : i32, i32
  }
  func.func @transform_12(%arg0: i32) -> (i32, i32) {
    %c0_i32 = arith.constant 0 : i32
    %c0_i32_0 = arith.constant 0 : i32
    %c0_i32_1 = arith.constant 0 : i32
    return %c0_i32, %c0_i32_0 : i32, i32
  }
  func.func @transform_13(%arg0: i32) -> (i32, i32, i32) {
    %c0_i32 = arith.constant 0 : i32
    %c0_i32_0 = arith.constant 0 : i32
    %c0_i32_1 = arith.constant 0 : i32
    return %c0_i32, %arg0, %c0_i32_0 : i32, i32, i32
  }
  func.func @transform_14(%arg0: i32) -> (i32, i32, i32) {
    %c0_i32 = arith.constant 0 : i32
    %c0_i32_0 = arith.constant 0 : i32
    %c0_i32_1 = arith.constant 0 : i32
    return %c0_i32, %arg0, %c0_i32_0 : i32, i32, i32
  }
}

</mosaic_0001>

<llo_original>
// kernel: tpu_custom_call.1
$region0: #{tpu_custom_call.1}
  #allocation0 [shape = 'u32[]', space=smem, size = 0x4, offset = 0x4, fixed_abs, tag = 'smem constant byte address 0x4 - core index']
  #allocation1 [shape = 'u32[144,128]{1,0:T(1,128)}', space=vmem, size = 0x12000, scoped, tag = 'internal scratch']
  #allocation2 [shape = 'bf16[8,8,96]{2,1,0:T(8,128)(2,1)}', space=vmem, size = 0x4000, scoped, tag = 'scratch operand']
  #allocation3 [shape = 'bf16[8,8,96]{2,1,0:T(8,128)(2,1)}', space=vmem, size = 0x4000, scoped, tag = 'scratch operand']
  #allocation4 [shape = 'bf16[8,8,32]{2,1,0:T(8,128)(2,1)}', space=vmem, size = 0x4000, scoped, tag = 'scratch operand']
  %s0 = inlined_call_operand.hbm [shape: f32[8,8,16], index: 0, kind: input, shape index: {}]
  %s1 = inlined_call_operand.hbm [shape: bf16[16,32], index: 1, kind: input, shape index: {}]
  %s2 = inlined_call_operand.vmem [shape: f32[1,32], index: 2, kind: input, shape index: {}]
  %s3 = inlined_call_operand.vmem [shape: bf16[32,96], index: 3, kind: input, shape index: {}]
  %s4 = inlined_call_operand.vmem [shape: f32[1,96], index: 4, kind: input, shape index: {}]
  %s5 = inlined_call_operand.vmem [shape: bf16[32,96], index: 5, kind: input, shape index: {}]
  %s6 = inlined_call_operand.hbm [shape: f32[1,32], index: 6, kind: input, shape index: {}]
  %s7 = inlined_call_operand.vmem [shape: bf16[32,96], index: 7, kind: input, shape index: {}]
  %s8 = inlined_call_operand.hbm [shape: f32[1,96], index: 8, kind: input, shape index: {}]
  %s9 = inlined_call_operand.hbm [shape: bf16[32,96], index: 9, kind: input, shape index: {}]
  %s10 = inlined_call_operand.vmem [shape: f32[1,32], index: 10, kind: input, shape index: {}]
  %s11 = inlined_call_operand.vmem [shape: bf16[32,16], index: 11, kind: input, shape index: {}]
  %s12 = inlined_call_operand.vmem [shape: f32[1,16], index: 12, kind: input, shape index: {}]
  %s13 = inlined_call_operand.hbm [shape: f32[8,8,32], index: 13, kind: output, shape index: {0}]
  %s14 = inlined_call_operand.hbm [shape: f32[8,8,16], index: 14, kind: output, shape index: {1}]
  %15 = xla_tuple %s13, %s14
  %s16 = sld [smem:[#allocation0]]
  $region90: #{tpu_custom_call.1} parent=0
    _
  %s18 = ssub.s32 1, %s16
  %s19 = scalar_select 0, %s18, %s16
  $region1: #{tpu_custom_call.1} parent=0
    #allocation5 [shape = 'u8[32768]{0}', space=vmem, size = 0x8000, scoped, tag = 'input window, operand 0, single buffered']
    #allocation6 [shape = 's32[1]{0}', space=sflag, size = 0x4, scoped, tag = 'scoped memory for tpu_custom_call.1']
    #allocation7 [shape = 's32[1]{0}', space=sflag, size = 0x4, scoped, tag = 'scoped memory for tpu_custom_call.1']
    #allocation8 [shape = 'u8[4096]{0}', space=vmem, size = 0x1000, scoped, tag = 'input window, operand 1, single buffered']
    #allocation9 [shape = 's32[1]{0}', space=sflag, size = 0x4, scoped, tag = 'scoped memory for tpu_custom_call.1']
    #allocation10 [shape = 'u8[512]{0}', space=vmem, size = 0x400, scoped, tag = 'input window, operand 6, single buffered']
    #allocation11 [shape = 'u8[512]{0}', space=vmem, size = 0x400, scoped, tag = 'input window, operand 8, single buffered']
    #allocation12 [shape = 's32[1]{0}', space=sflag, size = 0x4, scoped, tag = 'scoped memory for tpu_custom_call.1']
    #allocation13 [shape = 'u8[8192]{0}', space=vmem, size = 0x2000, scoped, tag = 'input window, operand 9, single buffered']
    #allocation14 [shape = 'u8[32768]{0}', space=vmem, size = 0x8000, scoped, tag = 'output window, operand 0, single buffered']
    #allocation15 [shape = 'u8[32768]{0}', space=vmem, size = 0x8000, scoped, tag = 'output window, operand 1, single buffered']
    #allocation16 [shape = 's32[1]{0}', space=sflag, size = 0x4, scoped, tag = 'scoped memory for tpu_custom_call.1']
    %20 = vsyncpa [#allocation6], 0
    %21 = vsyncpa [#allocation9], 0
    %22 = vsyncpa [#allocation12], 0
    %23 = vsyncpa [#allocation7], 0
    %24 = vsyncpa [#allocation16], 0
    // Predicated region
    $region2: #{tpu_custom_call.1} parent=1 // pred_check
      _
    $region3: #{tpu_custom_call.1} parent=1 // pred_check_branch
      %26 = sbr.rel (0) target = $region5
    $region4: #{tpu_custom_call.1} parent=1 // pred_region
      %s28 = ssub.s32 1024, 1024
      %29 = vsyncadd [#allocation6], %s28
      %s30 = sshll.u32 [#allocation5], 4
      %s31 = int_to_ptr.vmem [resolvable:$true] %s30
      %36 = dma.hbm_to_vmem [thread:$0]  %s0, 1024, %s31, [#allocation6], 128, 128, 8
    $region5: #{tpu_custom_call.1} parent=1 // pred_fallthru
      _
    // Predicated region
    $region6: #{tpu_custom_call.1} parent=1 // pred_check
      _
    $region7: #{tpu_custom_call.1} parent=1 // pred_check_branch
      %38 = sbr.rel (0) target = $region9
    $region8: #{tpu_custom_call.1} parent=1 // pred_region
      %s40 = ssub.s32 128, 128
      %41 = vsyncadd [#allocation9], %s40
      %s42 = sshll.u32 [#allocation8], 4
      %s43 = int_to_ptr.vmem [resolvable:$true] %s42
      %48 = dma.hbm_to_vmem [thread:$0]  %s1, 128, %s43, [#allocation9], 64, 64, 4
    $region9: #{tpu_custom_call.1} parent=1 // pred_fallthru
      _
    // Predicated region
    $region10: #{tpu_custom_call.1} parent=1 // pred_check
      _
    $region11: #{tpu_custom_call.1} parent=1 // pred_check_branch
      %50 = sbr.rel (0) target = $region13
    $region12: #{tpu_custom_call.1} parent=1 // pred_region
      _
    $region13: #{tpu_custom_call.1} parent=1 // pred_fallthru
      _
    // Predicated region
    $region14: #{tpu_custom_call.1} parent=1 // pred_check
      _
    $region15: #{tpu_custom_call.1} parent=1 // pred_check_branch
      %52 = sbr.rel (0) target = $region17
    $region16: #{tpu_custom_call.1} parent=1 // pred_region
      _
    $region17: #{tpu_custom_call.1} parent=1 // pred_fallthru
      _
    // Predicated region
    $region18: #{tpu_custom_call.1} parent=1 // pred_check
      _
    $region19: #{tpu_custom_call.1} parent=1 // pred_check_branch
      %54 = sbr.rel (0) target = $region21
    $region20: #{tpu_custom_call.1} parent=1 // pred_region
      _
    $region21: #{tpu_custom_call.1} parent=1 // pred_fallthru
      _
    // Predicated region
    $region22: #{tpu_custom_call.1} parent=1 // pred_check
      _
    $region23: #{tpu_custom_call.1} parent=1 // pred_check_branch
      %56 = sbr.rel (0) target = $region25
    $region24: #{tpu_custom_call.1} parent=1 // pred_region
      _
    $region25: #{tpu_custom_call.1} parent=1 // pred_fallthru
      _
    // Predicated region
    $region26: #{tpu_custom_call.1} parent=1 // pred_check
      _
    $region27: #{tpu_custom_call.1} parent=1 // pred_check_branch
      %58 = sbr.rel (0) target = $region29
    $region28: #{tpu_custom_call.1} parent=1 // pred_region
      %s60 = ssub.s32 16, 16
      %61 = vsyncadd [#allocation9], %s60
      %s63 = sshll.u32 [#allocation10], 4
      %s64 = int_to_ptr.vmem [resolvable:$true] %s63
      %66 = dma.hbm_to_vmem [thread:$0]  %s6, 16, %s64, [#allocation9]
    $region29: #{tpu_custom_call.1} parent=1 // pred_fallthru
      _
    // Predicated region
    $region30: #{tpu_custom_call.1} parent=1 // pred_check
      _
    $region31: #{tpu_custom_call.1} parent=1 // pred_check_branch
      %68 = sbr.rel (0) target = $region33
    $region32: #{tpu_custom_call.1} parent=1 // pred_region
      _
    $region33: #{tpu_custom_call.1} parent=1 // pred_fallthru
      _
    // Predicated region
    $region34: #{tpu_custom_call.1} parent=1 // pred_check
      _
    $region35: #{tpu_custom_call.1} parent=1 // pred_check_branch
      %70 = sbr.rel (0) target = $region37
    $region36: #{tpu_custom_call.1} parent=1 // pred_region
      %s72 = ssub.s32 16, 16
      %73 = vsyncadd [#allocation12], %s72
      %s75 = sshll.u32 [#allocation11], 4
      %s76 = int_to_ptr.vmem [resolvable:$true] %s75
      %78 = dma.hbm_to_vmem [thread:$0]  %s8, 16, %s76, [#allocation12]
    $region37: #{tpu_custom_call.1} parent=1 // pred_fallthru
      _
    // Predicated region
    $region38: #{tpu_custom_call.1} parent=1 // pred_check
      _
    $region39: #{tpu_custom_call.1} parent=1 // pred_check_branch
      %80 = sbr.rel (0) target = $region41
    $region40: #{tpu_custom_call.1} parent=1 // pred_region
      %s82 = ssub.s32 256, 256
      %83 = vsyncadd [#allocation12], %s82
      %s84 = sshll.u32 [#allocation13], 4
      %s85 = int_to_ptr.vmem [resolvable:$true] %s84
      %90 = dma.hbm_to_vmem [thread:$0]  %s9, 256, %s85, [#allocation12], 64, 64, 4
    $region41: #{tpu_custom_call.1} parent=1 // pred_fallthru
      _
    // Predicated region
    $region42: #{tpu_custom_call.1} parent=1 // pred_check
      _
    $region43: #{tpu_custom_call.1} parent=1 // pred_check_branch
      %92 = sbr.rel (0) target = $region45
    $region44: #{tpu_custom_call.1} parent=1 // pred_region
      _
    $region45: #{tpu_custom_call.1} parent=1 // pred_fallthru
      _
    // Predicated region
    $region46: #{tpu_custom_call.1} parent=1 // pred_check
      _
    $region47: #{tpu_custom_call.1} parent=1 // pred_check_branch
      %94 = sbr.rel (0) target = $region49
    $region48: #{tpu_custom_call.1} parent=1 // pred_region
      _
    $region49: #{tpu_custom_call.1} parent=1 // pred_fallthru
      _
    // Predicated region
    $region50: #{tpu_custom_call.1} parent=1 // pred_check
      _
    $region51: #{tpu_custom_call.1} parent=1 // pred_check_branch
      %96 = sbr.rel (0) target = $region53
    $region52: #{tpu_custom_call.1} parent=1 // pred_region
      _
    $region53: #{tpu_custom_call.1} parent=1 // pred_fallthru
      _
    // Predicated region
    $region54: #{tpu_custom_call.1} parent=1 // pred_check
      _
    $region55: #{tpu_custom_call.1} parent=1 // pred_check_branch
      %98 = sbr.rel (0) target = $region57
    $region56: #{tpu_custom_call.1} parent=1 // pred_region
      %99 = dma.done [#allocation6], 1024
    $region57: #{tpu_custom_call.1} parent=1 // pred_fallthru
      _
    // Predicated region
    $region58: #{tpu_custom_call.1} parent=1 // pred_check
      _
    $region59: #{tpu_custom_call.1} parent=1 // pred_check_branch
      %101 = sbr.rel (0) target = $region61
    $region60: #{tpu_custom_call.1} parent=1 // pred_region
      %102 = dma.done [#allocation9], 128
    $region61: #{tpu_custom_call.1} parent=1 // pred_fallthru
      _
    // Predicated region
    $region62: #{tpu_custom_call.1} parent=1 // pred_check
      _
    $region63: #{tpu_custom_call.1} parent=1 // pred_check_branch
      %104 = sbr.rel (0) target = $region65
    $region64: #{tpu_custom_call.1} parent=1 // pred_region
      %105 = dma.done [#allocation9], 16
    $region65: #{tpu_custom_call.1} parent=1 // pred_fallthru
      _
    // Predicated region
    $region66: #{tpu_custom_call.1} parent=1 // pred_check
      _
    $region67: #{tpu_custom_call.1} parent=1 // pred_check_branch
      %107 = sbr.rel (0) target = $region69
    $region68: #{tpu_custom_call.1} parent=1 // pred_region
      %108 = dma.done [#allocation12], 16
    $region69: #{tpu_custom_call.1} parent=1 // pred_fallthru
      _
    // Predicated region
    $region70: #{tpu_custom_call.1} parent=1 // pred_check
      _
    $region71: #{tpu_custom_call.1} parent=1 // pred_check_branch
      %110 = sbr.rel (0) target = $region73
    $region72: #{tpu_custom_call.1} parent=1 // pred_region
      %111 = dma.done [#allocation12], 256
    $region73: #{tpu_custom_call.1} parent=1 // pred_fallthru
      _
    %v113 = vld [vmem:[#allocation5] sm:$0xff]
    %v114 = vld [vmem:[#allocation5 + $0x8] sm:$0xff]
    %v115 = vld [vmem:[#allocation5 + $0x10] sm:$0xff]
    %v116 = vld [vmem:[#allocation5 + $0x18] sm:$0xff]
    %v117 = vld [vmem:[#allocation5 + $0x20] sm:$0xff]
    %v118 = vld [vmem:[#allocation5 + $0x28] sm:$0xff]
    %v119 = vld [vmem:[#allocation5 + $0x30] sm:$0xff]
    %v120 = vld [vmem:[#allocation5 + $0x38] sm:$0xff]
    %v121 = vpack.c.bf16 %v114, %v113
    %v122 = vpack.c.bf16 %v116, %v115
    %v123 = vpack.c.bf16 %v118, %v117
    %v124 = vpack.c.bf16 %v120, %v119
    %v125 = vld [vmem:[#allocation8] sm:$0xf]
    %v126 = vld [vmem:[#allocation8 + $0x4] sm:$0xf]
    %v127 = vld [vmem:[%s2] sm:$0x1]
    %v129 = vlaneseq
    %v130 = vshrl.u32 %v129, 7
    %v131 = vsub.s32 0, %v130
    %v132 = vrot.slane %v127, %v131
    %v136 = vunpack.c.l.b16 %v125
    %v137 = vunpack.c.l.b16 %v126
    %v138 = vpack.c.b16 %v137, %v136
    %vm140 = vcmask 130048
    %v142 = vsel %vm140, %v121, 0
    %v145 = vsel %vm140, %v122, 0
    %v148 = vsel %vm140, %v123, 0
    %v151 = vsel %vm140, %v124, 0
    %153 = vmatprep.subr.bf16.mxu0 0
    %154 = vmatpush1.bf16.msra.mxu0 %v138
    %155 = vmatprep.subr.bf16.mxu0 0
    %156 = vmatpush1.bf16.msra.mxu0 0
    %157 = vmatprep.subr.bf16.mxu0 0
    %158 = vmatpush1.bf16.msra.mxu0 0
    %159 = vmatprep.subr.bf16.mxu0 0
    %160 = vmatpush1.bf16.msra.mxu0 0
    %161 = vmatprep.subr.bf16.mxu0 0
    %162 = vmatpush1.bf16.msra.mxu0 0
    %163 = vmatprep.subr.bf16.mxu0 0
    %164 = vmatpush1.bf16.msra.mxu0 0
    %165 = vmatprep.subr.bf16.mxu0 0
    %166 = vmatpush1.bf16.msra.mxu0 0
    %167 = vmatprep.subr.bf16.mxu0 0
    %168 = vmatpush1.bf16.msra.mxu0 0
    %169 = vmatprep.subr.bf16.mxu0 0
    %170 = vmatpush1.bf16.msra.mxu0 0
    %171 = vmatprep.subr.bf16.mxu0 0
    %172 = vmatpush1.bf16.msra.mxu0 0
    %173 = vmatprep.subr.bf16.mxu0 0
    %174 = vmatpush1.bf16.msra.mxu0 0
    %175 = vmatprep.subr.bf16.mxu0 0
    %176 = vmatpush1.bf16.msra.mxu0 0
    %177 = vmatprep.subr.bf16.mxu0 0
    %178 = vmatpush1.bf16.msra.mxu0 0
    %179 = vmatprep.subr.bf16.mxu0 0
    %180 = vmatpush1.bf16.msra.mxu0 0
    %181 = vmatprep.subr.bf16.mxu0 0
    %182 = vmatpush1.bf16.msra.mxu0 0
    %183 = vmatprep.subr.bf16.mxu0 0
    %184 = vmatpush1.bf16.msra.mxu0 0
    %185 = vmatprep.mubr.bf16.mxu0 0
    %186 = vmatmul.mubr.bf16.gmra.mrb[0].mxu0 %v142
    %v187 = vpop.f32.mrb[0].mxu0
    %v188 = vadd.f32 %v132, %v187
    %v189 = vpop.f32.mrb[0].mxu0
    %v190 = vpop.f32.mrb[0].mxu0
    %v191 = vadd.f32 %v132, %v190
    %v192 = vpop.f32.mrb[0].mxu0
    %193 = vmatprep.mubr.bf16.mxu0 0
    %194 = vmatmul.mubr.bf16.gmra.mrb[0].mxu0 %v145
    %v195 = vpop.f32.mrb[0].mxu0
    %v196 = vadd.f32 %v132, %v195
    %v197 = vpop.f32.mrb[0].mxu0
    %v198 = vpop.f32.mrb[0].mxu0
    %v199 = vadd.f32 %v132, %v198
    %v200 = vpop.f32.mrb[0].mxu0
    %201 = vmatprep.mubr.bf16.mxu0 0
    %202 = vmatmul.mubr.bf16.gmra.mrb[0].mxu0 %v148
    %v203 = vpop.f32.mrb[0].mxu0
    %v204 = vadd.f32 %v132, %v203
    %v205 = vpop.f32.mrb[0].mxu0
    %v206 = vpop.f32.mrb[0].mxu0
    %v207 = vadd.f32 %v132, %v206
    %v208 = vpop.f32.mrb[0].mxu0
    %209 = vmatprep.mubr.bf16.mxu0 0
    %210 = vmatmul.mubr.bf16.gmra.mrb[0].mxu0 %v151
    %v211 = vpop.f32.mrb[0].mxu0
    %v212 = vadd.f32 %v132, %v211
    %v213 = vpop.f32.mrb[0].mxu0
    %v214 = vpop.f32.mrb[0].mxu0
    %v215 = vadd.f32 %v132, %v214
    %v216 = vpop.f32.mrb[0].mxu0
    %217 = vdwg.mxu0
    %v218 = vmax.f32 %v188, 0.0
    %v219 = vmax.f32 %v191, 0.0
    %v220 = vmax.f32 %v196, 0.0
    %v221 = vmax.f32 %v199, 0.0
    %v222 = vmax.f32 %v204, 0.0
    %v223 = vmax.f32 %v207, 0.0
    %v224 = vmax.f32 %v212, 0.0
    %v225 = vmax.f32 %v215, 0.0
    %v226 = vpack.c.bf16 %v219, %v218
    %v227 = vpack.c.bf16 %v221, %v220
    %v228 = vpack.c.bf16 %v223, %v222
    %v229 = vpack.c.bf16 %v225, %v224
    %v230 = vld [vmem:[%s3] sm:$0xf]
    %v231 = vld [vmem:[%s3 + $0x4] sm:$0xf]
    %v232 = vld [vmem:[%s3 + $0x8] sm:$0xf]
    %v233 = vld [vmem:[%s3 + $0xc] sm:$0xf]
    %v234 = vld [vmem:[%s4] sm:$0x1]
    %v236 = vlaneseq
    %v237 = vshrl.u32 %v236, 7
    %v238 = vsub.s32 0, %v237
    %v239 = vrot.slane %v234, %v238
    %v245 = vunpack.c.l.b16 %v230
    %v246 = vunpack.c.l.b16 %v231
    %v247 = vunpack.c.l.b16 %v232
    %v248 = vunpack.c.l.b16 %v233
    %v249 = vpack.c.b16 %v246, %v245
    %v250 = vpack.c.b16 %v248, %v247
    %vm253 = vcmask 261120
    %v255 = vsel %vm253, %v226, 0
    %v258 = vsel %vm253, %v227, 0
    %v261 = vsel %vm253, %v228, 0
    %v264 = vsel %vm253, %v229, 0
    %266 = vmatprep.subr.bf16.mxu0 0
    %267 = vmatpush1.bf16.msra.mxu0 %v249
    %268 = vmatprep.subr.bf16.mxu0 0
    %269 = vmatpush1.bf16.msra.mxu0 %v250
    %270 = vmatprep.subr.bf16.mxu0 0
    %271 = vmatpush1.bf16.msra.mxu0 0
    %272 = vmatprep.subr.bf16.mxu0 0
    %273 = vmatpush1.bf16.msra.mxu0 0
    %274 = vmatprep.subr.bf16.mxu0 0
    %275 = vmatpush1.bf16.msra.mxu0 0
    %276 = vmatprep.subr.bf16.mxu0 0
    %277 = vmatpush1.bf16.msra.mxu0 0
    %278 = vmatprep.subr.bf16.mxu0 0
    %279 = vmatpush1.bf16.msra.mxu0 0
    %280 = vmatprep.subr.bf16.mxu0 0
    %281 = vmatpush1.bf16.msra.mxu0 0
    %282 = vmatprep.subr.bf16.mxu0 0
    %283 = vmatpush1.bf16.msra.mxu0 0
    %284 = vmatprep.subr.bf16.mxu0 0
    %285 = vmatpush1.bf16.msra.mxu0 0
    %286 = vmatprep.subr.bf16.mxu0 0
    %287 = vmatpush1.bf16.msra.mxu0 0
    %288 = vmatprep.subr.bf16.mxu0 0
    %289 = vmatpush1.bf16.msra.mxu0 0
    %290 = vmatprep.subr.bf16.mxu0 0
    %291 = vmatpush1.bf16.msra.mxu0 0
    %292 = vmatprep.subr.bf16.mxu0 0
    %293 = vmatpush1.bf16.msra.mxu0 0
    %294 = vmatprep.subr.bf16.mxu0 0
    %295 = vmatpush1.bf16.msra.mxu0 0
    %296 = vmatprep.subr.bf16.mxu0 0
    %297 = vmatpush1.bf16.msra.mxu0 0
    %298 = vmatprep.mubr.bf16.mxu0 0
    %299 = vmatmul.mubr.bf16.gmra.mrb[0].mxu0 %v255
    %v300 = vpop.f32.mrb[0].mxu0
    %v301 = vadd.f32 %v239, %v300
    %v302 = vpop.f32.mrb[0].mxu0
    %v303 = vpop.f32.mrb[0].mxu0
    %v304 = vadd.f32 %v239, %v303
    %v305 = vpop.f32.mrb[0].mxu0
    %306 = vmatprep.mubr.bf16.mxu0 0
    %307 = vmatmul.mubr.bf16.gmra.mrb[0].mxu0 %v258
    %v308 = vpop.f32.mrb[0].mxu0
    %v309 = vadd.f32 %v239, %v308
    %v310 = vpop.f32.mrb[0].mxu0
    %v311 = vpop.f32.mrb[0].mxu0
    %v312 = vadd.f32 %v239, %v311
    %v313 = vpop.f32.mrb[0].mxu0
    %314 = vmatprep.mubr.bf16.mxu0 0
    %315 = vmatmul.mubr.bf16.gmra.mrb[0].mxu0 %v261
    %v316 = vpop.f32.mrb[0].mxu0
    %v317 = vadd.f32 %v239, %v316
    %v318 = vpop.f32.mrb[0].mxu0
    %v319 = vpop.f32.mrb[0].mxu0
    %v320 = vadd.f32 %v239, %v319
    %v321 = vpop.f32.mrb[0].mxu0
    %322 = vmatprep.mubr.bf16.mxu0 0
    %323 = vmatmul.mubr.bf16.gmra.mrb[0].mxu0 %v264
    %v324 = vpop.f32.mrb[0].mxu0
    %v325 = vadd.f32 %v239, %v324
    %v326 = vpop.f32.mrb[0].mxu0
    %v327 = vpop.f32.mrb[0].mxu0
    %v328 = vadd.f32 %v239, %v327
    %v329 = vpop.f32.mrb[0].mxu0
    %330 = vdwg.mxu0
    %v331 = vpack.c.bf16 %v304, %v301
    %v332 = vpack.c.bf16 %v312, %v309
    %v333 = vpack.c.bf16 %v320, %v317
    %v334 = vpack.c.bf16 %v328, %v325
    %v339 = vunpack.c.l.b16 %v331
    %v340 = vunpack.c.h.b16 %v331
    %v341 = vunpack.c.l.b16 %v332
    %v342 = vunpack.c.h.b16 %v332
    %v343 = vunpack.c.l.b16 %v333
    %v344 = vunpack.c.h.b16 %v333
    %v345 = vunpack.c.l.b16 %v334
    %v346 = vunpack.c.h.b16 %v334
    %v347 = vpack.c.b16 %v339, %v339
    %v348 = vpack.c.b16 %v340, %v340
    %v349 = vpack.c.b16 %v341, %v341
    %v350 = vpack.c.b16 %v342, %v342
    %v351 = vpack.c.b16 %v343, %v343
    %v352 = vpack.c.b16 %v344, %v344
    %v353 = vpack.c.b16 %v345, %v345
    %v354 = vpack.c.b16 %v346, %v346
    %vm363 = vcmask 781312
    %364 = vst.msk [vmem:[#allocation2] sm:$0xf] %vm363, %v347
    %365 = vst.msk [vmem:[#allocation2 + $0x4] sm:$0xf] %vm363, %v348
    %366 = vst.msk [vmem:[#allocation2 + $0x8] sm:$0xf] %vm363, %v349
    %367 = vst.msk [vmem:[#allocation2 + $0xc] sm:$0xf] %vm363, %v350
    %368 = vst.msk [vmem:[#allocation2 + $0x10] sm:$0xf] %vm363, %v351
    %369 = vst.msk [vmem:[#allocation2 + $0x14] sm:$0xf] %vm363, %v352
    %370 = vst.msk [vmem:[#allocation2 + $0x18] sm:$0xf] %vm363, %v353
    %371 = vst.msk [vmem:[#allocation2 + $0x1c] sm:$0xf] %vm363, %v354
    %v372 = vld [vmem:[%s5] sm:$0xf]
    %v373 = vld [vmem:[%s5 + $0x4] sm:$0xf]
    %v374 = vld [vmem:[%s5 + $0x8] sm:$0xf]
    %v375 = vld [vmem:[%s5 + $0xc] sm:$0xf]
    %v376 = vld [vmem:[#allocation10] sm:$0x1]
    %v377 = vld [vmem:[#allocation2] sm:$0xf]
    %v378 = vunpack.c.l.bf16 %v377
    %v383 = vunpack.c.l.b16 %v372
    %v384 = vunpack.c.l.b16 %v373
    %v385 = vunpack.c.l.b16 %v374
    %v386 = vunpack.c.l.b16 %v375
    %v387 = vpack.c.b16 %v384, %v383
    %v388 = vpack.c.b16 %v386, %v385
    %v392 = vsel %vm253, 0, 0
    %394 = vmatprep.subr.bf16.mxu0 0
    %395 = vmatpush1.bf16.msra.mxu0 %v387
    %396 = vmatprep.subr.bf16.mxu0 0
    %397 = vmatpush1.bf16.msra.mxu0 %v388
    %398 = vmatprep.subr.bf16.mxu0 0
    %399 = vmatpush1.bf16.msra.mxu0 0
    %400 = vmatprep.subr.bf16.mxu0 0
    %401 = vmatpush1.bf16.msra.mxu0 0
    %402 = vmatprep.subr.bf16.mxu0 0
    %403 = vmatpush1.bf16.msra.mxu0 0
    %404 = vmatprep.subr.bf16.mxu0 0
    %405 = vmatpush1.bf16.msra.mxu0 0
    %406 = vmatprep.subr.bf16.mxu0 0
    %407 = vmatpush1.bf16.msra.mxu0 0
    %408 = vmatprep.subr.bf16.mxu0 0
    %409 = vmatpush1.bf16.msra.mxu0 0
    %410 = vmatprep.subr.bf16.mxu0 0
    %411 = vmatpush1.bf16.msra.mxu0 0
    %412 = vmatprep.subr.bf16.mxu0 0
    %413 = vmatpush1.bf16.msra.mxu0 0
    %414 = vmatprep.subr.bf16.mxu0 0
    %415 = vmatpush1.bf16.msra.mxu0 0
    %416 = vmatprep.subr.bf16.mxu0 0
    %417 = vmatpush1.bf16.msra.mxu0 0
    %418 = vmatprep.subr.bf16.mxu0 0
    %419 = vmatpush1.bf16.msra.mxu0 0
    %420 = vmatprep.subr.bf16.mxu0 0
    %421 = vmatpush1.bf16.msra.mxu0 0
    %422 = vmatprep.subr.bf16.mxu0 0
    %423 = vmatpush1.bf16.msra.mxu0 0
    %424 = vmatprep.subr.bf16.mxu0 0
    %425 = vmatpush1.bf16.msra.mxu0 0
    %426 = vmatprep.mubr.bf16.mxu0 0
    %427 = vmatmul.mubr.bf16.gmra.mrb[0].mxu0 %v392
    %v428 = vpop.f32.mrb[0].mxu0
    %v429 = vadd.f32 0.0, %v428
    %v430 = vpop.f32.mrb[0].mxu0
    %v431 = vpop.f32.mrb[0].mxu0
    %v432 = vpop.f32.mrb[0].mxu0
    %433 = vdwg.mxu0
    %v434 = vadd.f32 %v378, %v429
    %v435 = vxor.u32 %v434, 2147483648
    %v436 = vmul.f32 %v435, 1.442695
    %v437 = vpow.pop %v436
    %v438 = vadd.f32 %v437, 1.0
    %v439 = vrcp.pop %v438
    %v440 = vmul.f32 1.0, %v439
    %v442 = vlaneseq
    %v443 = vshrl.u32 %v442, 7
    %v444 = vsub.s32 0, %v443
    %v445 = vrot.slane %v376, %v444
    %446 = vrot.lane.b32.xlu0 %v445, 64
    %v447 = vpop.permute.xlu0 %446
    %v449 = vadd.f32 %v429, %v447
    %451 = vrot.lane.b32.xlu0 %v449, 64
    %v452 = vpop.permute.xlu0 %451
    %v454 = vmul.f32 %v440, %v452
    %456 = vrot.lane.b32.xlu0 %v454, 64
    %v457 = vpop.permute.xlu0 %456
    %v459 = vadd.f32 %v378, %v457
    %v460 = vtanh.pop %v459
    %v461 = vsub.f32 1.0, %v440
    %463 = vrot.lane.b32.xlu0 %v460, 96
    %v464 = vpop.permute.xlu0 %463
    %v466 = vmul.f32 %v461, %v464
    %v467 = vmul.f32 %v440, 0.0
    %v468 = vadd.f32 %v466, %v467
    %470 = vrot.lane.b32.xlu0 %v468, 96
    %v471 = vpop.permute.xlu0 %470
    %473 = vst.msk [vmem:[#allocation14] sm:$0xff] %vm253, %v471
    %s474 = scalar_lea.vmem [#allocation2], 4
    %v475 = vld [vmem:[%s474] sm:$0xf]
    %v476 = vunpack.c.l.bf16 %v475
    %v477 = vpack.c.bf16 %v468, %v468
    %479 = vrot.lane.b32.xlu0 %v477, 96
    %v480 = vpop.permute.xlu0 %479
    %v482 = vsel %vm253, %v480, 0
    %484 = vmatprep.subr.bf16.mxu0 0
    %485 = vmatpush1.bf16.msra.mxu0 %v387
    %486 = vmatprep.subr.bf16.mxu0 0
    %487 = vmatpush1.bf16.msra.mxu0 %v388
    %488 = vmatprep.subr.bf16.mxu0 0
    %489 = vmatpush1.bf16.msra.mxu0 0
    %490 = vmatprep.subr.bf16.mxu0 0
    %491 = vmatpush1.bf16.msra.mxu0 0
    %492 = vmatprep.subr.bf16.mxu0 0
    %493 = vmatpush1.bf16.msra.mxu0 0
    %494 = vmatprep.subr.bf16.mxu0 0
    %495 = vmatpush1.bf16.msra.mxu0 0
    %496 = vmatprep.subr.bf16.mxu0 0
    %497 = vmatpush1.bf16.msra.mxu0 0
    %498 = vmatprep.subr.bf16.mxu0 0
    %499 = vmatpush1.bf16.msra.mxu0 0
    %500 = vmatprep.subr.bf16.mxu0 0
    %501 = vmatpush1.bf16.msra.mxu0 0
    %502 = vmatprep.subr.bf16.mxu0 0
    %503 = vmatpush1.bf16.msra.mxu0 0
    %504 = vmatprep.subr.bf16.mxu0 0
    %505 = vmatpush1.bf16.msra.mxu0 0
    %506 = vmatprep.subr.bf16.mxu0 0
    %507 = vmatpush1.bf16.msra.mxu0 0
    %508 = vmatprep.subr.bf16.mxu0 0
    %509 = vmatpush1.bf16.msra.mxu0 0
    %510 = vmatprep.subr.bf16.mxu0 0
    %511 = vmatpush1.bf16.msra.mxu0 0
    %512 = vmatprep.subr.bf16.mxu0 0
    %513 = vmatpush1.bf16.msra.mxu0 0
    %514 = vmatprep.subr.bf16.mxu0 0
    %515 = vmatpush1.bf16.msra.mxu0 0
    %516 = vmatprep.mubr.bf16.mxu0 0
    %517 = vmatmul.mubr.bf16.gmra.mrb[0].mxu0 %v482
    %v518 = vpop.f32.mrb[0].mxu0
    %v519 = vadd.f32 0.0, %v518
    %v520 = vpop.f32.mrb[0].mxu0
    %v521 = vpop.f32.mrb[0].mxu0
    %v522 = vpop.f32.mrb[0].mxu0
    %523 = vdwg.mxu0
    %v524 = vadd.f32 %v476, %v519
    %v525 = vxor.u32 %v524, 2147483648
    %v526 = vmul.f32 %v525, 1.442695
    %v527 = vpow.pop %v526
    %v528 = vadd.f32 %v527, 1.0
    %v529 = vrcp.pop %v528
    %v530 = vmul.f32 1.0, %v529
    %v531 = vadd.f32 %v519, %v447
    %533 = vrot.lane.b32.xlu0 %v531, 64
    %v534 = vpop.permute.xlu0 %533
    %v536 = vmul.f32 %v530, %v534
    %538 = vrot.lane.b32.xlu0 %v536, 64
    %v539 = vpop.permute.xlu0 %538
    %v541 = vadd.f32 %v476, %v539
    %v542 = vtanh.pop %v541
    %v543 = vsub.f32 1.0, %v530
    %545 = vrot.lane.b32.xlu0 %v542, 96
    %v546 = vpop.permute.xlu0 %545
    %v548 = vmul.f32 %v543, %v546
    %v549 = vmul.f32 %v530, %v468
    %v550 = vadd.f32 %v548, %v549
    %552 = vrot.lane.b32.xlu0 %v550, 96
    %v553 = vpop.permute.xlu0 %552
    %s555 = scalar_lea.vmem [#allocation14], 8
    %556 = vst.msk [vmem:[%s555] sm:$0xff] %vm253, %v553
    %s557 = scalar_lea.vmem [#allocation2], 8
    %v558 = vld [vmem:[%s557] sm:$0xf]
    %v559 = vunpack.c.l.bf16 %v558
    %v560 = vpack.c.bf16 %v550, %v550
    %562 = vrot.lane.b32.xlu0 %v560, 96
    %v563 = vpop.permute.xlu0 %562
    %v565 = vsel %vm253, %v563, 0
    %567 = vmatprep.subr.bf16.mxu0 0
    %568 = vmatpush1.bf16.msra.mxu0 %v387
    %569 = vmatprep.subr.bf16.mxu0 0
    %570 = vmatpush1.bf16.msra.mxu0 %v388
    %571 = vmatprep.subr.bf16.mxu0 0
    %572 = vmatpush1.bf16.msra.mxu0 0
    %573 = vmatprep.subr.bf16.mxu0 0
    %574 = vmatpush1.bf16.msra.mxu0 0
    %575 = vmatprep.subr.bf16.mxu0 0
    %576 = vmatpush1.bf16.msra.mxu0 0
    %577 = vmatprep.subr.bf16.mxu0 0
    %578 = vmatpush1.bf16.msra.mxu0 0
    %579 = vmatprep.subr.bf16.mxu0 0
    %580 = vmatpush1.bf16.msra.mxu0 0
    %581 = vmatprep.subr.bf16.mxu0 0
    %582 = vmatpush1.bf16.msra.mxu0 0
    %583 = vmatprep.subr.bf16.mxu0 0
    %584 = vmatpush1.bf16.msra.mxu0 0
    %585 = vmatprep.subr.bf16.mxu0 0
    %586 = vmatpush1.bf16.msra.mxu0 0
    %587 = vmatprep.subr.bf16.mxu0 0
    %588 = vmatpush1.bf16.msra.mxu0 0
    %589 = vmatprep.subr.bf16.mxu0 0
    %590 = vmatpush1.bf16.msra.mxu0 0
    %591 = vmatprep.subr.bf16.mxu0 0
    %592 = vmatpush1.bf16.msra.mxu0 0
    %593 = vmatprep.subr.bf16.mxu0 0
    %594 = vmatpush1.bf16.msra.mxu0 0
    %595 = vmatprep.subr.bf16.mxu0 0
    %596 = vmatpush1.bf16.msra.mxu0 0
    %597 = vmatprep.subr.bf16.mxu0 0
    %598 = vmatpush1.bf16.msra.mxu0 0
    %599 = vmatprep.mubr.bf16.mxu0 0
    %600 = vmatmul.mubr.bf16.gmra.mrb[0].mxu0 %v565
    %v601 = vpop.f32.mrb[0].mxu0
    %v602 = vadd.f32 0.0, %v601
    %v603 = vpop.f32.mrb[0].mxu0
    %v604 = vpop.f32.mrb[0].mxu0
    %v605 = vpop.f32.mrb[0].mxu0
    %606 = vdwg.mxu0
    %v607 = vadd.f32 %v559, %v602
    %v608 = vxor.u32 %v607, 2147483648
    %v609 = vmul.f32 %v608, 1.442695
    %v610 = vpow.pop %v609
    %v611 = vadd.f32 %v610, 1.0
    %v612 = vrcp.pop %v611
    %v613 = vmul.f32 1.0, %v612
    %v614 = vadd.f32 %v602, %v447
    %616 = vrot.lane.b32.xlu0 %v614, 64
    %v617 = vpop.permute.xlu0 %616
    %v619 = vmul.f32 %v613, %v617
    %621 = vrot.lane.b32.xlu0 %v619, 64
    %v622 = vpop.permute.xlu0 %621
    %v624 = vadd.f32 %v559, %v622
    %v625 = vtanh.pop %v624
    %v626 = vsub.f32 1.0, %v613
    %628 = vrot.lane.b32.xlu0 %v625, 96
    %v629 = vpop.permute.xlu0 %628
    %v631 = vmul.f32 %v626, %v629
    %v632 = vmul.f32 %v613, %v550
    %v633 = vadd.f32 %v631, %v632
    %635 = vrot.lane.b32.xlu0 %v633, 96
    %v636 = vpop.permute.xlu0 %635
    %s638 = scalar_lea.vmem [#allocation14], 16
    %639 = vst.msk [vmem:[%s638] sm:$0xff] %vm253, %v636
    %s640 = scalar_lea.vmem [#allocation2], 12
    %v641 = vld [vmem:[%s640] sm:$0xf]
    %v642 = vunpack.c.l.bf16 %v641
    %v643 = vpack.c.bf16 %v633, %v633
    %645 = vrot.lane.b32.xlu0 %v643, 96
    %v646 = vpop.permute.xlu0 %645
    %v648 = vsel %vm253, %v646, 0
    %650 = vmatprep.subr.bf16.mxu0 0
    %651 = vmatpush1.bf16.msra.mxu0 %v387
    %652 = vmatprep.subr.bf16.mxu0 0
    %653 = vmatpush1.bf16.msra.mxu0 %v388
    %654 = vmatprep.subr.bf16.mxu0 0
    %655 = vmatpush1.bf16.msra.mxu0 0
    %656 = vmatprep.subr.bf16.mxu0 0
    %657 = vmatpush1.bf16.msra.mxu0 0
    %658 = vmatprep.subr.bf16.mxu0 0
    %659 = vmatpush1.bf16.msra.mxu0 0
    %660 = vmatprep.subr.bf16.mxu0 0
    %661 = vmatpush1.bf16.msra.mxu0 0
    %662 = vmatprep.subr.bf16.mxu0 0
    %663 = vmatpush1.bf16.msra.mxu0 0
    %664 = vmatprep.subr.bf16.mxu0 0
    %665 = vmatpush1.bf16.msra.mxu0 0
    %666 = vmatprep.subr.bf16.mxu0 0
    %667 = vmatpush1.bf16.msra.mxu0 0
    %668 = vmatprep.subr.bf16.mxu0 0
    %669 = vmatpush1.bf16.msra.mxu0 0
    %670 = vmatprep.subr.bf16.mxu0 0
    %671 = vmatpush1.bf16.msra.mxu0 0
    %672 = vmatprep.subr.bf16.mxu0 0
    %673 = vmatpush1.bf16.msra.mxu0 0
    %674 = vmatprep.subr.bf16.mxu0 0
    %675 = vmatpush1.bf16.msra.mxu0 0
    %676 = vmatprep.subr.bf16.mxu0 0
    %677 = vmatpush1.bf16.msra.mxu0 0
    %678 = vmatprep.subr.bf16.mxu0 0
    %679 = vmatpush1.bf16.msra.mxu0 0
    %680 = vmatprep.subr.bf16.mxu0 0
    %681 = vmatpush1.bf16.msra.mxu0 0
    %682 = vmatprep.mubr.bf16.mxu0 0
    %683 = vmatmul.mubr.bf16.gmra.mrb[0].mxu0 %v648
    %v684 = vpop.f32.mrb[0].mxu0
    %v685 = vadd.f32 0.0, %v684
    %v686 = vpop.f32.mrb[0].mxu0
    %v687 = vpop.f32.mrb[0].mxu0
    %v688 = vpop.f32.mrb[0].mxu0
    %689 = vdwg.mxu0
    %v690 = vadd.f32 %v642, %v685
    %v691 = vxor.u32 %v690, 2147483648
    %v692 = vmul.f32 %v691, 1.442695
    %v693 = vpow.pop %v692
    %v694 = vadd.f32 %v693, 1.0
    %v695 = vrcp.pop %v694
    %v696 = vmul.f32 1.0, %v695
    %v697 = vadd.f32 %v685, %v447
    %699 = vrot.lane.b32.xlu0 %v697, 64
    %v700 = vpop.permute.xlu0 %699
    %v702 = vmul.f32 %v696, %v700
    %704 = vrot.lane.b32.xlu0 %v702, 64
    %v705 = vpop.permute.xlu0 %704
    %v707 = vadd.f32 %v642, %v705
    %v708 = vtanh.pop %v707
    %v709 = vsub.f32 1.0, %v696
    %711 = vrot.lane.b32.xlu0 %v708, 96
    %v712 = vpop.permute.xlu0 %711
    %v714 = vmul.f32 %v709, %v712
    %v715 = vmul.f32 %v696, %v633
    %v716 = vadd.f32 %v714, %v715
    %718 = vrot.lane.b32.xlu0 %v716, 96
    %v719 = vpop.permute.xlu0 %718
    %s721 = scalar_lea.vmem [#allocation14], 24
    %722 = vst.msk [vmem:[%s721] sm:$0xff] %vm253, %v719
    %s723 = scalar_lea.vmem [#allocation2], 16
    %v724 = vld [vmem:[%s723] sm:$0xf]
    %v725 = vunpack.c.l.bf16 %v724
    %v726 = vpack.c.bf16 %v716, %v716
    %728 = vrot.lane.b32.xlu0 %v726, 96
    %v729 = vpop.permute.xlu0 %728
    %v731 = vsel %vm253, %v729, 0
    %733 = vmatprep.subr.bf16.mxu0 0
    %734 = vmatpush1.bf16.msra.mxu0 %v387
    %735 = vmatprep.subr.bf16.mxu0 0
    %736 = vmatpush1.bf16.msra.mxu0 %v388
    %737 = vmatprep.subr.bf16.mxu0 0
    %738 = vmatpush1.bf16.msra.mxu0 0
    %739 = vmatprep.subr.bf16.mxu0 0
    %740 = vmatpush1.bf16.msra.mxu0 0
    %741 = vmatprep.subr.bf16.mxu0 0
    %742 = vmatpush1.bf16.msra.mxu0 0
    %743 = vmatprep.subr.bf16.mxu0 0
    %744 = vmatpush1.bf16.msra.mxu0 0
    %745 = vmatprep.subr.bf16.mxu0 0
    %746 = vmatpush1.bf16.msra.mxu0 0
    %747 = vmatprep.subr.bf16.mxu0 0
    %748 = vmatpush1.bf16.msra.mxu0 0
    %749 = vmatprep.subr.bf16.mxu0 0
    %750 = vmatpush1.bf16.msra.mxu0 0
    %751 = vmatprep.subr.bf16.mxu0 0
    %752 = vmatpush1.bf16.msra.mxu0 0
    %753 = vmatprep.subr.bf16.mxu0 0
    %754 = vmatpush1.bf16.msra.mxu0 0
    %755 = vmatprep.subr.bf16.mxu0 0
    %756 = vmatpush1.bf16.msra.mxu0 0
    %757 = vmatprep.subr.bf16.mxu0 0
    %758 = vmatpush1.bf16.msra.mxu0 0
    %759 = vmatprep.subr.bf16.mxu0 0
    %760 = vmatpush1.bf16.msra.mxu0 0
    %761 = vmatprep.subr.bf16.mxu0 0
    %762 = vmatpush1.bf16.msra.mxu0 0
    %763 = vmatprep.subr.bf16.mxu0 0
    %764 = vmatpush1.bf16.msra.mxu0 0
    %765 = vmatprep.mubr.bf16.mxu0 0
    %766 = vmatmul.mubr.bf16.gmra.mrb[0].mxu0 %v731
    %v767 = vpop.f32.mrb[0].mxu0
    %v768 = vadd.f32 0.0, %v767
    %v769 = vpop.f32.mrb[0].mxu0
    %v770 = vpop.f32.mrb[0].mxu0
    %v771 = vpop.f32.mrb[0].mxu0
    %772 = vdwg.mxu0
    %v773 = vadd.f32 %v725, %v768
    %v774 = vxor.u32 %v773, 2147483648
    %v775 = vmul.f32 %v774, 1.442695
    %v776 = vpow.pop %v775
    %v777 = vadd.f32 %v776, 1.0
    %v778 = vrcp.pop %v777
    %v779 = vmul.f32 1.0, %v778
    %v780 = vadd.f32 %v768, %v447
    %782 = vrot.lane.b32.xlu0 %v780, 64
    %v783 = vpop.permute.xlu0 %782
    %v785 = vmul.f32 %v779, %v783
    %787 = vrot.lane.b32.xlu0 %v785, 64
    %v788 = vpop.permute.xlu0 %787
    %v790 = vadd.f32 %v725, %v788
    %v791 = vtanh.pop %v790
    %v792 = vsub.f32 1.0, %v779
    %794 = vrot.lane.b32.xlu0 %v791, 96
    %v795 = vpop.permute.xlu0 %794
    %v797 = vmul.f32 %v792, %v795
    %v798 = vmul.f32 %v779, %v716
    %v799 = vadd.f32 %v797, %v798
    %801 = vrot.lane.b32.xlu0 %v799, 96
    %v802 = vpop.permute.xlu0 %801
    %s804 = scalar_lea.vmem [#allocation14], 32
    %805 = vst.msk [vmem:[%s804] sm:$0xff] %vm253, %v802
    %s806 = scalar_lea.vmem [#allocation2], 20
    %v807 = vld [vmem:[%s806] sm:$0xf]
    %v808 = vunpack.c.l.bf16 %v807
    %v809 = vpack.c.bf16 %v799, %v799
    %811 = vrot.lane.b32.xlu0 %v809, 96
    %v812 = vpop.permute.xlu0 %811
    %v814 = vsel %vm253, %v812, 0
    %816 = vmatprep.subr.bf16.mxu0 0
    %817 = vmatpush1.bf16.msra.mxu0 %v387
    %818 = vmatprep.subr.bf16.mxu0 0
    %819 = vmatpush1.bf16.msra.mxu0 %v388
    %820 = vmatprep.subr.bf16.mxu0 0
    %821 = vmatpush1.bf16.msra.mxu0 0
    %822 = vmatprep.subr.bf16.mxu0 0
    %823 = vmatpush1.bf16.msra.mxu0 0
    %824 = vmatprep.subr.bf16.mxu0 0
    %825 = vmatpush1.bf16.msra.mxu0 0
    %826 = vmatprep.subr.bf16.mxu0 0
    %827 = vmatpush1.bf16.msra.mxu0 0
    %828 = vmatprep.subr.bf16.mxu0 0
    %829 = vmatpush1.bf16.msra.mxu0 0
    %830 = vmatprep.subr.bf16.mxu0 0
    %831 = vmatpush1.bf16.msra.mxu0 0
    %832 = vmatprep.subr.bf16.mxu0 0
    %833 = vmatpush1.bf16.msra.mxu0 0
    %834 = vmatprep.subr.bf16.mxu0 0
    %835 = vmatpush1.bf16.msra.mxu0 0
    %836 = vmatprep.subr.bf16.mxu0 0
    %837 = vmatpush1.bf16.msra.mxu0 0
    %838 = vmatprep.subr.bf16.mxu0 0
    %839 = vmatpush1.bf16.msra.mxu0 0
    %840 = vmatprep.subr.bf16.mxu0 0
    %841 = vmatpush1.bf16.msra.mxu0 0
    %842 = vmatprep.subr.bf16.mxu0 0
    %843 = vmatpush1.bf16.msra.mxu0 0
    %844 = vmatprep.subr.bf16.mxu0 0
    %845 = vmatpush1.bf16.msra.mxu0 0
    %846 = vmatprep.subr.bf16.mxu0 0
    %847 = vmatpush1.bf16.msra.mxu0 0
    %848 = vmatprep.mubr.bf16.mxu0 0
    %849 = vmatmul.mubr.bf16.gmra.mrb[0].mxu0 %v814
    %v850 = vpop.f32.mrb[0].mxu0
    %v851 = vadd.f32 0.0, %v850
    %v852 = vpop.f32.mrb[0].mxu0
    %v853 = vpop.f32.mrb[0].mxu0
    %v854 = vpop.f32.mrb[0].mxu0
    %855 = vdwg.mxu0
    %v856 = vadd.f32 %v808, %v851
    %v857 = vxor.u32 %v856, 2147483648
    %v858 = vmul.f32 %v857, 1.442695
    %v859 = vpow.pop %v858
    %v860 = vadd.f32 %v859, 1.0
    %v861 = vrcp.pop %v860
    %v862 = vmul.f32 1.0, %v861
    %v863 = vadd.f32 %v851, %v447
    %865 = vrot.lane.b32.xlu0 %v863, 64
    %v866 = vpop.permute.xlu0 %865
    %v868 = vmul.f32 %v862, %v866
    %870 = vrot.lane.b32.xlu0 %v868, 64
    %v871 = vpop.permute.xlu0 %870
    %v873 = vadd.f32 %v808, %v871
    %v874 = vtanh.pop %v873
    %v875 = vsub.f32 1.0, %v862
    %877 = vrot.lane.b32.xlu0 %v874, 96
    %v878 = vpop.permute.xlu0 %877
    %v880 = vmul.f32 %v875, %v878
    %v881 = vmul.f32 %v862, %v799
    %v882 = vadd.f32 %v880, %v881
    %884 = vrot.lane.b32.xlu0 %v882, 96
    %v885 = vpop.permute.xlu0 %884
    %s887 = scalar_lea.vmem [#allocation14], 40
    %888 = vst.msk [vmem:[%s887] sm:$0xff] %vm253, %v885
    %s889 = scalar_lea.vmem [#allocation2], 24
    %v890 = vld [vmem:[%s889] sm:$0xf]
    %v891 = vunpack.c.l.bf16 %v890
    %v892 = vpack.c.bf16 %v882, %v882
    %894 = vrot.lane.b32.xlu0 %v892, 96
    %v895 = vpop.permute.xlu0 %894
    %v897 = vsel %vm253, %v895, 0
    %899 = vmatprep.subr.bf16.mxu0 0
    %900 = vmatpush1.bf16.msra.mxu0 %v387
    %901 = vmatprep.subr.bf16.mxu0 0
    %902 = vmatpush1.bf16.msra.mxu0 %v388
    %903 = vmatprep.subr.bf16.mxu0 0
    %904 = vmatpush1.bf16.msra.mxu0 0
    %905 = vmatprep.subr.bf16.mxu0 0
    %906 = vmatpush1.bf16.msra.mxu0 0
    %907 = vmatprep.subr.bf16.mxu0 0
    %908 = vmatpush1.bf16.msra.mxu0 0
    %909 = vmatprep.subr.bf16.mxu0 0
    %910 = vmatpush1.bf16.msra.mxu0 0
    %911 = vmatprep.subr.bf16.mxu0 0
    %912 = vmatpush1.bf16.msra.mxu0 0
    %913 = vmatprep.subr.bf16.mxu0 0
    %914 = vmatpush1.bf16.msra.mxu0 0
    %915 = vmatprep.subr.bf16.mxu0 0
    %916 = vmatpush1.bf16.msra.mxu0 0
    %917 = vmatprep.subr.bf16.mxu0 0
    %918 = vmatpush1.bf16.msra.mxu0 0
    %919 = vmatprep.subr.bf16.mxu0 0
    %920 = vmatpush1.bf16.msra.mxu0 0
    %921 = vmatprep.subr.bf16.mxu0 0
    %922 = vmatpush1.bf16.msra.mxu0 0
    %923 = vmatprep.subr.bf16.mxu0 0
    %924 = vmatpush1.bf16.msra.mxu0 0
    %925 = vmatprep.subr.bf16.mxu0 0
    %926 = vmatpush1.bf16.msra.mxu0 0
    %927 = vmatprep.subr.bf16.mxu0 0
    %928 = vmatpush1.bf16.msra.mxu0 0
    %929 = vmatprep.subr.bf16.mxu0 0
    %930 = vmatpush1.bf16.msra.mxu0 0
    %931 = vmatprep.mubr.bf16.mxu0 0
    %932 = vmatmul.mubr.bf16.gmra.mrb[0].mxu0 %v897
    %v933 = vpop.f32.mrb[0].mxu0
    %v934 = vadd.f32 0.0, %v933
    %v935 = vpop.f32.mrb[0].mxu0
    %v936 = vpop.f32.mrb[0].mxu0
    %v937 = vpop.f32.mrb[0].mxu0
    %938 = vdwg.mxu0
    %v939 = vadd.f32 %v891, %v934
    %v940 = vxor.u32 %v939, 2147483648
    %v941 = vmul.f32 %v940, 1.442695
    %v942 = vpow.pop %v941
    %v943 = vadd.f32 %v942, 1.0
    %v944 = vrcp.pop %v943
    %v945 = vmul.f32 1.0, %v944
    %v946 = vadd.f32 %v934, %v447
    %948 = vrot.lane.b32.xlu0 %v946, 64
    %v949 = vpop.permute.xlu0 %948
    %v951 = vmul.f32 %v945, %v949
    %953 = vrot.lane.b32.xlu0 %v951, 64
    %v954 = vpop.permute.xlu0 %953
    %v956 = vadd.f32 %v891, %v954
    %v957 = vtanh.pop %v956
    %v958 = vsub.f32 1.0, %v945
    %960 = vrot.lane.b32.xlu0 %v957, 96
    %v961 = vpop.permute.xlu0 %960
    %v963 = vmul.f32 %v958, %v961
    %v964 = vmul.f32 %v945, %v882
    %v965 = vadd.f32 %v963, %v964
    %967 = vrot.lane.b32.xlu0 %v965, 96
    %v968 = vpop.permute.xlu0 %967
    %s970 = scalar_lea.vmem [#allocation14], 48
    %971 = vst.msk [vmem:[%s970] sm:$0xff] %vm253, %v968
    %s972 = scalar_lea.vmem [#allocation2], 28
    %v973 = vld [vmem:[%s972] sm:$0xf]
    %v974 = vunpack.c.l.bf16 %v973
    %v975 = vpack.c.bf16 %v965, %v965
    %977 = vrot.lane.b32.xlu0 %v975, 96
    %v978 = vpop.permute.xlu0 %977
    %v980 = vsel %vm253, %v978, 0
    %982 = vmatprep.subr.bf16.mxu0 0
    %983 = vmatpush1.bf16.msra.mxu0 %v387
    %984 = vmatprep.subr.bf16.mxu0 0
    %985 = vmatpush1.bf16.msra.mxu0 %v388
    %986 = vmatprep.subr.bf16.mxu0 0
    %987 = vmatpush1.bf16.msra.mxu0 0
    %988 = vmatprep.subr.bf16.mxu0 0
    %989 = vmatpush1.bf16.msra.mxu0 0
    %990 = vmatprep.subr.bf16.mxu0 0
    %991 = vmatpush1.bf16.msra.mxu0 0
    %992 = vmatprep.subr.bf16.mxu0 0
    %993 = vmatpush1.bf16.msra.mxu0 0
    %994 = vmatprep.subr.bf16.mxu0 0
    %995 = vmatpush1.bf16.msra.mxu0 0
    %996 = vmatprep.subr.bf16.mxu0 0
    %997 = vmatpush1.bf16.msra.mxu0 0
    %998 = vmatprep.subr.bf16.mxu0 0
    %999 = vmatpush1.bf16.msra.mxu0 0
    %1000 = vmatprep.subr.bf16.mxu0 0
    %1001 = vmatpush1.bf16.msra.mxu0 0
    %1002 = vmatprep.subr.bf16.mxu0 0
    %1003 = vmatpush1.bf16.msra.mxu0 0
    %1004 = vmatprep.subr.bf16.mxu0 0
    %1005 = vmatpush1.bf16.msra.mxu0 0
    %1006 = vmatprep.subr.bf16.mxu0 0
    %1007 = vmatpush1.bf16.msra.mxu0 0
    %1008 = vmatprep.subr.bf16.mxu0 0
    %1009 = vmatpush1.bf16.msra.mxu0 0
    %1010 = vmatprep.subr.bf16.mxu0 0
    %1011 = vmatpush1.bf16.msra.mxu0 0
    %1012 = vmatprep.subr.bf16.mxu0 0
    %1013 = vmatpush1.bf16.msra.mxu0 0
    %1014 = vmatprep.mubr.bf16.mxu0 0
    %1015 = vmatmul.mubr.bf16.gmra.mrb[0].mxu0 %v980
    %v1016 = vpop.f32.mrb[0].mxu0
    %v1017 = vadd.f32 0.0, %v1016
    %v1018 = vpop.f32.mrb[0].mxu0
    %v1019 = vpop.f32.mrb[0].mxu0
    %v1020 = vpop.f32.mrb[0].mxu0
    %1021 = vdwg.mxu0
    %v1022 = vadd.f32 %v974, %v1017
    %v1023 = vxor.u32 %v1022, 2147483648
    %v1024 = vmul.f32 %v1023, 1.442695
    %v1025 = vpow.pop %v1024
    %v1026 = vadd.f32 %v1025, 1.0
    %v1027 = vrcp.pop %v1026
    %v1028 = vmul.f32 1.0, %v1027
    %v1029 = vadd.f32 %v1017, %v447
    %1031 = vrot.lane.b32.xlu0 %v1029, 64
    %v1032 = vpop.permute.xlu0 %1031
    %v1034 = vmul.f32 %v1028, %v1032
    %1036 = vrot.lane.b32.xlu0 %v1034, 64
    %v1037 = vpop.permute.xlu0 %1036
    %v1039 = vadd.f32 %v974, %v1037
    %v1040 = vtanh.pop %v1039
    %v1041 = vsub.f32 1.0, %v1028
    %1043 = vrot.lane.b32.xlu0 %v1040, 96
    %v1044 = vpop.permute.xlu0 %1043
    %v1046 = vmul.f32 %v1041, %v1044
    %v1047 = vmul.f32 %v1028, %v965
    %v1048 = vadd.f32 %v1046, %v1047
    %1050 = vrot.lane.b32.xlu0 %v1048, 96
    %v1051 = vpop.permute.xlu0 %1050
    %s1053 = scalar_lea.vmem [#allocation14], 56
    %1054 = vst.msk [vmem:[%s1053] sm:$0xff] %vm253, %v1051
    %v1055 = vld [vmem:[#allocation14] sm:$0xff]
    %v1056 = vld [vmem:[#allocation14 + $0x8] sm:$0xff]
    %v1057 = vld [vmem:[#allocation14 + $0x10] sm:$0xff]
    %v1058 = vld [vmem:[#allocation14 + $0x18] sm:$0xff]
    %v1059 = vld [vmem:[#allocation14 + $0x20] sm:$0xff]
    %v1060 = vld [vmem:[#allocation14 + $0x28] sm:$0xff]
    %v1061 = vld [vmem:[#allocation14 + $0x30] sm:$0xff]
    %v1062 = vld [vmem:[#allocation14 + $0x38] sm:$0xff]
    %v1063 = vpack.c.bf16 %v1056, %v1055
    %v1064 = vpack.c.bf16 %v1058, %v1057
    %v1065 = vpack.c.bf16 %v1060, %v1059
    %v1066 = vpack.c.bf16 %v1062, %v1061
    %v1067 = vld [vmem:[%s7] sm:$0xf]
    %v1068 = vld [vmem:[%s7 + $0x4] sm:$0xf]
    %v1069 = vld [vmem:[%s7 + $0x8] sm:$0xf]
    %v1070 = vld [vmem:[%s7 + $0xc] sm:$0xf]
    %v1071 = vld [vmem:[#allocation11] sm:$0x1]
    %v1073 = vlaneseq
    %v1074 = vshrl.u32 %v1073, 7
    %v1075 = vsub.s32 0, %v1074
    %v1076 = vrot.slane %v1071, %v1075
    %v1082 = vunpack.c.l.b16 %v1067
    %v1083 = vunpack.c.l.b16 %v1068
    %v1084 = vunpack.c.l.b16 %v1069
    %v1085 = vunpack.c.l.b16 %v1070
    %v1086 = vpack.c.b16 %v1083, %v1082
    %v1087 = vpack.c.b16 %v1085, %v1084
    %v1091 = vsel %vm253, %v1063, 0
    %v1094 = vsel %vm253, %v1064, 0
    %v1097 = vsel %vm253, %v1065, 0
    %v1100 = vsel %vm253, %v1066, 0
    %1102 = vmatprep.subr.bf16.mxu0 0
    %1103 = vmatpush1.bf16.msra.mxu0 %v1086
    %1104 = vmatprep.subr.bf16.mxu0 0
    %1105 = vmatpush1.bf16.msra.mxu0 %v1087
    %1106 = vmatprep.subr.bf16.mxu0 0
    %1107 = vmatpush1.bf16.msra.mxu0 0
    %1108 = vmatprep.subr.bf16.mxu0 0
    %1109 = vmatpush1.bf16.msra.mxu0 0
    %1110 = vmatprep.subr.bf16.mxu0 0
    %1111 = vmatpush1.bf16.msra.mxu0 0
    %1112 = vmatprep.subr.bf16.mxu0 0
    %1113 = vmatpush1.bf16.msra.mxu0 0
    %1114 = vmatprep.subr.bf16.mxu0 0
    %1115 = vmatpush1.bf16.msra.mxu0 0
    %1116 = vmatprep.subr.bf16.mxu0 0
    %1117 = vmatpush1.bf16.msra.mxu0 0
    %1118 = vmatprep.subr.bf16.mxu0 0
    %1119 = vmatpush1.bf16.msra.mxu0 0
    %1120 = vmatprep.subr.bf16.mxu0 0
    %1121 = vmatpush1.bf16.msra.mxu0 0
    %1122 = vmatprep.subr.bf16.mxu0 0
    %1123 = vmatpush1.bf16.msra.mxu0 0
    %1124 = vmatprep.subr.bf16.mxu0 0
    %1125 = vmatpush1.bf16.msra.mxu0 0
    %1126 = vmatprep.subr.bf16.mxu0 0
    %1127 = vmatpush1.bf16.msra.mxu0 0
    %1128 = vmatprep.subr.bf16.mxu0 0
    %1129 = vmatpush1.bf16.msra.mxu0 0
    %1130 = vmatprep.subr.bf16.mxu0 0
    %1131 = vmatpush1.bf16.msra.mxu0 0
    %1132 = vmatprep.subr.bf16.mxu0 0
    %1133 = vmatpush1.bf16.msra.mxu0 0
    %1134 = vmatprep.mubr.bf16.mxu0 0
    %1135 = vmatmul.mubr.bf16.gmra.mrb[0].mxu0 %v1091
    %v1136 = vpop.f32.mrb[0].mxu0
    %v1137 = vadd.f32 %v1076, %v1136
    %v1138 = vpop.f32.mrb[0].mxu0
    %v1139 = vpop.f32.mrb[0].mxu0
    %v1140 = vadd.f32 %v1076, %v1139
    %v1141 = vpop.f32.mrb[0].mxu0
    %1142 = vmatprep.mubr.bf16.mxu0 0
    %1143 = vmatmul.mubr.bf16.gmra.mrb[0].mxu0 %v1094
    %v1144 = vpop.f32.mrb[0].mxu0
    %v1145 = vadd.f32 %v1076, %v1144
    %v1146 = vpop.f32.mrb[0].mxu0
    %v1147 = vpop.f32.mrb[0].mxu0
    %v1148 = vadd.f32 %v1076, %v1147
    %v1149 = vpop.f32.mrb[0].mxu0
    %1150 = vmatprep.mubr.bf16.mxu0 0
    %1151 = vmatmul.mubr.bf16.gmra.mrb[0].mxu0 %v1097
    %v1152 = vpop.f32.mrb[0].mxu0
    %v1153 = vadd.f32 %v1076, %v1152
    %v1154 = vpop.f32.mrb[0].mxu0
    %v1155 = vpop.f32.mrb[0].mxu0
    %v1156 = vadd.f32 %v1076, %v1155
    %v1157 = vpop.f32.mrb[0].mxu0
    %1158 = vmatprep.mubr.bf16.mxu0 0
    %1159 = vmatmul.mubr.bf16.gmra.mrb[0].mxu0 %v1100
    %v1160 = vpop.f32.mrb[0].mxu0
    %v1161 = vadd.f32 %v1076, %v1160
    %v1162 = vpop.f32.mrb[0].mxu0
    %v1163 = vpop.f32.mrb[0].mxu0
    %v1164 = vadd.f32 %v1076, %v1163
    %v1165 = vpop.f32.mrb[0].mxu0
    %1166 = vdwg.mxu0
    %v1167 = vpack.c.bf16 %v1140, %v1137
    %v1168 = vpack.c.bf16 %v1148, %v1145
    %v1169 = vpack.c.bf16 %v1156, %v1153
    %v1170 = vpack.c.bf16 %v1164, %v1161
    %v1175 = vunpack.c.l.b16 %v1167
    %v1176 = vunpack.c.h.b16 %v1167
    %v1177 = vunpack.c.l.b16 %v1168
    %v1178 = vunpack.c.h.b16 %v1168
    %v1179 = vunpack.c.l.b16 %v1169
    %v1180 = vunpack.c.h.b16 %v1169
    %v1181 = vunpack.c.l.b16 %v1170
    %v1182 = vunpack.c.h.b16 %v1170
    %v1183 = vpack.c.b16 %v1175, %v1175
    %v1184 = vpack.c.b16 %v1176, %v1176
    %v1185 = vpack.c.b16 %v1177, %v1177
    %v1186 = vpack.c.b16 %v1178, %v1178
    %v1187 = vpack.c.b16 %v1179, %v1179
    %v1188 = vpack.c.b16 %v1180, %v1180
    %v1189 = vpack.c.b16 %v1181, %v1181
    %v1190 = vpack.c.b16 %v1182, %v1182
    %1199 = vst.msk [vmem:[#allocation3] sm:$0xf] %vm363, %v1183
    %1200 = vst.msk [vmem:[#allocation3 + $0x4] sm:$0xf] %vm363, %v1184
    %1201 = vst.msk [vmem:[#allocation3 + $0x8] sm:$0xf] %vm363, %v1185
    %1202 = vst.msk [vmem:[#allocation3 + $0xc] sm:$0xf] %vm363, %v1186
    %1203 = vst.msk [vmem:[#allocation3 + $0x10] sm:$0xf] %vm363, %v1187
    %1204 = vst.msk [vmem:[#allocation3 + $0x14] sm:$0xf] %vm363, %v1188
    %1205 = vst.msk [vmem:[#allocation3 + $0x18] sm:$0xf] %vm363, %v1189
    %1206 = vst.msk [vmem:[#allocation3 + $0x1c] sm:$0xf] %vm363, %v1190
    %v1207 = vld [vmem:[#allocation13] sm:$0xf]
    %v1208 = vld [vmem:[#allocation13 + $0x4] sm:$0xf]
    %v1209 = vld [vmem:[#allocation13 + $0x8] sm:$0xf]
    %v1210 = vld [vmem:[#allocation13 + $0xc] sm:$0xf]
    %v1211 = vld [vmem:[%s10] sm:$0x1]
    %v1212 = vld [vmem:[#allocation3] sm:$0xf]
    %v1213 = vunpack.c.l.bf16 %v1212
    %v1218 = vunpack.c.l.b16 %v1207
    %v1219 = vunpack.c.l.b16 %v1208
    %v1220 = vunpack.c.l.b16 %v1209
    %v1221 = vunpack.c.l.b16 %v1210
    %v1222 = vpack.c.b16 %v1219, %v1218
    %v1223 = vpack.c.b16 %v1221, %v1220
    %1226 = vmatprep.subr.bf16.mxu0 0
    %1227 = vmatpush1.bf16.msra.mxu0 %v1222
    %1228 = vmatprep.subr.bf16.mxu0 0
    %1229 = vmatpush1.bf16.msra.mxu0 %v1223
    %1230 = vmatprep.subr.bf16.mxu0 0
    %1231 = vmatpush1.bf16.msra.mxu0 0
    %1232 = vmatprep.subr.bf16.mxu0 0
    %1233 = vmatpush1.bf16.msra.mxu0 0
    %1234 = vmatprep.subr.bf16.mxu0 0
    %1235 = vmatpush1.bf16.msra.mxu0 0
    %1236 = vmatprep.subr.bf16.mxu0 0
    %1237 = vmatpush1.bf16.msra.mxu0 0
    %1238 = vmatprep.subr.bf16.mxu0 0
    %1239 = vmatpush1.bf16.msra.mxu0 0
    %1240 = vmatprep.subr.bf16.mxu0 0
    %1241 = vmatpush1.bf16.msra.mxu0 0
    %1242 = vmatprep.subr.bf16.mxu0 0
    %1243 = vmatpush1.bf16.msra.mxu0 0
    %1244 = vmatprep.subr.bf16.mxu0 0
    %1245 = vmatpush1.bf16.msra.mxu0 0
    %1246 = vmatprep.subr.bf16.mxu0 0
    %1247 = vmatpush1.bf16.msra.mxu0 0
    %1248 = vmatprep.subr.bf16.mxu0 0
    %1249 = vmatpush1.bf16.msra.mxu0 0
    %1250 = vmatprep.subr.bf16.mxu0 0
    %1251 = vmatpush1.bf16.msra.mxu0 0
    %1252 = vmatprep.subr.bf16.mxu0 0
    %1253 = vmatpush1.bf16.msra.mxu0 0
    %1254 = vmatprep.subr.bf16.mxu0 0
    %1255 = vmatpush1.bf16.msra.mxu0 0
    %1256 = vmatprep.subr.bf16.mxu0 0
    %1257 = vmatpush1.bf16.msra.mxu0 0
    %1258 = vmatprep.mubr.bf16.mxu0 0
    %1259 = vmatmul.mubr.bf16.gmra.mrb[0].mxu0 %v392
    %v1260 = vpop.f32.mrb[0].mxu0
    %v1261 = vadd.f32 0.0, %v1260
    %v1262 = vpop.f32.mrb[0].mxu0
    %v1263 = vpop.f32.mrb[0].mxu0
    %v1264 = vpop.f32.mrb[0].mxu0
    %1265 = vdwg.mxu0
    %v1266 = vadd.f32 %v1213, %v1261
    %v1267 = vxor.u32 %v1266, 2147483648
    %v1268 = vmul.f32 %v1267, 1.442695
    %v1269 = vpow.pop %v1268
    %v1270 = vadd.f32 %v1269, 1.0
    %v1271 = vrcp.pop %v1270
    %v1272 = vmul.f32 1.0, %v1271
    %v1274 = vlaneseq
    %v1275 = vshrl.u32 %v1274, 7
    %v1276 = vsub.s32 0, %v1275
    %v1277 = vrot.slane %v1211, %v1276
    %1278 = vrot.lane.b32.xlu0 %v1277, 64
    %v1279 = vpop.permute.xlu0 %1278
    %v1281 = vadd.f32 %v1261, %v1279
    %1283 = vrot.lane.b32.xlu0 %v1281, 64
    %v1284 = vpop.permute.xlu0 %1283
    %v1286 = vmul.f32 %v1272, %v1284
    %1288 = vrot.lane.b32.xlu0 %v1286, 64
    %v1289 = vpop.permute.xlu0 %1288
    %v1291 = vadd.f32 %v1213, %v1289
    %v1292 = vtanh.pop %v1291
    %v1293 = vsub.f32 1.0, %v1272
    %1295 = vrot.lane.b32.xlu0 %v1292, 96
    %v1296 = vpop.permute.xlu0 %1295
    %v1298 = vmul.f32 %v1293, %v1296
    %v1299 = vmul.f32 %v1272, 0.0
    %v1300 = vadd.f32 %v1298, %v1299
    %v1301 = vpack.c.bf16 %v1300, %v1300
    %v1303 = vunpack.c.l.b16 %v1301
    %v1304 = vpack.c.b16 %v1303, %v1303
    %1305 = vrot.lane.b32.xlu0 %v1304, 96
    %v1306 = vpop.permute.xlu0 %1305
    %vm1308 = vcmask 257024
    %1309 = vst.msk [vmem:[#allocation4] sm:$0xf] %vm1308, %v1306
    %s1310 = scalar_lea.vmem [#allocation3], 4
    %v1311 = vld [vmem:[%s1310] sm:$0xf]
    %v1312 = vunpack.c.l.bf16 %v1311
    %1313 = vrot.lane.b32.xlu0 %v1301, 96
    %v1314 = vpop.permute.xlu0 %1313
    %v1316 = vsel %vm253, %v1314, 0
    %1318 = vmatprep.subr.bf16.mxu0 0
    %1319 = vmatpush1.bf16.msra.mxu0 %v1222
    %1320 = vmatprep.subr.bf16.mxu0 0
    %1321 = vmatpush1.bf16.msra.mxu0 %v1223
    %1322 = vmatprep.subr.bf16.mxu0 0
    %1323 = vmatpush1.bf16.msra.mxu0 0
    %1324 = vmatprep.subr.bf16.mxu0 0
    %1325 = vmatpush1.bf16.msra.mxu0 0
    %1326 = vmatprep.subr.bf16.mxu0 0
    %1327 = vmatpush1.bf16.msra.mxu0 0
    %1328 = vmatprep.subr.bf16.mxu0 0
    %1329 = vmatpush1.bf16.msra.mxu0 0
    %1330 = vmatprep.subr.bf16.mxu0 0
    %1331 = vmatpush1.bf16.msra.mxu0 0
    %1332 = vmatprep.subr.bf16.mxu0 0
    %1333 = vmatpush1.bf16.msra.mxu0 0
    %1334 = vmatprep.subr.bf16.mxu0 0
    %1335 = vmatpush1.bf16.msra.mxu0 0
    %1336 = vmatprep.subr.bf16.mxu0 0
    %1337 = vmatpush1.bf16.msra.mxu0 0
    %1338 = vmatprep.subr.bf16.mxu0 0
    %1339 = vmatpush1.bf16.msra.mxu0 0
    %1340 = vmatprep.subr.bf16.mxu0 0
    %1341 = vmatpush1.bf16.msra.mxu0 0
    %1342 = vmatprep.subr.bf16.mxu0 0
    %1343 = vmatpush1.bf16.msra.mxu0 0
    %1344 = vmatprep.subr.bf16.mxu0 0
    %1345 = vmatpush1.bf16.msra.mxu0 0
    %1346 = vmatprep.subr.bf16.mxu0 0
    %1347 = vmatpush1.bf16.msra.mxu0 0
    %1348 = vmatprep.subr.bf16.mxu0 0
    %1349 = vmatpush1.bf16.msra.mxu0 0
    %1350 = vmatprep.mubr.bf16.mxu0 0
    %1351 = vmatmul.mubr.bf16.gmra.mrb[0].mxu0 %v1316
    %v1352 = vpop.f32.mrb[0].mxu0
    %v1353 = vadd.f32 0.0, %v1352
    %v1354 = vpop.f32.mrb[0].mxu0
    %v1355 = vpop.f32.mrb[0].mxu0
    %v1356 = vpop.f32.mrb[0].mxu0
    %1357 = vdwg.mxu0
    %v1358 = vadd.f32 %v1312, %v1353
    %v1359 = vxor.u32 %v1358, 2147483648
    %v1360 = vmul.f32 %v1359, 1.442695
    %v1361 = vpow.pop %v1360
    %v1362 = vadd.f32 %v1361, 1.0
    %v1363 = vrcp.pop %v1362
    %v1364 = vmul.f32 1.0, %v1363
    %v1365 = vadd.f32 %v1353, %v1279
    %1367 = vrot.lane.b32.xlu0 %v1365, 64
    %v1368 = vpop.permute.xlu0 %1367
    %v1370 = vmul.f32 %v1364, %v1368
    %1372 = vrot.lane.b32.xlu0 %v1370, 64
    %v1373 = vpop.permute.xlu0 %1372
    %v1375 = vadd.f32 %v1312, %v1373
    %v1376 = vtanh.pop %v1375
    %v1377 = vsub.f32 1.0, %v1364
    %1379 = vrot.lane.b32.xlu0 %v1376, 96
    %v1380 = vpop.permute.xlu0 %1379
    %v1382 = vmul.f32 %v1377, %v1380
    %v1383 = vmul.f32 %v1364, %v1300
    %v1384 = vadd.f32 %v1382, %v1383
    %v1385 = vpack.c.bf16 %v1384, %v1384
    %v1387 = vunpack.c.l.b16 %v1385
    %v1388 = vpack.c.b16 %v1387, %v1387
    %1389 = vrot.lane.b32.xlu0 %v1388, 96
    %v1390 = vpop.permute.xlu0 %1389
    %s1392 = scalar_lea.vmem [#allocation4], 4
    %1393 = vst.msk [vmem:[%s1392] sm:$0xf] %vm1308, %v1390
    %s1394 = scalar_lea.vmem [#allocation3], 8
    %v1395 = vld [vmem:[%s1394] sm:$0xf]
    %v1396 = vunpack.c.l.bf16 %v1395
    %1397 = vrot.lane.b32.xlu0 %v1385, 96
    %v1398 = vpop.permute.xlu0 %1397
    %v1400 = vsel %vm253, %v1398, 0
    %1402 = vmatprep.subr.bf16.mxu0 0
    %1403 = vmatpush1.bf16.msra.mxu0 %v1222
    %1404 = vmatprep.subr.bf16.mxu0 0
    %1405 = vmatpush1.bf16.msra.mxu0 %v1223
    %1406 = vmatprep.subr.bf16.mxu0 0
    %1407 = vmatpush1.bf16.msra.mxu0 0
    %1408 = vmatprep.subr.bf16.mxu0 0
    %1409 = vmatpush1.bf16.msra.mxu0 0
    %1410 = vmatprep.subr.bf16.mxu0 0
    %1411 = vmatpush1.bf16.msra.mxu0 0
    %1412 = vmatprep.subr.bf16.mxu0 0
    %1413 = vmatpush1.bf16.msra.mxu0 0
    %1414 = vmatprep.subr.bf16.mxu0 0
    %1415 = vmatpush1.bf16.msra.mxu0 0
    %1416 = vmatprep.subr.bf16.mxu0 0
    %1417 = vmatpush1.bf16.msra.mxu0 0
    %1418 = vmatprep.subr.bf16.mxu0 0
    %1419 = vmatpush1.bf16.msra.mxu0 0
    %1420 = vmatprep.subr.bf16.mxu0 0
    %1421 = vmatpush1.bf16.msra.mxu0 0
    %1422 = vmatprep.subr.bf16.mxu0 0
    %1423 = vmatpush1.bf16.msra.mxu0 0
    %1424 = vmatprep.subr.bf16.mxu0 0
    %1425 = vmatpush1.bf16.msra.mxu0 0
    %1426 = vmatprep.subr.bf16.mxu0 0
    %1427 = vmatpush1.bf16.msra.mxu0 0
    %1428 = vmatprep.subr.bf16.mxu0 0
    %1429 = vmatpush1.bf16.msra.mxu0 0
    %1430 = vmatprep.subr.bf16.mxu0 0
    %1431 = vmatpush1.bf16.msra.mxu0 0
    %1432 = vmatprep.subr.bf16.mxu0 0
    %1433 = vmatpush1.bf16.msra.mxu0 0
    %1434 = vmatprep.mubr.bf16.mxu0 0
    %1435 = vmatmul.mubr.bf16.gmra.mrb[0].mxu0 %v1400
    %v1436 = vpop.f32.mrb[0].mxu0
    %v1437 = vadd.f32 0.0, %v1436
    %v1438 = vpop.f32.mrb[0].mxu0
    %v1439 = vpop.f32.mrb[0].mxu0
    %v1440 = vpop.f32.mrb[0].mxu0
    %1441 = vdwg.mxu0
    %v1442 = vadd.f32 %v1396, %v1437
    %v1443 = vxor.u32 %v1442, 2147483648
    %v1444 = vmul.f32 %v1443, 1.442695
    %v1445 = vpow.pop %v1444
    %v1446 = vadd.f32 %v1445, 1.0
    %v1447 = vrcp.pop %v1446
    %v1448 = vmul.f32 1.0, %v1447
    %v1449 = vadd.f32 %v1437, %v1279
    %1451 = vrot.lane.b32.xlu0 %v1449, 64
    %v1452 = vpop.permute.xlu0 %1451
    %v1454 = vmul.f32 %v1448, %v1452
    %1456 = vrot.lane.b32.xlu0 %v1454, 64
    %v1457 = vpop.permute.xlu0 %1456
    %v1459 = vadd.f32 %v1396, %v1457
    %v1460 = vtanh.pop %v1459
    %v1461 = vsub.f32 1.0, %v1448
    %1463 = vrot.lane.b32.xlu0 %v1460, 96
    %v1464 = vpop.permute.xlu0 %1463
    %v1466 = vmul.f32 %v1461, %v1464
    %v1467 = vmul.f32 %v1448, %v1384
    %v1468 = vadd.f32 %v1466, %v1467
    %v1469 = vpack.c.bf16 %v1468, %v1468
    %v1471 = vunpack.c.l.b16 %v1469
    %v1472 = vpack.c.b16 %v1471, %v1471
    %1473 = vrot.lane.b32.xlu0 %v1472, 96
    %v1474 = vpop.permute.xlu0 %1473
    %s1476 = scalar_lea.vmem [#allocation4], 8
    %1477 = vst.msk [vmem:[%s1476] sm:$0xf] %vm1308, %v1474
    %s1478 = scalar_lea.vmem [#allocation3], 12
    %v1479 = vld [vmem:[%s1478] sm:$0xf]
    %v1480 = vunpack.c.l.bf16 %v1479
    %1481 = vrot.lane.b32.xlu0 %v1469, 96
    %v1482 = vpop.permute.xlu0 %1481
    %v1484 = vsel %vm253, %v1482, 0
    %1486 = vmatprep.subr.bf16.mxu0 0
    %1487 = vmatpush1.bf16.msra.mxu0 %v1222
    %1488 = vmatprep.subr.bf16.mxu0 0
    %1489 = vmatpush1.bf16.msra.mxu0 %v1223
    %1490 = vmatprep.subr.bf16.mxu0 0
    %1491 = vmatpush1.bf16.msra.mxu0 0
    %1492 = vmatprep.subr.bf16.mxu0 0
    %1493 = vmatpush1.bf16.msra.mxu0 0
    %1494 = vmatprep.subr.bf16.mxu0 0
    %1495 = vmatpush1.bf16.msra.mxu0 0
    %1496 = vmatprep.subr.bf16.mxu0 0
    %1497 = vmatpush1.bf16.msra.mxu0 0
    %1498 = vmatprep.subr.bf16.mxu0 0
    %1499 = vmatpush1.bf16.msra.mxu0 0
    %1500 = vmatprep.subr.bf16.mxu0 0
    %1501 = vmatpush1.bf16.msra.mxu0 0
    %1502 = vmatprep.subr.bf16.mxu0 0
    %1503 = vmatpush1.bf16.msra.mxu0 0
    %1504 = vmatprep.subr.bf16.mxu0 0
    %1505 = vmatpush1.bf16.msra.mxu0 0
    %1506 = vmatprep.subr.bf16.mxu0 0
    %1507 = vmatpush1.bf16.msra.mxu0 0
    %1508 = vmatprep.subr.bf16.mxu0 0
    %1509 = vmatpush1.bf16.msra.mxu0 0
    %1510 = vmatprep.subr.bf16.mxu0 0
    %1511 = vmatpush1.bf16.msra.mxu0 0
    %1512 = vmatprep.subr.bf16.mxu0 0
    %1513 = vmatpush1.bf16.msra.mxu0 0
    %1514 = vmatprep.subr.bf16.mxu0 0
    %1515 = vmatpush1.bf16.msra.mxu0 0
    %1516 = vmatprep.subr.bf16.mxu0 0
    %1517 = vmatpush1.bf16.msra.mxu0 0
    %1518 = vmatprep.mubr.bf16.mxu0 0
    %1519 = vmatmul.mubr.bf16.gmra.mrb[0].mxu0 %v1484
    %v1520 = vpop.f32.mrb[0].mxu0
    %v1521 = vadd.f32 0.0, %v1520
    %v1522 = vpop.f32.mrb[0].mxu0
    %v1523 = vpop.f32.mrb[0].mxu0
    %v1524 = vpop.f32.mrb[0].mxu0
    %1525 = vdwg.mxu0
    %v1526 = vadd.f32 %v1480, %v1521
    %v1527 = vxor.u32 %v1526, 2147483648
    %v1528 = vmul.f32 %v1527, 1.442695
    %v1529 = vpow.pop %v1528
    %v1530 = vadd.f32 %v1529, 1.0
    %v1531 = vrcp.pop %v1530
    %v1532 = vmul.f32 1.0, %v1531
    %v1533 = vadd.f32 %v1521, %v1279
    %1535 = vrot.lane.b32.xlu0 %v1533, 64
    %v1536 = vpop.permute.xlu0 %1535
    %v1538 = vmul.f32 %v1532, %v1536
    %1540 = vrot.lane.b32.xlu0 %v1538, 64
    %v1541 = vpop.permute.xlu0 %1540
    %v1543 = vadd.f32 %v1480, %v1541
    %v1544 = vtanh.pop %v1543
    %v1545 = vsub.f32 1.0, %v1532
    %1547 = vrot.lane.b32.xlu0 %v1544, 96
    %v1548 = vpop.permute.xlu0 %1547
    %v1550 = vmul.f32 %v1545, %v1548
    %v1551 = vmul.f32 %v1532, %v1468
    %v1552 = vadd.f32 %v1550, %v1551
    %v1553 = vpack.c.bf16 %v1552, %v1552
    %v1555 = vunpack.c.l.b16 %v1553
    %v1556 = vpack.c.b16 %v1555, %v1555
    %1557 = vrot.lane.b32.xlu0 %v1556, 96
    %v1558 = vpop.permute.xlu0 %1557
    %s1560 = scalar_lea.vmem [#allocation4], 12
    %1561 = vst.msk [vmem:[%s1560] sm:$0xf] %vm1308, %v1558
    %s1562 = scalar_lea.vmem [#allocation3], 16
    %v1563 = vld [vmem:[%s1562] sm:$0xf]
    %v1564 = vunpack.c.l.bf16 %v1563
    %1565 = vrot.lane.b32.xlu0 %v1553, 96
    %v1566 = vpop.permute.xlu0 %1565
    %v1568 = vsel %vm253, %v1566, 0
    %1570 = vmatprep.subr.bf16.mxu0 0
    %1571 = vmatpush1.bf16.msra.mxu0 %v1222
    %1572 = vmatprep.subr.bf16.mxu0 0
    %1573 = vmatpush1.bf16.msra.mxu0 %v1223
    %1574 = vmatprep.subr.bf16.mxu0 0
    %1575 = vmatpush1.bf16.msra.mxu0 0
    %1576 = vmatprep.subr.bf16.mxu0 0
    %1577 = vmatpush1.bf16.msra.mxu0 0
    %1578 = vmatprep.subr.bf16.mxu0 0
    %1579 = vmatpush1.bf16.msra.mxu0 0
    %1580 = vmatprep.subr.bf16.mxu0 0
    %1581 = vmatpush1.bf16.msra.mxu0 0
    %1582 = vmatprep.subr.bf16.mxu0 0
    %1583 = vmatpush1.bf16.msra.mxu0 0
    %1584 = vmatprep.subr.bf16.mxu0 0
    %1585 = vmatpush1.bf16.msra.mxu0 0
    %1586 = vmatprep.subr.bf16.mxu0 0
    %1587 = vmatpush1.bf16.msra.mxu0 0
    %1588 = vmatprep.subr.bf16.mxu0 0
    %1589 = vmatpush1.bf16.msra.mxu0 0
    %1590 = vmatprep.subr.bf16.mxu0 0
    %1591 = vmatpush1.bf16.msra.mxu0 0
    %1592 = vmatprep.subr.bf16.mxu0 0
    %1593 = vmatpush1.bf16.msra.mxu0 0
    %1594 = vmatprep.subr.bf16.mxu0 0
    %1595 = vmatpush1.bf16.msra.mxu0 0
    %1596 = vmatprep.subr.bf16.mxu0 0
    %1597 = vmatpush1.bf16.msra.mxu0 0
    %1598 = vmatprep.subr.bf16.mxu0 0
    %1599 = vmatpush1.bf16.msra.mxu0 0
    %1600 = vmatprep.subr.bf16.mxu0 0
    %1601 = vmatpush1.bf16.msra.mxu0 0
    %1602 = vmatprep.mubr.bf16.mxu0 0
    %1603 = vmatmul.mubr.bf16.gmra.mrb[0].mxu0 %v1568
    %v1604 = vpop.f32.mrb[0].mxu0
    %v1605 = vadd.f32 0.0, %v1604
    %v1606 = vpop.f32.mrb[0].mxu0
    %v1607 = vpop.f32.mrb[0].mxu0
    %v1608 = vpop.f32.mrb[0].mxu0
    %1609 = vdwg.mxu0
    %v1610 = vadd.f32 %v1564, %v1605
    %v1611 = vxor.u32 %v1610, 2147483648
    %v1612 = vmul.f32 %v1611, 1.442695
    %v1613 = vpow.pop %v1612
    %v1614 = vadd.f32 %v1613, 1.0
    %v1615 = vrcp.pop %v1614
    %v1616 = vmul.f32 1.0, %v1615
    %v1617 = vadd.f32 %v1605, %v1279
    %1619 = vrot.lane.b32.xlu0 %v1617, 64
    %v1620 = vpop.permute.xlu0 %1619
    %v1622 = vmul.f32 %v1616, %v1620
    %1624 = vrot.lane.b32.xlu0 %v1622, 64
    %v1625 = vpop.permute.xlu0 %1624
    %v1627 = vadd.f32 %v1564, %v1625
    %v1628 = vtanh.pop %v1627
    %v1629 = vsub.f32 1.0, %v1616
    %1631 = vrot.lane.b32.xlu0 %v1628, 96
    %v1632 = vpop.permute.xlu0 %1631
    %v1634 = vmul.f32 %v1629, %v1632
    %v1635 = vmul.f32 %v1616, %v1552
    %v1636 = vadd.f32 %v1634, %v1635
    %v1637 = vpack.c.bf16 %v1636, %v1636
    %v1639 = vunpack.c.l.b16 %v1637
    %v1640 = vpack.c.b16 %v1639, %v1639
    %1641 = vrot.lane.b32.xlu0 %v1640, 96
    %v1642 = vpop.permute.xlu0 %1641
    %s1644 = scalar_lea.vmem [#allocation4], 16
    %1645 = vst.msk [vmem:[%s1644] sm:$0xf] %vm1308, %v1642
    %s1646 = scalar_lea.vmem [#allocation3], 20
    %v1647 = vld [vmem:[%s1646] sm:$0xf]
    %v1648 = vunpack.c.l.bf16 %v1647
    %1649 = vrot.lane.b32.xlu0 %v1637, 96
    %v1650 = vpop.permute.xlu0 %1649
    %v1652 = vsel %vm253, %v1650, 0
    %1654 = vmatprep.subr.bf16.mxu0 0
    %1655 = vmatpush1.bf16.msra.mxu0 %v1222
    %1656 = vmatprep.subr.bf16.mxu0 0
    %1657 = vmatpush1.bf16.msra.mxu0 %v1223
    %1658 = vmatprep.subr.bf16.mxu0 0
    %1659 = vmatpush1.bf16.msra.mxu0 0
    %1660 = vmatprep.subr.bf16.mxu0 0
    %1661 = vmatpush1.bf16.msra.mxu0 0
    %1662 = vmatprep.subr.bf16.mxu0 0
    %1663 = vmatpush1.bf16.msra.mxu0 0
    %1664 = vmatprep.subr.bf16.mxu0 0
    %1665 = vmatpush1.bf16.msra.mxu0 0
    %1666 = vmatprep.subr.bf16.mxu0 0
    %1667 = vmatpush1.bf16.msra.mxu0 0
    %1668 = vmatprep.subr.bf16.mxu0 0
    %1669 = vmatpush1.bf16.msra.mxu0 0
    %1670 = vmatprep.subr.bf16.mxu0 0
    %1671 = vmatpush1.bf16.msra.mxu0 0
    %1672 = vmatprep.subr.bf16.mxu0 0
    %1673 = vmatpush1.bf16.msra.mxu0 0
    %1674 = vmatprep.subr.bf16.mxu0 0
    %1675 = vmatpush1.bf16.msra.mxu0 0
    %1676 = vmatprep.subr.bf16.mxu0 0
    %1677 = vmatpush1.bf16.msra.mxu0 0
    %1678 = vmatprep.subr.bf16.mxu0 0
    %1679 = vmatpush1.bf16.msra.mxu0 0
    %1680 = vmatprep.subr.bf16.mxu0 0
    %1681 = vmatpush1.bf16.msra.mxu0 0
    %1682 = vmatprep.subr.bf16.mxu0 0
    %1683 = vmatpush1.bf16.msra.mxu0 0
    %1684 = vmatprep.subr.bf16.mxu0 0
    %1685 = vmatpush1.bf16.msra.mxu0 0
    %1686 = vmatprep.mubr.bf16.mxu0 0
    %1687 = vmatmul.mubr.bf16.gmra.mrb[0].mxu0 %v1652
    %v1688 = vpop.f32.mrb[0].mxu0
    %v1689 = vadd.f32 0.0, %v1688
    %v1690 = vpop.f32.mrb[0].mxu0
    %v1691 = vpop.f32.mrb[0].mxu0
    %v1692 = vpop.f32.mrb[0].mxu0
    %1693 = vdwg.mxu0
    %v1694 = vadd.f32 %v1648, %v1689
    %v1695 = vxor.u32 %v1694, 2147483648
    %v1696 = vmul.f32 %v1695, 1.442695
    %v1697 = vpow.pop %v1696
    %v1698 = vadd.f32 %v1697, 1.0
    %v1699 = vrcp.pop %v1698
    %v1700 = vmul.f32 1.0, %v1699
    %v1701 = vadd.f32 %v1689, %v1279
    %1703 = vrot.lane.b32.xlu0 %v1701, 64
    %v1704 = vpop.permute.xlu0 %1703
    %v1706 = vmul.f32 %v1700, %v1704
    %1708 = vrot.lane.b32.xlu0 %v1706, 64
    %v1709 = vpop.permute.xlu0 %1708
    %v1711 = vadd.f32 %v1648, %v1709
    %v1712 = vtanh.pop %v1711
    %v1713 = vsub.f32 1.0, %v1700
    %1715 = vrot.lane.b32.xlu0 %v1712, 96
    %v1716 = vpop.permute.xlu0 %1715
    %v1718 = vmul.f32 %v1713, %v1716
    %v1719 = vmul.f32 %v1700, %v1636
    %v1720 = vadd.f32 %v1718, %v1719
    %v1721 = vpack.c.bf16 %v1720, %v1720
    %v1723 = vunpack.c.l.b16 %v1721
    %v1724 = vpack.c.b16 %v1723, %v1723
    %1725 = vrot.lane.b32.xlu0 %v1724, 96
    %v1726 = vpop.permute.xlu0 %1725
    %s1728 = scalar_lea.vmem [#allocation4], 20
    %1729 = vst.msk [vmem:[%s1728] sm:$0xf] %vm1308, %v1726
    %s1730 = scalar_lea.vmem [#allocation3], 24
    %v1731 = vld [vmem:[%s1730] sm:$0xf]
    %v1732 = vunpack.c.l.bf16 %v1731
    %1733 = vrot.lane.b32.xlu0 %v1721, 96
    %v1734 = vpop.permute.xlu0 %1733
    %v1736 = vsel %vm253, %v1734, 0
    %1738 = vmatprep.subr.bf16.mxu0 0
    %1739 = vmatpush1.bf16.msra.mxu0 %v1222
    %1740 = vmatprep.subr.bf16.mxu0 0
    %1741 = vmatpush1.bf16.msra.mxu0 %v1223
    %1742 = vmatprep.subr.bf16.mxu0 0
    %1743 = vmatpush1.bf16.msra.mxu0 0
    %1744 = vmatprep.subr.bf16.mxu0 0
    %1745 = vmatpush1.bf16.msra.mxu0 0
    %1746 = vmatprep.subr.bf16.mxu0 0
    %1747 = vmatpush1.bf16.msra.mxu0 0
    %1748 = vmatprep.subr.bf16.mxu0 0
    %1749 = vmatpush1.bf16.msra.mxu0 0
    %1750 = vmatprep.subr.bf16.mxu0 0
    %1751 = vmatpush1.bf16.msra.mxu0 0
    %1752 = vmatprep.subr.bf16.mxu0 0
    %1753 = vmatpush1.bf16.msra.mxu0 0
    %1754 = vmatprep.subr.bf16.mxu0 0
    %1755 = vmatpush1.bf16.msra.mxu0 0
    %1756 = vmatprep.subr.bf16.mxu0 0
    %1757 = vmatpush1.bf16.msra.mxu0 0
    %1758 = vmatprep.subr.bf16.mxu0 0
    %1759 = vmatpush1.bf16.msra.mxu0 0
    %1760 = vmatprep.subr.bf16.mxu0 0
    %1761 = vmatpush1.bf16.msra.mxu0 0
    %1762 = vmatprep.subr.bf16.mxu0 0
    %1763 = vmatpush1.bf16.msra.mxu0 0
    %1764 = vmatprep.subr.bf16.mxu0 0
    %1765 = vmatpush1.bf16.msra.mxu0 0
    %1766 = vmatprep.subr.bf16.mxu0 0
    %1767 = vmatpush1.bf16.msra.mxu0 0
    %1768 = vmatprep.subr.bf16.mxu0 0
    %1769 = vmatpush1.bf16.msra.mxu0 0
    %1770 = vmatprep.mubr.bf16.mxu0 0
    %1771 = vmatmul.mubr.bf16.gmra.mrb[0].mxu0 %v1736
    %v1772 = vpop.f32.mrb[0].mxu0
    %v1773 = vadd.f32 0.0, %v1772
    %v1774 = vpop.f32.mrb[0].mxu0
    %v1775 = vpop.f32.mrb[0].mxu0
    %v1776 = vpop.f32.mrb[0].mxu0
    %1777 = vdwg.mxu0
    %v1778 = vadd.f32 %v1732, %v1773
    %v1779 = vxor.u32 %v1778, 2147483648
    %v1780 = vmul.f32 %v1779, 1.442695
    %v1781 = vpow.pop %v1780
    %v1782 = vadd.f32 %v1781, 1.0
    %v1783 = vrcp.pop %v1782
    %v1784 = vmul.f32 1.0, %v1783
    %v1785 = vadd.f32 %v1773, %v1279
    %1787 = vrot.lane.b32.xlu0 %v1785, 64
    %v1788 = vpop.permute.xlu0 %1787
    %v1790 = vmul.f32 %v1784, %v1788
    %1792 = vrot.lane.b32.xlu0 %v1790, 64
    %v1793 = vpop.permute.xlu0 %1792
    %v1795 = vadd.f32 %v1732, %v1793
    %v1796 = vtanh.pop %v1795
    %v1797 = vsub.f32 1.0, %v1784
    %1799 = vrot.lane.b32.xlu0 %v1796, 96
    %v1800 = vpop.permute.xlu0 %1799
    %v1802 = vmul.f32 %v1797, %v1800
    %v1803 = vmul.f32 %v1784, %v1720
    %v1804 = vadd.f32 %v1802, %v1803
    %v1805 = vpack.c.bf16 %v1804, %v1804
    %v1807 = vunpack.c.l.b16 %v1805
    %v1808 = vpack.c.b16 %v1807, %v1807
    %1809 = vrot.lane.b32.xlu0 %v1808, 96
    %v1810 = vpop.permute.xlu0 %1809
    %s1812 = scalar_lea.vmem [#allocation4], 24
    %1813 = vst.msk [vmem:[%s1812] sm:$0xf] %vm1308, %v1810
    %s1814 = scalar_lea.vmem [#allocation3], 28
    %v1815 = vld [vmem:[%s1814] sm:$0xf]
    %v1816 = vunpack.c.l.bf16 %v1815
    %1817 = vrot.lane.b32.xlu0 %v1805, 96
    %v1818 = vpop.permute.xlu0 %1817
    %v1820 = vsel %vm253, %v1818, 0
    %1822 = vmatprep.subr.bf16.mxu0 0
    %1823 = vmatpush1.bf16.msra.mxu0 %v1222
    %1824 = vmatprep.subr.bf16.mxu0 0
    %1825 = vmatpush1.bf16.msra.mxu0 %v1223
    %1826 = vmatprep.subr.bf16.mxu0 0
    %1827 = vmatpush1.bf16.msra.mxu0 0
    %1828 = vmatprep.subr.bf16.mxu0 0
    %1829 = vmatpush1.bf16.msra.mxu0 0
    %1830 = vmatprep.subr.bf16.mxu0 0
    %1831 = vmatpush1.bf16.msra.mxu0 0
    %1832 = vmatprep.subr.bf16.mxu0 0
    %1833 = vmatpush1.bf16.msra.mxu0 0
    %1834 = vmatprep.subr.bf16.mxu0 0
    %1835 = vmatpush1.bf16.msra.mxu0 0
    %1836 = vmatprep.subr.bf16.mxu0 0
    %1837 = vmatpush1.bf16.msra.mxu0 0
    %1838 = vmatprep.subr.bf16.mxu0 0
    %1839 = vmatpush1.bf16.msra.mxu0 0
    %1840 = vmatprep.subr.bf16.mxu0 0
    %1841 = vmatpush1.bf16.msra.mxu0 0
    %1842 = vmatprep.subr.bf16.mxu0 0
    %1843 = vmatpush1.bf16.msra.mxu0 0
    %1844 = vmatprep.subr.bf16.mxu0 0
    %1845 = vmatpush1.bf16.msra.mxu0 0
    %1846 = vmatprep.subr.bf16.mxu0 0
    %1847 = vmatpush1.bf16.msra.mxu0 0
    %1848 = vmatprep.subr.bf16.mxu0 0
    %1849 = vmatpush1.bf16.msra.mxu0 0
    %1850 = vmatprep.subr.bf16.mxu0 0
    %1851 = vmatpush1.bf16.msra.mxu0 0
    %1852 = vmatprep.subr.bf16.mxu0 0
    %1853 = vmatpush1.bf16.msra.mxu0 0
    %1854 = vmatprep.mubr.bf16.mxu0 0
    %1855 = vmatmul.mubr.bf16.gmra.mrb[0].mxu0 %v1820
    %v1856 = vpop.f32.mrb[0].mxu0
    %v1857 = vadd.f32 0.0, %v1856
    %v1858 = vpop.f32.mrb[0].mxu0
    %v1859 = vpop.f32.mrb[0].mxu0
    %v1860 = vpop.f32.mrb[0].mxu0
    %1861 = vdwg.mxu0
    %v1862 = vadd.f32 %v1816, %v1857
    %v1863 = vxor.u32 %v1862, 2147483648
    %v1864 = vmul.f32 %v1863, 1.442695
    %v1865 = vpow.pop %v1864
    %v1866 = vadd.f32 %v1865, 1.0
    %v1867 = vrcp.pop %v1866
    %v1868 = vmul.f32 1.0, %v1867
    %v1869 = vadd.f32 %v1857, %v1279
    %1871 = vrot.lane.b32.xlu0 %v1869, 64
    %v1872 = vpop.permute.xlu0 %1871
    %v1874 = vmul.f32 %v1868, %v1872
    %1876 = vrot.lane.b32.xlu0 %v1874, 64
    %v1877 = vpop.permute.xlu0 %1876
    %v1879 = vadd.f32 %v1816, %v1877
    %v1880 = vtanh.pop %v1879
    %v1881 = vsub.f32 1.0, %v1868
    %1883 = vrot.lane.b32.xlu0 %v1880, 96
    %v1884 = vpop.permute.xlu0 %1883
    %v1886 = vmul.f32 %v1881, %v1884
    %v1887 = vmul.f32 %v1868, %v1804
    %v1888 = vadd.f32 %v1886, %v1887
    %v1889 = vpack.c.bf16 %v1888, %v1888
    %v1891 = vunpack.c.l.b16 %v1889
    %v1892 = vpack.c.b16 %v1891, %v1891
    %1893 = vrot.lane.b32.xlu0 %v1892, 96
    %v1894 = vpop.permute.xlu0 %1893
    %s1896 = scalar_lea.vmem [#allocation4], 28
    %1897 = vst.msk [vmem:[%s1896] sm:$0xf] %vm1308, %v1894
    %v1898 = vld [vmem:[#allocation4] sm:$0xf]
    %v1899 = vld [vmem:[#allocation4 + $0x4] sm:$0xf]
    %v1900 = vld [vmem:[#allocation4 + $0x8] sm:$0xf]
    %v1901 = vld [vmem:[#allocation4 + $0xc] sm:$0xf]
    %v1902 = vld [vmem:[#allocation4 + $0x10] sm:$0xf]
    %v1903 = vld [vmem:[#allocation4 + $0x14] sm:$0xf]
    %v1904 = vld [vmem:[#allocation4 + $0x18] sm:$0xf]
    %v1905 = vld [vmem:[#allocation4 + $0x1c] sm:$0xf]
    %v1906 = vld [vmem:[%s11] sm:$0xf]
    %v1907 = vld [vmem:[%s11 + $0x4] sm:$0xf]
    %v1908 = vld [vmem:[%s11 + $0x8] sm:$0xf]
    %v1909 = vld [vmem:[%s11 + $0xc] sm:$0xf]
    %v1910 = vld [vmem:[%s12] sm:$0x1]
    %v1912 = vlaneseq
    %v1913 = vshrl.u32 %v1912, 7
    %v1914 = vsub.s32 0, %v1913
    %v1915 = vrot.slane %v1910, %v1914
    %v1925 = vunpack.c.l.b16 %v1898
    %v1926 = vunpack.c.l.b16 %v1899
    %v1927 = vunpack.c.l.b16 %v1900
    %v1928 = vunpack.c.l.b16 %v1901
    %v1929 = vunpack.c.l.b16 %v1902
    %v1930 = vunpack.c.l.b16 %v1903
    %v1931 = vunpack.c.l.b16 %v1904
    %v1932 = vunpack.c.l.b16 %v1905
    %v1933 = vpack.c.b16 %v1926, %v1925
    %v1934 = vpack.c.b16 %v1928, %v1927
    %v1935 = vpack.c.b16 %v1930, %v1929
    %v1936 = vpack.c.b16 %v1932, %v1931
    %v1941 = vunpack.c.l.b16 %v1906
    %v1942 = vunpack.c.l.b16 %v1907
    %v1943 = vunpack.c.l.b16 %v1908
    %v1944 = vunpack.c.l.b16 %v1909
    %v1945 = vpack.c.b16 %v1942, %v1941
    %v1946 = vpack.c.b16 %v1944, %v1943
    %v1950 = vsel %vm253, %v1933, 0
    %v1953 = vsel %vm253, %v1934, 0
    %v1956 = vsel %vm253, %v1935, 0
    %v1959 = vsel %vm253, %v1936, 0
    %1961 = vmatprep.subr.bf16.mxu0 0
    %1962 = vmatpush1.bf16.msra.mxu0 %v1945
    %1963 = vmatprep.subr.bf16.mxu0 0
    %1964 = vmatpush1.bf16.msra.mxu0 %v1946
    %1965 = vmatprep.subr.bf16.mxu0 0
    %1966 = vmatpush1.bf16.msra.mxu0 0
    %1967 = vmatprep.subr.bf16.mxu0 0
    %1968 = vmatpush1.bf16.msra.mxu0 0
    %1969 = vmatprep.subr.bf16.mxu0 0
    %1970 = vmatpush1.bf16.msra.mxu0 0
    %1971 = vmatprep.subr.bf16.mxu0 0
    %1972 = vmatpush1.bf16.msra.mxu0 0
    %1973 = vmatprep.subr.bf16.mxu0 0
    %1974 = vmatpush1.bf16.msra.mxu0 0
    %1975 = vmatprep.subr.bf16.mxu0 0
    %1976 = vmatpush1.bf16.msra.mxu0 0
    %1977 = vmatprep.subr.bf16.mxu0 0
    %1978 = vmatpush1.bf16.msra.mxu0 0
    %1979 = vmatprep.subr.bf16.mxu0 0
    %1980 = vmatpush1.bf16.msra.mxu0 0
    %1981 = vmatprep.subr.bf16.mxu0 0
    %1982 = vmatpush1.bf16.msra.mxu0 0
    %1983 = vmatprep.subr.bf16.mxu0 0
    %1984 = vmatpush1.bf16.msra.mxu0 0
    %1985 = vmatprep.subr.bf16.mxu0 0
    %1986 = vmatpush1.bf16.msra.mxu0 0
    %1987 = vmatprep.subr.bf16.mxu0 0
    %1988 = vmatpush1.bf16.msra.mxu0 0
    %1989 = vmatprep.subr.bf16.mxu0 0
    %1990 = vmatpush1.bf16.msra.mxu0 0
    %1991 = vmatprep.subr.bf16.mxu0 0
    %1992 = vmatpush1.bf16.msra.mxu0 0
    %1993 = vmatprep.mubr.bf16.mxu0 0
    %1994 = vmatmul.mubr.bf16.gmra.mrb[0].mxu0 %v1950
    %v1995 = vpop.f32.mrb[0].mxu0
    %v1996 = vadd.f32 %v1915, %v1995
    %v1997 = vpop.f32.mrb[0].mxu0
    %v1998 = vpop.f32.mrb[0].mxu0
    %v1999 = vadd.f32 %v1915, %v1998
    %v2000 = vpop.f32.mrb[0].mxu0
    %2001 = vmatprep.mubr.bf16.mxu0 0
    %2002 = vmatmul.mubr.bf16.gmra.mrb[0].mxu0 %v1953
    %v2003 = vpop.f32.mrb[0].mxu0
    %v2004 = vadd.f32 %v1915, %v2003
    %v2005 = vpop.f32.mrb[0].mxu0
    %v2006 = vpop.f32.mrb[0].mxu0
    %v2007 = vadd.f32 %v1915, %v2006
    %v2008 = vpop.f32.mrb[0].mxu0
    %2009 = vmatprep.mubr.bf16.mxu0 0
    %2010 = vmatmul.mubr.bf16.gmra.mrb[0].mxu0 %v1956
    %v2011 = vpop.f32.mrb[0].mxu0
    %v2012 = vadd.f32 %v1915, %v2011
    %v2013 = vpop.f32.mrb[0].mxu0
    %v2014 = vpop.f32.mrb[0].mxu0
    %v2015 = vadd.f32 %v1915, %v2014
    %v2016 = vpop.f32.mrb[0].mxu0
    %2017 = vmatprep.mubr.bf16.mxu0 0
    %2018 = vmatmul.mubr.bf16.gmra.mrb[0].mxu0 %v1959
    %v2019 = vpop.f32.mrb[0].mxu0
    %v2020 = vadd.f32 %v1915, %v2019
    %v2021 = vpop.f32.mrb[0].mxu0
    %v2022 = vpop.f32.mrb[0].mxu0
    %v2023 = vadd.f32 %v1915, %v2022
    %v2024 = vpop.f32.mrb[0].mxu0
    %2025 = vdwg.mxu0
    %v2026 = vmax.f32 %v1996, 0.0
    %v2027 = vmax.f32 %v1999, 0.0
    %v2028 = vmax.f32 %v2004, 0.0
    %v2029 = vmax.f32 %v2007, 0.0
    %v2030 = vmax.f32 %v2012, 0.0
    %v2031 = vmax.f32 %v2015, 0.0
    %v2032 = vmax.f32 %v2020, 0.0
    %v2033 = vmax.f32 %v2023, 0.0
    %2034 = vst.msk [vmem:[#allocation15] sm:$0xff] %vm140, %v2026
    %2035 = vst.msk [vmem:[#allocation15 + $0x8] sm:$0xff] %vm140, %v2027
    %2036 = vst.msk [vmem:[#allocation15 + $0x10] sm:$0xff] %vm140, %v2028
    %2037 = vst.msk [vmem:[#allocation15 + $0x18] sm:$0xff] %vm140, %v2029
    %2038 = vst.msk [vmem:[#allocation15 + $0x20] sm:$0xff] %vm140, %v2030
    %2039 = vst.msk [vmem:[#allocation15 + $0x28] sm:$0xff] %vm140, %v2031
    %2040 = vst.msk [vmem:[#allocation15 + $0x30] sm:$0xff] %vm140, %v2032
    %2041 = vst.msk [vmem:[#allocation15 + $0x38] sm:$0xff] %vm140, %v2033
    // Predicated region
    $region74: #{tpu_custom_call.1} parent=1 // pred_check
      _
    $region75: #{tpu_custom_call.1} parent=1 // pred_check_branch
      %2043 = sbr.rel (0) target = $region77
    $region76: #{tpu_custom_call.1} parent=1 // pred_region
      %s2045 = ssub.s32 1024, 1024
      %2046 = vsyncadd [#allocation7], %s2045
      %s2047 = sshll.u32 [#allocation14], 4
      %s2048 = int_to_ptr.vmem [resolvable:$true] %s2047
      %2053 = dma.vmem_to_hbm [thread:$0]  %s2048, 1024, %s13, [#allocation7], 128, 128, 8
    $region77: #{tpu_custom_call.1} parent=1 // pred_fallthru
      _
    // Predicated region
    $region78: #{tpu_custom_call.1} parent=1 // pred_check
      _
    $region79: #{tpu_custom_call.1} parent=1 // pred_check_branch
      %2055 = sbr.rel (0) target = $region81
    $region80: #{tpu_custom_call.1} parent=1 // pred_region
      %s2057 = ssub.s32 1024, 1024
      %2058 = vsyncadd [#allocation16], %s2057
      %s2059 = sshll.u32 [#allocation15], 4
      %s2060 = int_to_ptr.vmem [resolvable:$true] %s2059
      %2065 = dma.vmem_to_hbm [thread:$0]  %s2060, 1024, %s14, [#allocation16], 128, 128, 8
    $region81: #{tpu_custom_call.1} parent=1 // pred_fallthru
      _
    // Predicated region
    $region82: #{tpu_custom_call.1} parent=1 // pred_check
      _
    $region83: #{tpu_custom_call.1} parent=1 // pred_check_branch
      %2067 = sbr.rel (0) target = $region85
    $region84: #{tpu_custom_call.1} parent=1 // pred_region
      %2068 = dma.done [#allocation7], 1024
    $region85: #{tpu_custom_call.1} parent=1 // pred_fallthru
      _
    // Predicated region
    $region86: #{tpu_custom_call.1} parent=1 // pred_check
      _
    $region87: #{tpu_custom_call.1} parent=1 // pred_check_branch
      %2070 = sbr.rel (0) target = $region89
    $region88: #{tpu_custom_call.1} parent=1 // pred_region
      %2071 = dma.done [#allocation16], 1024
    $region89: #{tpu_custom_call.1} parent=1 // pred_fallthru
      _
    %2072 = vsyncpa [#allocation6], 1
    %2073 = vsyncpa [#allocation9], 1
    %2074 = vsyncpa [#allocation12], 1
    %2075 = vsyncpa [#allocation7], 1
    %2076 = vsyncpa [#allocation16], 1

</llo_original>
